<compile_context>
chip_gen: v5e
topology: v5e:2x2
jax: 0.10.0
libtpu: 0.0.40
codegen_flags: <defaults>
</compile_context>

<pallas_src>
import functools

import jax
import jax.numpy as jnp
from jax.experimental import pallas as pl
from jax.experimental.pallas import tpu as pltpu

LANES = 128


def _round_up(x, m):
    return (x + m - 1) // m * m


def _pad2(x, rows, cols):
    return jnp.pad(x, ((0, rows - x.shape[0]), (0, cols - x.shape[1])))


# ------------------------------- kernels ----------------------------------- #

def entry_kernel(xc_ref, win_ref, bin_ref, w1_ref, x_ref, h_ref):
    """fc_in fused with the first conv layer's H emission.

    x0 = xc @ Win + bin            (f32, residual stream)
    h0 = bf16(bf16(x0) @ W1)       (bf16, resident operand of conv #1)
    """
    x0 = (jnp.dot(xc_ref[...], win_ref[...], preferred_element_type=jnp.float32)
          + bin_ref[...])
    x_ref[...] = x0
    h_ref[...] = jnp.dot(x0.astype(jnp.bfloat16), w1_ref[...],
                         preferred_element_type=jnp.float32).astype(jnp.bfloat16)


def _a_tile_bf16(a_ref, a_is_int8):
    a = a_ref[...]
    if a_is_int8:
        a = a.astype(jnp.float32)     # int values 0..127, exact in bf16
    return a.astype(jnp.bfloat16)


def conv_kernel(h_ref, a_ref, x_ref, b_ref, wn_ref, x_out_ref, h_out_ref,
                acc_ref, *, a_scale, a_is_int8, tk):
    """One GCNConv + residual + ReLU, fused with next-layer H emission.

    Reduction (grid axis 1): acc += A[i,k] @ H[k]   (bf16 MXU, f32 acc).
    Finalize: x_new = relu(x + a_scale*acc + b); emit x_new (f32) and
              h_next = bf16(bf16(x_new) @ W_next).
    """
    k = pl.program_id(1)

    @pl.when(k == 0)
    def _init():
        acc_ref[...] = jnp.zeros_like(acc_ref)

    a = _a_tile_bf16(a_ref, a_is_int8)
    h = h_ref[pl.ds(pl.multiple_of(k * tk, tk), tk), :]
    acc_ref[...] += jnp.dot(a, h, preferred_element_type=jnp.float32)

    @pl.when(k == pl.num_programs(1) - 1)
    def _finalize():
        acc = acc_ref[...]
        if a_scale != 1.0:
            acc = acc * a_scale           # dequant scale folded in once
        x_new = jnp.maximum(x_ref[...] + acc + b_ref[...], 0.0)
        x_out_ref[...] = x_new
        h_out_ref[...] = jnp.dot(x_new.astype(jnp.bfloat16), wn_ref[...],
                                 preferred_element_type=jnp.float32
                                 ).astype(jnp.bfloat16)


def conv_head_kernel(h_ref, a_ref, x_ref, b_ref, wo1_ref, bo1_ref, wo2_ref,
                     bo2_ref, out_ref, acc_ref, *, a_scale, a_is_int8, tk):
    """Last GCNConv + residual + ReLU fused with fc_out1+leaky_relu+fc_out2."""
    k = pl.program_id(1)

    @pl.when(k == 0)
    def _init():
        acc_ref[...] = jnp.zeros_like(acc_ref)

    a = _a_tile_bf16(a_ref, a_is_int8)
    h = h_ref[pl.ds(pl.multiple_of(k * tk, tk), tk), :]
    acc_ref[...] += jnp.dot(a, h, preferred_element_type=jnp.float32)

    @pl.when(k == pl.num_programs(1) - 1)
    def _finalize():
        acc = acc_ref[...]
        if a_scale != 1.0:
            acc = acc * a_scale
        x_new = jnp.maximum(x_ref[...] + acc + b_ref[...], 0.0)
        y = (jnp.dot(x_new, wo1_ref[...], preferred_element_type=jnp.float32)
             + bo1_ref[...])
        y = jnp.where(y > 0, y, 0.01 * y)          # leaky_relu(0.01)
        out_ref[...] = (jnp.dot(y, wo2_ref[...],
                                preferred_element_type=jnp.float32)
                        + bo2_ref[...])


# ------------------------------- wrapper ------------------------------------ #

def gcn_net_forward(x_cat, a_hat, params, depth, *, tm=256, tk=512,
                    a_quant=True, vmem_limit_bytes=48 * 1024 * 1024):
    """Full GCN_Net forward.  Returns [N, 1] float32."""
    assert depth >= 1
    (win, bin_, w1, b1, w2, b2, w3, b3, w4, b4, wo1, bo1, wo2, bo2) = params
    n, c_in = x_cat.shape
    width = win.shape[1]
    ker_width = wo1.shape[1]

    f32, bf16 = jnp.float32, jnp.bfloat16

    # Tile selection: clamp to the problem, keep tiles 128-multiples, tm | tk.
    n128 = _round_up(n, LANES)
    tm = max(LANES, min(tm, n128)) // LANES * LANES
    tk = max(tm, min(tk, n128)) // tm * tm
    n_pad = _round_up(n, tk)
    grid_rows, grid_k = n_pad // tm, n_pad // tk
    # With the defaults tk == 2*tm, grid_rows is even whenever grid_rows > 1
    # (balanced work for the two v7x TensorCores on the "parallel" axis).

    cin_p = _round_up(c_in, 8)
    w_p = _round_up(width, LANES)
    k_p = _round_up(ker_width, LANES)
    out_p = LANES                    # lane-dense final store; column 0 is real

    xc = _pad2(x_cat.astype(f32), n_pad, cin_p)
    a_pad = _pad2(a_hat.astype(f32), n_pad, n_pad)
    if a_quant:
        # gcn_norm adjacency entries live in [0, 1] -> single static scale.
        a_q = jnp.clip(jnp.round(a_pad * 127.0), 0.0, 127.0).astype(jnp.int8)
        a_scale, a_bytes = 1.0 / 127.0, 1
    else:
        a_q = a_pad.astype(bf16)
        a_scale, a_bytes = 1.0, 2

    win_p = _pad2(win, cin_p, w_p).astype(f32)
    bin_p = _pad2(bin_, 1, w_p).astype(f32)
    convs = [(_pad2(w, w_p, w_p).astype(bf16), _pad2(b, 1, w_p).astype(f32))
             for w, b in ((w1, b1), (w2, b2), (w3, b3), (w4, b4))]
    wo1_p = _pad2(wo1, w_p, k_p).astype(f32)
    bo1_p = _pad2(bo1, 1, k_p).astype(f32)
    wo2_p = _pad2(wo2, k_p, out_p).astype(f32)
    bo2_p = _pad2(bo2, 1, out_p).astype(f32)

    total_layers = 4 * depth
    layer_wb = [convs[i % 4] for i in range(total_layers)]

    cparams_1d = pltpu.CompilerParams(
        dimension_semantics=("parallel",), vmem_limit_bytes=vmem_limit_bytes)
    cparams_2d = pltpu.CompilerParams(
        dimension_semantics=("parallel", "arbitrary"),
        vmem_limit_bytes=vmem_limit_bytes)

    # ---- entry: fc_in + first-layer H emission (one pass over the rows) ----
    entry_call = pl.pallas_call(
        entry_kernel,
        out_shape=(jax.ShapeDtypeStruct((n_pad, w_p), f32),
                   jax.ShapeDtypeStruct((n_pad, w_p), bf16)),
        grid=(grid_rows,),
        in_specs=[pl.BlockSpec((tm, cin_p), lambda i: (i, 0)),
                  pl.BlockSpec((cin_p, w_p), lambda i: (0, 0)),
                  pl.BlockSpec((1, w_p), lambda i: (0, 0)),
                  pl.BlockSpec((w_p, w_p), lambda i: (0, 0))],
        out_specs=(pl.BlockSpec((tm, w_p), lambda i: (i, 0)),
                   pl.BlockSpec((tm, w_p), lambda i: (i, 0))),
        compiler_params=cparams_1d,
    )
    x, h = entry_call(xc, win_p, bin_p, layer_wb[0][0])

    # ---- conv layers: A streamed from HBM (int8/bf16 tiles), H resident ----
    conv_cost = pl.CostEstimate(
        flops=2 * n_pad * n_pad * w_p + 2 * n_pad * w_p * w_p,
        transcendentals=0,
        bytes_accessed=(n_pad * n_pad * a_bytes     # A stream (dominant)
                        + n_pad * w_p * 2           # resident H, read once
                        + n_pad * w_p * 4           # residual x (f32)
                        + n_pad * w_p * 4           # x_out (f32)
                        + n_pad * w_p * 2           # h_out (bf16)
                        + w_p * w_p * 2))
    conv_kwargs = dict(a_scale=a_scale, a_is_int8=a_quant, tk=tk)
    h_resident = pl.BlockSpec((n_pad, w_p), lambda i, k: (0, 0))
    conv_in_specs = [
        h_resident,                                    # H (bf16, VMEM-resident)
        pl.BlockSpec((tm, tk), lambda i, k: (i, k)),   # A tile (only HBM stream)
        pl.BlockSpec((tm, w_p), lambda i, k: (i, 0)),  # residual x (f32)
        pl.BlockSpec((1, w_p), lambda i, k: (0, 0)),   # bias
    ]

    conv_call = pl.pallas_call(
        functools.partial(conv_kernel, **conv_kwargs),
        out_shape=(jax.ShapeDtypeStruct((n_pad, w_p), f32),
                   jax.ShapeDtypeStruct((n_pad, w_p), bf16)),
        grid=(grid_rows, grid_k),
        in_specs=conv_in_specs + [
            pl.BlockSpec((w_p, w_p), lambda i, k: (0, 0))],  # next-layer W
        out_specs=(pl.BlockSpec((tm, w_p), lambda i, k: (i, 0)),
                   pl.BlockSpec((tm, w_p), lambda i, k: (i, 0))),
        scratch_shapes=[pltpu.VMEM((tm, w_p), f32)],
        compiler_params=cparams_2d,
        cost_estimate=conv_cost,
    )

    for l in range(total_layers - 1):
        x, h = conv_call(h, a_q, x, layer_wb[l][1], layer_wb[l + 1][0])

    # ---- last conv layer fused with the head (lane-dense padded output) ----
    conv_head_call = pl.pallas_call(
        functools.partial(conv_head_kernel, **conv_kwargs),
        out_shape=jax.ShapeDtypeStruct((n_pad, out_p), f32),
        grid=(grid_rows, grid_k),
        in_specs=conv_in_specs + [
            pl.BlockSpec((w_p, k_p), lambda i, k: (0, 0)),
            pl.BlockSpec((1, k_p), lambda i, k: (0, 0)),
            pl.BlockSpec((k_p, out_p), lambda i, k: (0, 0)),
            pl.BlockSpec((1, out_p), lambda i, k: (0, 0))],
        out_specs=pl.BlockSpec((tm, out_p), lambda i, k: (i, 0)),
        scratch_shapes=[pltpu.VMEM((tm, w_p), f32)],
        compiler_params=cparams_2d,
        cost_estimate=conv_cost,
    )
    out_pad = conv_head_call(h, a_q, x, layer_wb[-1][1],
                             wo1_p, bo1_p, wo2_p, bo2_p)

    return out_pad[:n, :1]


# --------------------------- glue / reference ------------------------------- #

def build_gcn_adjacency(edge_index, n):
    """Dense D^-1/2 (A + I) D^-1/2 matching PyG GCNConv gcn_norm defaults."""
    src, dst = edge_index[0], edge_index[1]
    loops = jnp.arange(n, dtype=src.dtype)
    src = jnp.concatenate([src, loops])
    dst = jnp.concatenate([dst, loops])
    deg = jnp.zeros((n,), jnp.float32).at[dst].add(1.0)
    dinv = jnp.where(deg > 0, 1.0 / jnp.sqrt(deg), 0.0)
    w = dinv[src] * dinv[dst]
    return jnp.zeros((n, n), jnp.float32).at[dst, src].add(w)


def init_linear(key, fan_in, fan_out):
    """PyTorch-Linear-style uniform init; weight as [in, out], bias [1, out]."""
    kw, kb = jax.random.split(key)
    bound = 1.0 / jnp.sqrt(fan_in)
    w = jax.random.uniform(kw, (fan_in, fan_out), jnp.float32, -bound, bound)
    b = jax.random.uniform(kb, (1, fan_out), jnp.float32, -bound, bound)
    return w, b


def reference_forward(x_cat, a_hat, params, depth, a_quant=True):
    """Plain-JAX reference mirroring the kernel's mixed precision
    (int8/bf16 A_hat, bf16 conv weights/H, f32 accumulation + residual)."""
    (win, bin_, w1, b1, w2, b2, w3, b3, w4, b4, wo1, bo1, wo2, bo2) = params
    bf16 = jnp.bfloat16
    if a_quant:
        a_q = jnp.clip(jnp.round(a_hat * 127.0), 0.0, 127.0).astype(jnp.int8)
        a = a_q.astype(jnp.float32).astype(bf16)
        a_scale = 1.0 / 127.0
    else:
        a = a_hat.astype(bf16)
        a_scale = 1.0
    x = jnp.dot(x_cat, win, preferred_element_type=jnp.float32) + bin_
    for _ in range(depth):
        for w, b in ((w1, b1), (w2, b2), (w3, b3), (w4, b4)):
            h = jnp.dot(x.astype(bf16), w.astype(bf16),
                        preferred_element_type=jnp.float32).astype(bf16)
            agg = jnp.dot(a, h, preferred_element_type=jnp.float32)
            x = jnp.maximum(x + agg * a_scale + b, 0.0)
    y = jnp.dot(x, wo1, preferred_element_type=jnp.float32) + bo1
    y = jnp.where(y > 0, y, 0.01 * y)
    return jnp.dot(y, wo2, preferred_element_type=jnp.float32) + bo2


# ---------------------------------- main ------------------------------------ #

if __name__ == "__main__":
    # Small, deterministic config.
    N = 200           # graph nodes (padded inside the wrapper)
    POS_DIM = 2       # data.pos feature dim
    FEAT_DIM = 1      # data.x feature dim
    IN_WIDTH = POS_DIM + FEAT_DIM   # fc_in input (cat([pos, x]))
    WIDTH = 32
    KER_WIDTH = 64
    DEPTH = 2

    key = jax.random.PRNGKey(0)
    keys = jax.random.split(key, 10)

    x_feat = jax.random.normal(keys[0], (N, FEAT_DIM), jnp.float32)
    pos = jax.random.normal(keys[1], (N, POS_DIM), jnp.float32)
    idx = jnp.arange(N, dtype=jnp.int32)
    edge_index = jnp.stack([
        jnp.concatenate([idx, (idx + 1) % N]),
        jnp.concatenate([(idx + 1) % N, idx]),
    ])  # undirected ring graph, [2, 2N]

    win, bin_ = init_linear(keys[2], IN_WIDTH, WIDTH)     # fc_in
    w1, b1 = init_linear(keys[3], WIDTH, WIDTH)           # conv1
    w2, b2 = init_linear(keys[4], WIDTH, WIDTH)           # conv2
    w3, b3 = init_linear(keys[5], WIDTH, WIDTH)           # conv3
    w4, b4 = init_linear(keys[6], WIDTH, WIDTH)           # conv4
    wo1, bo1 = init_linear(keys[7], WIDTH, KER_WIDTH)     # fc_out1
    wo2, bo2 = init_linear(keys[8], KER_WIDTH, 1)         # fc_out2
    params = (win, bin_, w1, b1, w2, b2, w3, b3, w4, b4, wo1, bo1, wo2, bo2)

    # Glue: cat([pos, x], dim=1) and densified normalized adjacency.
    x_cat = jnp.concatenate([pos, x_feat], axis=1)        # [N, IN_WIDTH]
    a_hat = build_gcn_adjacency(edge_index, N)            # [N, N]

    # Config 1: production path — big-tile defaults (clamped for small N),
    # int8-quantized A stream.
    fwd_q = jax.jit(functools.partial(gcn_net_forward, depth=DEPTH,
                                      a_quant=True))
    out_q = jax.block_until_ready(fwd_q(x_cat, a_hat, params))
    ref_q = reference_forward(x_cat, a_hat, params, DEPTH, a_quant=True)
    assert out_q.shape == (N, 1)
    assert jnp.allclose(out_q, ref_q, atol=2e-3, rtol=2e-3), \
        "int8-A path mismatch vs JAX reference"

    # Config 2: small tiles exercise the multi-step reduction grid + bf16-A path.
    fwd_b = jax.jit(functools.partial(gcn_net_forward, depth=DEPTH,
                                      a_quant=False, tm=128, tk=128))
    out_b = jax.block_until_ready(fwd_b(x_cat, a_hat, params))
    ref_b = reference_forward(x_cat, a_hat, params, DEPTH, a_quant=False)
    assert out_b.shape == (N, 1)
    assert jnp.allclose(out_b, ref_b, atol=2e-3, rtol=2e-3), \
        "bf16-A path mismatch vs JAX reference"

    print("KERNEL_OK")
</pallas_src>

<mosaic_0001>
module attributes {stable_mosaic.version = 11 : i64} {
  func.func @entry_kernel(%arg0: i32, %arg1: memref<256x8xf32, #tpu.memory_space<vmem>>, %arg2: memref<8x128xf32, #tpu.memory_space<vmem>>, %arg3: memref<1x128xf32, #tpu.memory_space<vmem>>, %arg4: memref<128x128xbf16, #tpu.memory_space<vmem>>, %arg5: memref<256x128xf32, #tpu.memory_space<vmem>>, %arg6: memref<256x128xbf16, #tpu.memory_space<vmem>>) attributes {dimension_semantics = [#tpu.dimension_semantics<parallel>], iteration_bounds = array<i64: 1>, scalar_prefetch = 0 : i64, scratch_operands = 0 : i64, tpu.core_type = #tpu.core_type<tc>, window_params = [{transform_indices = @transform_0, window_bounds = array<i64: 256, 8>}, {pipeline_mode = #tpu.pipeline_mode<synchronous>, transform_indices = @transform_1, window_bounds = array<i64: 8, 128>}, {pipeline_mode = #tpu.pipeline_mode<synchronous>, transform_indices = @transform_2, window_bounds = array<i64: 1, 128>}, {pipeline_mode = #tpu.pipeline_mode<synchronous>, transform_indices = @transform_3, window_bounds = array<i64: 128, 128>}, {transform_indices = @transform_4, window_bounds = array<i64: 256, 128>}, {transform_indices = @transform_5, window_bounds = array<i64: 256, 128>}]} {
    %c0 = arith.constant 0 : index
    %c0_0 = arith.constant 0 : index
    %0 = vector.load %arg1[%c0, %c0_0] : memref<256x8xf32, #tpu.memory_space<vmem>>, vector<256x8xf32>
    %c0_1 = arith.constant 0 : index
    %c0_2 = arith.constant 0 : index
    %1 = vector.load %arg2[%c0_1, %c0_2] : memref<8x128xf32, #tpu.memory_space<vmem>>, vector<8x128xf32>
    %cst = arith.constant dense<0.000000e+00> : vector<256x128xf32>
    %2 = tpu.matmul %0, %1, %cst {dimension_numbers = #tpu.dot_dimension_numbers<[1], [0], [0], [1], [0, 0, 1, 1], [], []>} : vector<256x8xf32>, vector<8x128xf32>, vector<256x128xf32> -> vector<256x128xf32>
    %c0_3 = arith.constant 0 : index
    %c0_4 = arith.constant 0 : index
    %3 = vector.load %arg3[%c0_3, %c0_4] : memref<1x128xf32, #tpu.memory_space<vmem>>, vector<1x128xf32>
    %4 = vector.broadcast %3 : vector<1x128xf32> to vector<256x128xf32>
    %5 = arith.addf %2, %4 : vector<256x128xf32>
    %c0_5 = arith.constant 0 : index
    %c0_6 = arith.constant 0 : index
    %6 = vector.load %arg5[%c0_5, %c0_6] : memref<256x128xf32, #tpu.memory_space<vmem>>, vector<256x128xf32>
    tpu.vector_store %arg5[%c0_5, %c0_6], %5 {strides = array<i32>} : memref<256x128xf32, #tpu.memory_space<vmem>>, vector<256x128xf32>,
    %7 = arith.truncf %5 : vector<256x128xf32> to vector<256x128xbf16>
    %c0_7 = arith.constant 0 : index
    %c0_8 = arith.constant 0 : index
    %8 = vector.load %arg4[%c0_7, %c0_8] : memref<128x128xbf16, #tpu.memory_space<vmem>>, vector<128x128xbf16>
    %cst_9 = arith.constant dense<0.000000e+00> : vector<256x128xf32>
    %9 = tpu.matmul %7, %8, %cst_9 {dimension_numbers = #tpu.dot_dimension_numbers<[1], [0], [0], [1], [0, 0, 1, 1], [], []>} : vector<256x128xbf16>, vector<128x128xbf16>, vector<256x128xf32> -> vector<256x128xf32>
    %10 = arith.truncf %9 : vector<256x128xf32> to vector<256x128xbf16>
    %c0_10 = arith.constant 0 : index
    %c0_11 = arith.constant 0 : index
    %11 = vector.load %arg6[%c0_10, %c0_11] : memref<256x128xbf16, #tpu.memory_space<vmem>>, vector<256x128xbf16>
    tpu.vector_store %arg6[%c0_10, %c0_11], %10 {strides = array<i32>} : memref<256x128xbf16, #tpu.memory_space<vmem>>, vector<256x128xbf16>,
    return
  }
  func.func @transform_0(%arg0: i32) -> (i32, i32) {
    %c0_i32 = arith.constant 0 : i32
    %c0_i32_0 = arith.constant 0 : i32
    return %arg0, %c0_i32 : i32, i32
  }
  func.func @transform_1(%arg0: i32) -> (i32, i32) {
    %c0_i32 = arith.constant 0 : i32
    %c0_i32_0 = arith.constant 0 : i32
    %c0_i32_1 = arith.constant 0 : i32
    return %c0_i32, %c0_i32_0 : i32, i32
  }
  func.func @transform_2(%arg0: i32) -> (i32, i32) {
    %c0_i32 = arith.constant 0 : i32
    %c0_i32_0 = arith.constant 0 : i32
    %c0_i32_1 = arith.constant 0 : i32
    return %c0_i32, %c0_i32_0 : i32, i32
  }
  func.func @transform_3(%arg0: i32) -> (i32, i32) {
    %c0_i32 = arith.constant 0 : i32
    %c0_i32_0 = arith.constant 0 : i32
    %c0_i32_1 = arith.constant 0 : i32
    return %c0_i32, %c0_i32_0 : i32, i32
  }
  func.func @transform_4(%arg0: i32) -> (i32, i32) {
    %c0_i32 = arith.constant 0 : i32
    %c0_i32_0 = arith.constant 0 : i32
    return %arg0, %c0_i32 : i32, i32
  }
  func.func @transform_5(%arg0: i32) -> (i32, i32) {
    %c0_i32 = arith.constant 0 : i32
    %c0_i32_0 = arith.constant 0 : i32
    return %arg0, %c0_i32 : i32, i32
  }
}

module attributes {stable_mosaic.version = 11 : i64} {
  func.func @conv_kernel(%arg0: i32, %arg1: i32, %arg2: memref<256x128xbf16, #tpu.memory_space<vmem>>, %arg3: memref<256x256xi8, #tpu.memory_space<vmem>>, %arg4: memref<256x128xf32, #tpu.memory_space<vmem>>, %arg5: memref<1x128xf32, #tpu.memory_space<vmem>>, %arg6: memref<128x128xbf16, #tpu.memory_space<vmem>>, %arg7: memref<256x128xf32, #tpu.memory_space<vmem>>, %arg8: memref<256x128xbf16, #tpu.memory_space<vmem>>, %arg9: memref<256x128xf32, #tpu.memory_space<vmem>>) attributes {dimension_semantics = [#tpu.dimension_semantics<parallel>, #tpu.dimension_semantics<arbitrary>], iteration_bounds = array<i64: 1, 1>, scalar_prefetch = 0 : i64, scratch_operands = 1 : i64, tpu.core_type = #tpu.core_type<tc>, window_params = [{pipeline_mode = #tpu.pipeline_mode<synchronous>, transform_indices = @transform_0, window_bounds = array<i64: 256, 128>}, {transform_indices = @transform_1, window_bounds = array<i64: 256, 256>}, {transform_indices = @transform_2, window_bounds = array<i64: 256, 128>}, {pipeline_mode = #tpu.pipeline_mode<synchronous>, transform_indices = @transform_3, window_bounds = array<i64: 1, 128>}, {pipeline_mode = #tpu.pipeline_mode<synchronous>, transform_indices = @transform_4, window_bounds = array<i64: 128, 128>}, {transform_indices = @transform_5, window_bounds = array<i64: 256, 128>}, {transform_indices = @transform_6, window_bounds = array<i64: 256, 128>}]} {
    %c0_i32 = arith.constant 0 : i32
    %0 = arith.cmpi eq, %arg1, %c0_i32 : i32
    %1 = arith.extui %0 : i1 to i32
    %c0_i32_0 = arith.constant 0 : i32
    %2 = arith.cmpi ne, %1, %c0_i32_0 : i32
    scf.if %2 {
      %cst_9 = arith.constant 0.000000e+00 : f32
      %17 = vector.broadcast %cst_9 : f32 to vector<256x128xf32>
      %c0_10 = arith.constant 0 : index
      %c0_11 = arith.constant 0 : index
      %18 = vector.load %arg9[%c0_10, %c0_11] : memref<256x128xf32, #tpu.memory_space<vmem>>, vector<256x128xf32>
      tpu.vector_store %arg9[%c0_10, %c0_11], %17 {strides = array<i32>} : memref<256x128xf32, #tpu.memory_space<vmem>>, vector<256x128xf32>,
    } else {
    }
    %c0 = arith.constant 0 : index
    %c0_1 = arith.constant 0 : index
    %3 = vector.load %arg3[%c0, %c0_1] : memref<256x256xi8, #tpu.memory_space<vmem>>, vector<256x256xi8>
    %4 = arith.sitofp %3 : vector<256x256xi8> to vector<256x256xf32>
    %5 = arith.truncf %4 : vector<256x256xf32> to vector<256x256xbf16>
    %c256_i32 = arith.constant 256 : i32
    %6 = arith.muli %arg1, %c256_i32 : i32
    %7 = tpu.assume_multiple %6, 256 : i32
    %8 = arith.index_cast %7 : i32 to index
    %c0_2 = arith.constant 0 : index
    %9 = vector.load %arg2[%8, %c0_2] : memref<256x128xbf16, #tpu.memory_space<vmem>>, vector<256x128xbf16>
    %c0_3 = arith.constant 0 : index
    %c0_4 = arith.constant 0 : index
    %10 = vector.load %arg9[%c0_3, %c0_4] : memref<256x128xf32, #tpu.memory_space<vmem>>, vector<256x128xf32>
    %cst = arith.constant dense<0.000000e+00> : vector<256x128xf32>
    %11 = tpu.matmul %5, %9, %cst {dimension_numbers = #tpu.dot_dimension_numbers<[1], [0], [0], [1], [0, 0, 1, 1], [], []>} : vector<256x256xbf16>, vector<256x128xbf16>, vector<256x128xf32> -> vector<256x128xf32>
    %12 = arith.addf %10, %11 : vector<256x128xf32>
    %c0_5 = arith.constant 0 : index
    %c0_6 = arith.constant 0 : index
    %13 = vector.load %arg9[%c0_5, %c0_6] : memref<256x128xf32, #tpu.memory_space<vmem>>, vector<256x128xf32>
    tpu.vector_store %arg9[%c0_5, %c0_6], %12 {strides = array<i32>} : memref<256x128xf32, #tpu.memory_space<vmem>>, vector<256x128xf32>,
    %c0_i32_7 = arith.constant 0 : i32
    %14 = arith.cmpi eq, %arg1, %c0_i32_7 : i32
    %15 = arith.extui %14 : i1 to i32
    %c0_i32_8 = arith.constant 0 : i32
    %16 = arith.cmpi ne, %15, %c0_i32_8 : i32
    scf.if %16 {
      %c0_9 = arith.constant 0 : index
      %c0_10 = arith.constant 0 : index
      %17 = vector.load %arg9[%c0_9, %c0_10] : memref<256x128xf32, #tpu.memory_space<vmem>>, vector<256x128xf32>
      %cst_11 = arith.constant 0.00787401571 : f32
      %18 = vector.broadcast %cst_11 : f32 to vector<256x128xf32>
      %19 = arith.mulf %17, %18 : vector<256x128xf32>
      %c0_12 = arith.constant 0 : index
      %c0_13 = arith.constant 0 : index
      %20 = vector.load %arg4[%c0_12, %c0_13] : memref<256x128xf32, #tpu.memory_space<vmem>>, vector<256x128xf32>
      %21 = arith.addf %20, %19 : vector<256x128xf32>
      %c0_14 = arith.constant 0 : index
      %c0_15 = arith.constant 0 : index
      %22 = vector.load %arg5[%c0_14, %c0_15] : memref<1x128xf32, #tpu.memory_space<vmem>>, vector<1x128xf32>
      %23 = vector.broadcast %22 : vector<1x128xf32> to vector<256x128xf32>
      %24 = arith.addf %21, %23 : vector<256x128xf32>
      %cst_16 = arith.constant 0.000000e+00 : f32
      %25 = vector.broadcast %cst_16 : f32 to vector<256x128xf32>
      %26 = arith.maximumf %24, %25 : vector<256x128xf32>
      %c0_17 = arith.constant 0 : index
      %c0_18 = arith.constant 0 : index
      %27 = vector.load %arg7[%c0_17, %c0_18] : memref<256x128xf32, #tpu.memory_space<vmem>>, vector<256x128xf32>
      tpu.vector_store %arg7[%c0_17, %c0_18], %26 {strides = array<i32>} : memref<256x128xf32, #tpu.memory_space<vmem>>, vector<256x128xf32>,
      %28 = arith.truncf %26 : vector<256x128xf32> to vector<256x128xbf16>
      %c0_19 = arith.constant 0 : index
      %c0_20 = arith.constant 0 : index
      %29 = vector.load %arg6[%c0_19, %c0_20] : memref<128x128xbf16, #tpu.memory_space<vmem>>, vector<128x128xbf16>
      %cst_21 = arith.constant dense<0.000000e+00> : vector<256x128xf32>
      %30 = tpu.matmul %28, %29, %cst_21 {dimension_numbers = #tpu.dot_dimension_numbers<[1], [0], [0], [1], [0, 0, 1, 1], [], []>} : vector<256x128xbf16>, vector<128x128xbf16>, vector<256x128xf32> -> vector<256x128xf32>
      %31 = arith.truncf %30 : vector<256x128xf32> to vector<256x128xbf16>
      %c0_22 = arith.constant 0 : index
      %c0_23 = arith.constant 0 : index
      %32 = vector.load %arg8[%c0_22, %c0_23] : memref<256x128xbf16, #tpu.memory_space<vmem>>, vector<256x128xbf16>
      tpu.vector_store %arg8[%c0_22, %c0_23], %31 {strides = array<i32>} : memref<256x128xbf16, #tpu.memory_space<vmem>>, vector<256x128xbf16>,
    } else {
    }
    return
  }
  func.func @transform_0(%arg0: i32, %arg1: i32) -> (i32, i32) {
    %c0_i32 = arith.constant 0 : i32
    %c0_i32_0 = arith.constant 0 : i32
    %c0_i32_1 = arith.constant 0 : i32
    return %c0_i32, %c0_i32_0 : i32, i32
  }
  func.func @transform_1(%arg0: i32, %arg1: i32) -> (i32, i32) {
    %c0_i32 = arith.constant 0 : i32
    return %arg0, %arg1 : i32, i32
  }
  func.func @transform_2(%arg0: i32, %arg1: i32) -> (i32, i32) {
    %c0_i32 = arith.constant 0 : i32
    %c0_i32_0 = arith.constant 0 : i32
    return %arg0, %c0_i32 : i32, i32
  }
  func.func @transform_3(%arg0: i32, %arg1: i32) -> (i32, i32) {
    %c0_i32 = arith.constant 0 : i32
    %c0_i32_0 = arith.constant 0 : i32
    %c0_i32_1 = arith.constant 0 : i32
    return %c0_i32, %c0_i32_0 : i32, i32
  }
  func.func @transform_4(%arg0: i32, %arg1: i32) -> (i32, i32) {
    %c0_i32 = arith.constant 0 : i32
    %c0_i32_0 = arith.constant 0 : i32
    %c0_i32_1 = arith.constant 0 : i32
    return %c0_i32, %c0_i32_0 : i32, i32
  }
  func.func @transform_5(%arg0: i32, %arg1: i32) -> (i32, i32) {
    %c0_i32 = arith.constant 0 : i32
    %c0_i32_0 = arith.constant 0 : i32
    return %arg0, %c0_i32 : i32, i32
  }
  func.func @transform_6(%arg0: i32, %arg1: i32) -> (i32, i32) {
    %c0_i32 = arith.constant 0 : i32
    %c0_i32_0 = arith.constant 0 : i32
    return %arg0, %c0_i32 : i32, i32
  }
}

module attributes {stable_mosaic.version = 11 : i64} {
  func.func @conv_head_kernel(%arg0: i32, %arg1: i32, %arg2: memref<256x128xbf16, #tpu.memory_space<vmem>>, %arg3: memref<256x256xi8, #tpu.memory_space<vmem>>, %arg4: memref<256x128xf32, #tpu.memory_space<vmem>>, %arg5: memref<1x128xf32, #tpu.memory_space<vmem>>, %arg6: memref<128x128xf32, #tpu.memory_space<vmem>>, %arg7: memref<1x128xf32, #tpu.memory_space<vmem>>, %arg8: memref<128x128xf32, #tpu.memory_space<vmem>>, %arg9: memref<1x128xf32, #tpu.memory_space<vmem>>, %arg10: memref<256x128xf32, #tpu.memory_space<vmem>>, %arg11: memref<256x128xf32, #tpu.memory_space<vmem>>) attributes {dimension_semantics = [#tpu.dimension_semantics<parallel>, #tpu.dimension_semantics<arbitrary>], iteration_bounds = array<i64: 1, 1>, scalar_prefetch = 0 : i64, scratch_operands = 1 : i64, tpu.core_type = #tpu.core_type<tc>, window_params = [{pipeline_mode = #tpu.pipeline_mode<synchronous>, transform_indices = @transform_0, window_bounds = array<i64: 256, 128>}, {transform_indices = @transform_1, window_bounds = array<i64: 256, 256>}, {transform_indices = @transform_2, window_bounds = array<i64: 256, 128>}, {pipeline_mode = #tpu.pipeline_mode<synchronous>, transform_indices = @transform_3, window_bounds = array<i64: 1, 128>}, {pipeline_mode = #tpu.pipeline_mode<synchronous>, transform_indices = @transform_4, window_bounds = array<i64: 128, 128>}, {pipeline_mode = #tpu.pipeline_mode<synchronous>, transform_indices = @transform_5, window_bounds = array<i64: 1, 128>}, {pipeline_mode = #tpu.pipeline_mode<synchronous>, transform_indices = @transform_6, window_bounds = array<i64: 128, 128>}, {pipeline_mode = #tpu.pipeline_mode<synchronous>, transform_indices = @transform_7, window_bounds = array<i64: 1, 128>}, {transform_indices = @transform_8, window_bounds = array<i64: 256, 128>}]} {
    %c0_i32 = arith.constant 0 : i32
    %0 = arith.cmpi eq, %arg1, %c0_i32 : i32
    %1 = arith.extui %0 : i1 to i32
    %c0_i32_0 = arith.constant 0 : i32
    %2 = arith.cmpi ne, %1, %c0_i32_0 : i32
    scf.if %2 {
      %cst_9 = arith.constant 0.000000e+00 : f32
      %17 = vector.broadcast %cst_9 : f32 to vector<256x128xf32>
      %c0_10 = arith.constant 0 : index
      %c0_11 = arith.constant 0 : index
      %18 = vector.load %arg11[%c0_10, %c0_11] : memref<256x128xf32, #tpu.memory_space<vmem>>, vector<256x128xf32>
      tpu.vector_store %arg11[%c0_10, %c0_11], %17 {strides = array<i32>} : memref<256x128xf32, #tpu.memory_space<vmem>>, vector<256x128xf32>,
    } else {
    }
    %c0 = arith.constant 0 : index
    %c0_1 = arith.constant 0 : index
    %3 = vector.load %arg3[%c0, %c0_1] : memref<256x256xi8, #tpu.memory_space<vmem>>, vector<256x256xi8>
    %4 = arith.sitofp %3 : vector<256x256xi8> to vector<256x256xf32>
    %5 = arith.truncf %4 : vector<256x256xf32> to vector<256x256xbf16>
    %c256_i32 = arith.constant 256 : i32
    %6 = arith.muli %arg1, %c256_i32 : i32
    %7 = tpu.assume_multiple %6, 256 : i32
    %8 = arith.index_cast %7 : i32 to index
    %c0_2 = arith.constant 0 : index
    %9 = vector.load %arg2[%8, %c0_2] : memref<256x128xbf16, #tpu.memory_space<vmem>>, vector<256x128xbf16>
    %c0_3 = arith.constant 0 : index
    %c0_4 = arith.constant 0 : index
    %10 = vector.load %arg11[%c0_3, %c0_4] : memref<256x128xf32, #tpu.memory_space<vmem>>, vector<256x128xf32>
    %cst = arith.constant dense<0.000000e+00> : vector<256x128xf32>
    %11 = tpu.matmul %5, %9, %cst {dimension_numbers = #tpu.dot_dimension_numbers<[1], [0], [0], [1], [0, 0, 1, 1], [], []>} : vector<256x256xbf16>, vector<256x128xbf16>, vector<256x128xf32> -> vector<256x128xf32>
    %12 = arith.addf %10, %11 : vector<256x128xf32>
    %c0_5 = arith.constant 0 : index
    %c0_6 = arith.constant 0 : index
    %13 = vector.load %arg11[%c0_5, %c0_6] : memref<256x128xf32, #tpu.memory_space<vmem>>, vector<256x128xf32>
    tpu.vector_store %arg11[%c0_5, %c0_6], %12 {strides = array<i32>} : memref<256x128xf32, #tpu.memory_space<vmem>>, vector<256x128xf32>,
    %c0_i32_7 = arith.constant 0 : i32
    %14 = arith.cmpi eq, %arg1, %c0_i32_7 : i32
    %15 = arith.extui %14 : i1 to i32
    %c0_i32_8 = arith.constant 0 : i32
    %16 = arith.cmpi ne, %15, %c0_i32_8 : i32
    scf.if %16 {
      %c0_9 = arith.constant 0 : index
      %c0_10 = arith.constant 0 : index
      %17 = vector.load %arg11[%c0_9, %c0_10] : memref<256x128xf32, #tpu.memory_space<vmem>>, vector<256x128xf32>
      %cst_11 = arith.constant 0.00787401571 : f32
      %18 = vector.broadcast %cst_11 : f32 to vector<256x128xf32>
      %19 = arith.mulf %17, %18 : vector<256x128xf32>
      %c0_12 = arith.constant 0 : index
      %c0_13 = arith.constant 0 : index
      %20 = vector.load %arg4[%c0_12, %c0_13] : memref<256x128xf32, #tpu.memory_space<vmem>>, vector<256x128xf32>
      %21 = arith.addf %20, %19 : vector<256x128xf32>
      %c0_14 = arith.constant 0 : index
      %c0_15 = arith.constant 0 : index
      %22 = vector.load %arg5[%c0_14, %c0_15] : memref<1x128xf32, #tpu.memory_space<vmem>>, vector<1x128xf32>
      %23 = vector.broadcast %22 : vector<1x128xf32> to vector<256x128xf32>
      %24 = arith.addf %21, %23 : vector<256x128xf32>
      %cst_16 = arith.constant 0.000000e+00 : f32
      %25 = vector.broadcast %cst_16 : f32 to vector<256x128xf32>
      %26 = arith.maximumf %24, %25 : vector<256x128xf32>
      %c0_17 = arith.constant 0 : index
      %c0_18 = arith.constant 0 : index
      %27 = vector.load %arg6[%c0_17, %c0_18] : memref<128x128xf32, #tpu.memory_space<vmem>>, vector<128x128xf32>
      %cst_19 = arith.constant dense<0.000000e+00> : vector<256x128xf32>
      %28 = tpu.matmul %26, %27, %cst_19 {dimension_numbers = #tpu.dot_dimension_numbers<[1], [0], [0], [1], [0, 0, 1, 1], [], []>} : vector<256x128xf32>, vector<128x128xf32>, vector<256x128xf32> -> vector<256x128xf32>
      %c0_20 = arith.constant 0 : index
      %c0_21 = arith.constant 0 : index
      %29 = vector.load %arg7[%c0_20, %c0_21] : memref<1x128xf32, #tpu.memory_space<vmem>>, vector<1x128xf32>
      %30 = vector.broadcast %29 : vector<1x128xf32> to vector<256x128xf32>
      %31 = arith.addf %28, %30 : vector<256x128xf32>
      %cst_22 = arith.constant 0.000000e+00 : f32
      %32 = vector.broadcast %cst_22 : f32 to vector<256x128xf32>
      %33 = arith.cmpf ogt, %31, %32 : vector<256x128xf32>
      %cst_23 = arith.constant 0.00999999977 : f32
      %34 = vector.broadcast %cst_23 : f32 to vector<256x128xf32>
      %35 = arith.mulf %34, %31 : vector<256x128xf32>
      %36 = arith.select %33, %31, %35 : vector<256x128xi1>, vector<256x128xf32>
      %c0_24 = arith.constant 0 : index
      %c0_25 = arith.constant 0 : index
      %37 = vector.load %arg8[%c0_24, %c0_25] : memref<128x128xf32, #tpu.memory_space<vmem>>, vector<128x128xf32>
      %cst_26 = arith.constant dense<0.000000e+00> : vector<256x128xf32>
      %38 = tpu.matmul %36, %37, %cst_26 {dimension_numbers = #tpu.dot_dimension_numbers<[1], [0], [0], [1], [0, 0, 1, 1], [], []>} : vector<256x128xf32>, vector<128x128xf32>, vector<256x128xf32> -> vector<256x128xf32>
      %c0_27 = arith.constant 0 : index
      %c0_28 = arith.constant 0 : index
      %39 = vector.load %arg9[%c0_27, %c0_28] : memref<1x128xf32, #tpu.memory_space<vmem>>, vector<1x128xf32>
      %40 = vector.broadcast %39 : vector<1x128xf32> to vector<256x128xf32>
      %41 = arith.addf %38, %40 : vector<256x128xf32>
      %c0_29 = arith.constant 0 : index
      %c0_30 = arith.constant 0 : index
      %42 = vector.load %arg10[%c0_29, %c0_30] : memref<256x128xf32, #tpu.memory_space<vmem>>, vector<256x128xf32>
      tpu.vector_store %arg10[%c0_29, %c0_30], %41 {strides = array<i32>} : memref<256x128xf32, #tpu.memory_space<vmem>>, vector<256x128xf32>,
    } else {
    }
    return
  }
  func.func @transform_0(%arg0: i32, %arg1: i32) -> (i32, i32) {
    %c0_i32 = arith.constant 0 : i32
    %c0_i32_0 = arith.constant 0 : i32
    %c0_i32_1 = arith.constant 0 : i32
    return %c0_i32, %c0_i32_0 : i32, i32
  }
  func.func @transform_1(%arg0: i32, %arg1: i32) -> (i32, i32) {
    %c0_i32 = arith.constant 0 : i32
    return %arg0, %arg1 : i32, i32
  }
  func.func @transform_2(%arg0: i32, %arg1: i32) -> (i32, i32) {
    %c0_i32 = arith.constant 0 : i32
    %c0_i32_0 = arith.constant 0 : i32
    return %arg0, %c0_i32 : i32, i32
  }
  func.func @transform_3(%arg0: i32, %arg1: i32) -> (i32, i32) {
    %c0_i32 = arith.constant 0 : i32
    %c0_i32_0 = arith.constant 0 : i32
    %c0_i32_1 = arith.constant 0 : i32
    return %c0_i32, %c0_i32_0 : i32, i32
  }
  func.func @transform_4(%arg0: i32, %arg1: i32) -> (i32, i32) {
    %c0_i32 = arith.constant 0 : i32
    %c0_i32_0 = arith.constant 0 : i32
    %c0_i32_1 = arith.constant 0 : i32
    return %c0_i32, %c0_i32_0 : i32, i32
  }
  func.func @transform_5(%arg0: i32, %arg1: i32) -> (i32, i32) {
    %c0_i32 = arith.constant 0 : i32
    %c0_i32_0 = arith.constant 0 : i32
    %c0_i32_1 = arith.constant 0 : i32
    return %c0_i32, %c0_i32_0 : i32, i32
  }
  func.func @transform_6(%arg0: i32, %arg1: i32) -> (i32, i32) {
    %c0_i32 = arith.constant 0 : i32
    %c0_i32_0 = arith.constant 0 : i32
    %c0_i32_1 = arith.constant 0 : i32
    return %c0_i32, %c0_i32_0 : i32, i32
  }
  func.func @transform_7(%arg0: i32, %arg1: i32) -> (i32, i32) {
    %c0_i32 = arith.constant 0 : i32
    %c0_i32_0 = arith.constant 0 : i32
    %c0_i32_1 = arith.constant 0 : i32
    return %c0_i32, %c0_i32_0 : i32, i32
  }
  func.func @transform_8(%arg0: i32, %arg1: i32) -> (i32, i32) {
    %c0_i32 = arith.constant 0 : i32
    %c0_i32_0 = arith.constant 0 : i32
    return %arg0, %c0_i32 : i32, i32
  }
}

</mosaic_0001>

<llo_original>
// kernel: gcn_net_forward.9
$region0: #{gcn_net_forward.9}
  #allocation0 [shape = 'u32[]', space=smem, size = 0x4, offset = 0x4, fixed_abs, tag = 'smem constant byte address 0x4 - core index']
  #allocation1 [shape = 'u32[72,128]{1,0:T(1,128)}', space=vmem, size = 0x9000, scoped, tag = 'internal scratch']
  %s0 = inlined_call_operand.vmem [shape: f32[256,8], index: 0, kind: input, shape index: {}]
  %s1 = inlined_call_operand.vmem [shape: f32[8,128], index: 1, kind: input, shape index: {}]
  %s2 = inlined_call_operand.vmem [shape: f32[1,128], index: 2, kind: input, shape index: {}]
  %s3 = inlined_call_operand.vmem [shape: bf16[128,128], index: 3, kind: input, shape index: {}]
  %s4 = inlined_call_operand.vmem [shape: f32[256,128], index: 4, kind: output, shape index: {0}]
  %s5 = inlined_call_operand.vmem [shape: bf16[256,128], index: 5, kind: output, shape index: {1}]
  %6 = xla_tuple %s4, %s5
  %s7 = sld [smem:[#allocation0]]
  $region34: #{gcn_net_forward.9} parent=0
    _
  %s9 = ssub.s32 1, %s7
  %s10 = scalar_select 0, %s9, %s7
  // Predicated region
  $region2: #{gcn_net_forward.9} parent=0 // pred_check
    _
  $region3: #{gcn_net_forward.9} parent=0 // pred_check_branch
    %12 = sbr.rel (0) target = $region5
  $region4: #{gcn_net_forward.9} parent=0 // pred_region
    _
  $region5: #{gcn_net_forward.9} parent=0 // pred_fallthru
    _
  // Predicated region
  $region6: #{gcn_net_forward.9} parent=0 // pred_check
    _
  $region7: #{gcn_net_forward.9} parent=0 // pred_check_branch
    %14 = sbr.rel (0) target = $region9
  $region8: #{gcn_net_forward.9} parent=0 // pred_region
    _
  $region9: #{gcn_net_forward.9} parent=0 // pred_fallthru
    _
  // Predicated region
  $region10: #{gcn_net_forward.9} parent=0 // pred_check
    _
  $region11: #{gcn_net_forward.9} parent=0 // pred_check_branch
    %16 = sbr.rel (0) target = $region13
  $region12: #{gcn_net_forward.9} parent=0 // pred_region
    _
  $region13: #{gcn_net_forward.9} parent=0 // pred_fallthru
    _
  // Predicated region
  $region14: #{gcn_net_forward.9} parent=0 // pred_check
    _
  $region15: #{gcn_net_forward.9} parent=0 // pred_check_branch
    %18 = sbr.rel (0) target = $region17
  $region16: #{gcn_net_forward.9} parent=0 // pred_region
    _
  $region17: #{gcn_net_forward.9} parent=0 // pred_fallthru
    _
  %v19 = vld [vmem:[%s0] sm:$0xff]
  %v20 = vld [vmem:[%s0 + $0x8] sm:$0xff]
  %v21 = vld [vmem:[%s0 + $0x10] sm:$0xff]
  %v22 = vld [vmem:[%s0 + $0x18] sm:$0xff]
  %v23 = vld [vmem:[%s0 + $0x20] sm:$0xff]
  %v24 = vld [vmem:[%s0 + $0x28] sm:$0xff]
  %v25 = vld [vmem:[%s0 + $0x30] sm:$0xff]
  %v26 = vld [vmem:[%s0 + $0x38] sm:$0xff]
  %v27 = vld [vmem:[%s0 + $0x40] sm:$0xff]
  %v28 = vld [vmem:[%s0 + $0x48] sm:$0xff]
  %v29 = vld [vmem:[%s0 + $0x50] sm:$0xff]
  %v30 = vld [vmem:[%s0 + $0x58] sm:$0xff]
  %v31 = vld [vmem:[%s0 + $0x60] sm:$0xff]
  %v32 = vld [vmem:[%s0 + $0x68] sm:$0xff]
  %v33 = vld [vmem:[%s0 + $0x70] sm:$0xff]
  %v34 = vld [vmem:[%s0 + $0x78] sm:$0xff]
  %v35 = vld [vmem:[%s0 + $0x80] sm:$0xff]
  %v36 = vld [vmem:[%s0 + $0x88] sm:$0xff]
  %v37 = vld [vmem:[%s0 + $0x90] sm:$0xff]
  %v38 = vld [vmem:[%s0 + $0x98] sm:$0xff]
  %v39 = vld [vmem:[%s0 + $0xa0] sm:$0xff]
  %v40 = vld [vmem:[%s0 + $0xa8] sm:$0xff]
  %v41 = vld [vmem:[%s0 + $0xb0] sm:$0xff]
  %v42 = vld [vmem:[%s0 + $0xb8] sm:$0xff]
  %v43 = vld [vmem:[%s0 + $0xc0] sm:$0xff]
  %v44 = vld [vmem:[%s0 + $0xc8] sm:$0xff]
  %v45 = vld [vmem:[%s0 + $0xd0] sm:$0xff]
  %v46 = vld [vmem:[%s0 + $0xd8] sm:$0xff]
  %v47 = vld [vmem:[%s0 + $0xe0] sm:$0xff]
  %v48 = vld [vmem:[%s0 + $0xe8] sm:$0xff]
  %v49 = vld [vmem:[%s0 + $0xf0] sm:$0xff]
  %v50 = vld [vmem:[%s0 + $0xf8] sm:$0xff]
  %v51 = vld [vmem:[%s1] sm:$0xff]
  %v52 = vld [vmem:[%s2] sm:$0x1]
  %v54 = vperm.slane %v52, 0
  %vm56 = vcmask 64512
  %v58 = vsel %vm56, %v19, 0
  %v61 = vsel %vm56, %v20, 0
  %v64 = vsel %vm56, %v21, 0
  %v67 = vsel %vm56, %v22, 0
  %v70 = vsel %vm56, %v23, 0
  %v73 = vsel %vm56, %v24, 0
  %v76 = vsel %vm56, %v25, 0
  %v79 = vsel %vm56, %v26, 0
  %v82 = vsel %vm56, %v27, 0
  %v85 = vsel %vm56, %v28, 0
  %v88 = vsel %vm56, %v29, 0
  %v91 = vsel %vm56, %v30, 0
  %v94 = vsel %vm56, %v31, 0
  %v97 = vsel %vm56, %v32, 0
  %v100 = vsel %vm56, %v33, 0
  %v103 = vsel %vm56, %v34, 0
  %v106 = vsel %vm56, %v35, 0
  %v109 = vsel %vm56, %v36, 0
  %v112 = vsel %vm56, %v37, 0
  %v115 = vsel %vm56, %v38, 0
  %v118 = vsel %vm56, %v39, 0
  %v121 = vsel %vm56, %v40, 0
  %v124 = vsel %vm56, %v41, 0
  %v127 = vsel %vm56, %v42, 0
  %v130 = vsel %vm56, %v43, 0
  %v133 = vsel %vm56, %v44, 0
  %v136 = vsel %vm56, %v45, 0
  %v139 = vsel %vm56, %v46, 0
  %v142 = vsel %vm56, %v47, 0
  %v145 = vsel %vm56, %v48, 0
  %v148 = vsel %vm56, %v49, 0
  %v151 = vsel %vm56, %v50, 0
  %153 = vmatpush.msra.mxu0 0.0
  %154 = vmatpush.msra.mxu0 0.0
  %155 = vmatpush.msra.mxu0 0.0
  %156 = vmatpush.msra.mxu0 0.0
  %157 = vmatpush.msra.mxu0 0.0
  %158 = vmatpush.msra.mxu0 0.0
  %159 = vmatpush.msra.mxu0 0.0
  %160 = vmatpush.msra.mxu0 0.0
  %161 = vmatpush.msra.mxu0 0.0
  %162 = vmatpush.msra.mxu0 0.0
  %163 = vmatpush.msra.mxu0 0.0
  %164 = vmatpush.msra.mxu0 0.0
  %165 = vmatpush.msra.mxu0 0.0
  %166 = vmatpush.msra.mxu0 0.0
  %167 = vmatpush.msra.mxu0 0.0
  %168 = vmatpush.msra.mxu0 %v51
  %169 = vmatmul.f32.gmra.mxu0 %v58
  %v170 = vpop.f32.mrf.mxu0
  %v171 = vadd.f32 %v54, %v170
  %172 = vmatmul.f32.gmra.mxu0 %v61
  %v173 = vpop.f32.mrf.mxu0
  %v174 = vadd.f32 %v54, %v173
  %175 = vmatmul.f32.gmra.mxu0 %v64
  %v176 = vpop.f32.mrf.mxu0
  %v177 = vadd.f32 %v54, %v176
  %178 = vmatmul.f32.gmra.mxu0 %v67
  %v179 = vpop.f32.mrf.mxu0
  %v180 = vadd.f32 %v54, %v179
  %181 = vmatmul.f32.gmra.mxu0 %v70
  %v182 = vpop.f32.mrf.mxu0
  %v183 = vadd.f32 %v54, %v182
  %184 = vmatmul.f32.gmra.mxu0 %v73
  %v185 = vpop.f32.mrf.mxu0
  %v186 = vadd.f32 %v54, %v185
  %187 = vmatmul.f32.gmra.mxu0 %v76
  %v188 = vpop.f32.mrf.mxu0
  %v189 = vadd.f32 %v54, %v188
  %190 = vmatmul.f32.gmra.mxu0 %v79
  %v191 = vpop.f32.mrf.mxu0
  %v192 = vadd.f32 %v54, %v191
  %193 = vmatmul.f32.gmra.mxu0 %v82
  %v194 = vpop.f32.mrf.mxu0
  %v195 = vadd.f32 %v54, %v194
  %196 = vmatmul.f32.gmra.mxu0 %v85
  %v197 = vpop.f32.mrf.mxu0
  %v198 = vadd.f32 %v54, %v197
  %199 = vmatmul.f32.gmra.mxu0 %v88
  %v200 = vpop.f32.mrf.mxu0
  %v201 = vadd.f32 %v54, %v200
  %202 = vmatmul.f32.gmra.mxu0 %v91
  %v203 = vpop.f32.mrf.mxu0
  %v204 = vadd.f32 %v54, %v203
  %205 = vmatmul.f32.gmra.mxu0 %v94
  %v206 = vpop.f32.mrf.mxu0
  %v207 = vadd.f32 %v54, %v206
  %208 = vmatmul.f32.gmra.mxu0 %v97
  %v209 = vpop.f32.mrf.mxu0
  %v210 = vadd.f32 %v54, %v209
  %211 = vmatmul.f32.gmra.mxu0 %v100
  %v212 = vpop.f32.mrf.mxu0
  %v213 = vadd.f32 %v54, %v212
  %214 = vmatmul.f32.gmra.mxu0 %v103
  %v215 = vpop.f32.mrf.mxu0
  %v216 = vadd.f32 %v54, %v215
  %217 = vmatmul.f32.gmra.mxu0 %v106
  %v218 = vpop.f32.mrf.mxu0
  %v219 = vadd.f32 %v54, %v218
  %220 = vmatmul.f32.gmra.mxu0 %v109
  %v221 = vpop.f32.mrf.mxu0
  %v222 = vadd.f32 %v54, %v221
  %223 = vmatmul.f32.gmra.mxu0 %v112
  %v224 = vpop.f32.mrf.mxu0
  %v225 = vadd.f32 %v54, %v224
  %226 = vmatmul.f32.gmra.mxu0 %v115
  %v227 = vpop.f32.mrf.mxu0
  %v228 = vadd.f32 %v54, %v227
  %229 = vmatmul.f32.gmra.mxu0 %v118
  %v230 = vpop.f32.mrf.mxu0
  %v231 = vadd.f32 %v54, %v230
  %232 = vmatmul.f32.gmra.mxu0 %v121
  %v233 = vpop.f32.mrf.mxu0
  %v234 = vadd.f32 %v54, %v233
  %235 = vmatmul.f32.gmra.mxu0 %v124
  %v236 = vpop.f32.mrf.mxu0
  %v237 = vadd.f32 %v54, %v236
  %238 = vmatmul.f32.gmra.mxu0 %v127
  %v239 = vpop.f32.mrf.mxu0
  %v240 = vadd.f32 %v54, %v239
  %241 = vmatmul.f32.gmra.mxu0 %v130
  %v242 = vpop.f32.mrf.mxu0
  %v243 = vadd.f32 %v54, %v242
  %244 = vmatmul.f32.gmra.mxu0 %v133
  %v245 = vpop.f32.mrf.mxu0
  %v246 = vadd.f32 %v54, %v245
  %247 = vmatmul.f32.gmra.mxu0 %v136
  %v248 = vpop.f32.mrf.mxu0
  %v249 = vadd.f32 %v54, %v248
  %250 = vmatmul.f32.gmra.mxu0 %v139
  %v251 = vpop.f32.mrf.mxu0
  %v252 = vadd.f32 %v54, %v251
  %253 = vmatmul.f32.gmra.mxu0 %v142
  %v254 = vpop.f32.mrf.mxu0
  %v255 = vadd.f32 %v54, %v254
  %256 = vmatmul.f32.gmra.mxu0 %v145
  %v257 = vpop.f32.mrf.mxu0
  %v258 = vadd.f32 %v54, %v257
  %259 = vmatmul.f32.gmra.mxu0 %v148
  %v260 = vpop.f32.mrf.mxu0
  %v261 = vadd.f32 %v54, %v260
  %262 = vmatmul.f32.gmra.mxu0 %v151
  %v263 = vpop.f32.mrf.mxu0
  %v264 = vadd.f32 %v54, %v263
  %265 = vdwg.mxu0
  %266 = vst [vmem:[%s4] sm:$0xff] %v171
  %267 = vst [vmem:[%s4 + $0x8] sm:$0xff] %v174
  %268 = vst [vmem:[%s4 + $0x10] sm:$0xff] %v177
  %269 = vst [vmem:[%s4 + $0x18] sm:$0xff] %v180
  %270 = vst [vmem:[%s4 + $0x20] sm:$0xff] %v183
  %271 = vst [vmem:[%s4 + $0x28] sm:$0xff] %v186
  %272 = vst [vmem:[%s4 + $0x30] sm:$0xff] %v189
  %273 = vst [vmem:[%s4 + $0x38] sm:$0xff] %v192
  %274 = vst [vmem:[%s4 + $0x40] sm:$0xff] %v195
  %275 = vst [vmem:[%s4 + $0x48] sm:$0xff] %v198
  %276 = vst [vmem:[%s4 + $0x50] sm:$0xff] %v201
  %277 = vst [vmem:[%s4 + $0x58] sm:$0xff] %v204
  %278 = vst [vmem:[%s4 + $0x60] sm:$0xff] %v207
  %279 = vst [vmem:[%s4 + $0x68] sm:$0xff] %v210
  %280 = vst [vmem:[%s4 + $0x70] sm:$0xff] %v213
  %281 = vst [vmem:[%s4 + $0x78] sm:$0xff] %v216
  %282 = vst [vmem:[%s4 + $0x80] sm:$0xff] %v219
  %283 = vst [vmem:[%s4 + $0x88] sm:$0xff] %v222
  %284 = vst [vmem:[%s4 + $0x90] sm:$0xff] %v225
  %285 = vst [vmem:[%s4 + $0x98] sm:$0xff] %v228
  %286 = vst [vmem:[%s4 + $0xa0] sm:$0xff] %v231
  %287 = vst [vmem:[%s4 + $0xa8] sm:$0xff] %v234
  %288 = vst [vmem:[%s4 + $0xb0] sm:$0xff] %v237
  %289 = vst [vmem:[%s4 + $0xb8] sm:$0xff] %v240
  %290 = vst [vmem:[%s4 + $0xc0] sm:$0xff] %v243
  %291 = vst [vmem:[%s4 + $0xc8] sm:$0xff] %v246
  %292 = vst [vmem:[%s4 + $0xd0] sm:$0xff] %v249
  %293 = vst [vmem:[%s4 + $0xd8] sm:$0xff] %v252
  %294 = vst [vmem:[%s4 + $0xe0] sm:$0xff] %v255
  %295 = vst [vmem:[%s4 + $0xe8] sm:$0xff] %v258
  %296 = vst [vmem:[%s4 + $0xf0] sm:$0xff] %v261
  %297 = vst [vmem:[%s4 + $0xf8] sm:$0xff] %v264
  %v298 = vpack.c.bf16 %v174, %v171
  %v299 = vpack.c.bf16 %v180, %v177
  %v300 = vpack.c.bf16 %v186, %v183
  %v301 = vpack.c.bf16 %v192, %v189
  %v302 = vpack.c.bf16 %v198, %v195
  %v303 = vpack.c.bf16 %v204, %v201
  %v304 = vpack.c.bf16 %v210, %v207
  %v305 = vpack.c.bf16 %v216, %v213
  %v306 = vpack.c.bf16 %v222, %v219
  %v307 = vpack.c.bf16 %v228, %v225
  %v308 = vpack.c.bf16 %v234, %v231
  %v309 = vpack.c.bf16 %v240, %v237
  %v310 = vpack.c.bf16 %v246, %v243
  %v311 = vpack.c.bf16 %v252, %v249
  %v312 = vpack.c.bf16 %v258, %v255
  %v313 = vpack.c.bf16 %v264, %v261
  %v314 = vld [vmem:[%s3] sm:$0xf]
  %v315 = vld [vmem:[%s3 + $0x4] sm:$0xf]
  %v316 = vld [vmem:[%s3 + $0x8] sm:$0xf]
  %v317 = vld [vmem:[%s3 + $0xc] sm:$0xf]
  %v318 = vld [vmem:[%s3 + $0x10] sm:$0xf]
  %v319 = vld [vmem:[%s3 + $0x14] sm:$0xf]
  %v320 = vld [vmem:[%s3 + $0x18] sm:$0xf]
  %v321 = vld [vmem:[%s3 + $0x1c] sm:$0xf]
  %v322 = vld [vmem:[%s3 + $0x20] sm:$0xf]
  %v323 = vld [vmem:[%s3 + $0x24] sm:$0xf]
  %v324 = vld [vmem:[%s3 + $0x28] sm:$0xf]
  %v325 = vld [vmem:[%s3 + $0x2c] sm:$0xf]
  %v326 = vld [vmem:[%s3 + $0x30] sm:$0xf]
  %v327 = vld [vmem:[%s3 + $0x34] sm:$0xf]
  %v328 = vld [vmem:[%s3 + $0x38] sm:$0xf]
  %v329 = vld [vmem:[%s3 + $0x3c] sm:$0xf]
  %v346 = vunpack.c.l.b16 %v314
  %v347 = vunpack.c.l.b16 %v315
  %v348 = vunpack.c.l.b16 %v316
  %v349 = vunpack.c.l.b16 %v317
  %v350 = vunpack.c.l.b16 %v318
  %v351 = vunpack.c.l.b16 %v319
  %v352 = vunpack.c.l.b16 %v320
  %v353 = vunpack.c.l.b16 %v321
  %v354 = vunpack.c.l.b16 %v322
  %v355 = vunpack.c.l.b16 %v323
  %v356 = vunpack.c.l.b16 %v324
  %v357 = vunpack.c.l.b16 %v325
  %v358 = vunpack.c.l.b16 %v326
  %v359 = vunpack.c.l.b16 %v327
  %v360 = vunpack.c.l.b16 %v328
  %v361 = vunpack.c.l.b16 %v329
  %v362 = vpack.c.b16 %v347, %v346
  %v363 = vpack.c.b16 %v349, %v348
  %v364 = vpack.c.b16 %v351, %v350
  %v365 = vpack.c.b16 %v353, %v352
  %v366 = vpack.c.b16 %v355, %v354
  %v367 = vpack.c.b16 %v357, %v356
  %v368 = vpack.c.b16 %v359, %v358
  %v369 = vpack.c.b16 %v361, %v360
  %378 = vmatpush.bf16.msra.mxu0 %v369
  %379 = vmatpush.bf16.msra.mxu0 %v368
  %380 = vmatpush.bf16.msra.mxu0 %v367
  %381 = vmatpush.bf16.msra.mxu0 %v366
  %382 = vmatpush.bf16.msra.mxu0 %v365
  %383 = vmatpush.bf16.msra.mxu0 %v364
  %384 = vmatpush.bf16.msra.mxu0 %v363
  %385 = vmatpush.bf16.msra.mxu0 %v362
  %386 = vmatmul.bf16.gmra.mxu0 %v298
  %v387 = vpop.f32.mrf.mxu0
  %v388 = vadd.f32 0.0, %v387
  %v389 = vpop.f32.mrf.mxu0
  %v390 = vadd.f32 0.0, %v389
  %391 = vmatmul.bf16.gmra.mxu0 %v299
  %v392 = vpop.f32.mrf.mxu0
  %v393 = vadd.f32 0.0, %v392
  %v394 = vpop.f32.mrf.mxu0
  %v395 = vadd.f32 0.0, %v394
  %396 = vmatmul.bf16.gmra.mxu0 %v300
  %v397 = vpop.f32.mrf.mxu0
  %v398 = vadd.f32 0.0, %v397
  %v399 = vpop.f32.mrf.mxu0
  %v400 = vadd.f32 0.0, %v399
  %401 = vmatmul.bf16.gmra.mxu0 %v301
  %v402 = vpop.f32.mrf.mxu0
  %v403 = vadd.f32 0.0, %v402
  %v404 = vpop.f32.mrf.mxu0
  %v405 = vadd.f32 0.0, %v404
  %406 = vmatmul.bf16.gmra.mxu0 %v302
  %v407 = vpop.f32.mrf.mxu0
  %v408 = vadd.f32 0.0, %v407
  %v409 = vpop.f32.mrf.mxu0
  %v410 = vadd.f32 0.0, %v409
  %411 = vmatmul.bf16.gmra.mxu0 %v303
  %v412 = vpop.f32.mrf.mxu0
  %v413 = vadd.f32 0.0, %v412
  %v414 = vpop.f32.mrf.mxu0
  %v415 = vadd.f32 0.0, %v414
  %416 = vmatmul.bf16.gmra.mxu0 %v304
  %v417 = vpop.f32.mrf.mxu0
  %v418 = vadd.f32 0.0, %v417
  %v419 = vpop.f32.mrf.mxu0
  %v420 = vadd.f32 0.0, %v419
  %421 = vmatmul.bf16.gmra.mxu0 %v305
  %v422 = vpop.f32.mrf.mxu0
  %v423 = vadd.f32 0.0, %v422
  %v424 = vpop.f32.mrf.mxu0
  %v425 = vadd.f32 0.0, %v424
  %426 = vmatmul.bf16.gmra.mxu0 %v306
  %v427 = vpop.f32.mrf.mxu0
  %v428 = vadd.f32 0.0, %v427
  %v429 = vpop.f32.mrf.mxu0
  %v430 = vadd.f32 0.0, %v429
  %431 = vmatmul.bf16.gmra.mxu0 %v307
  %v432 = vpop.f32.mrf.mxu0
  %v433 = vadd.f32 0.0, %v432
  %v434 = vpop.f32.mrf.mxu0
  %v435 = vadd.f32 0.0, %v434
  %436 = vmatmul.bf16.gmra.mxu0 %v308
  %v437 = vpop.f32.mrf.mxu0
  %v438 = vadd.f32 0.0, %v437
  %v439 = vpop.f32.mrf.mxu0
  %v440 = vadd.f32 0.0, %v439
  %441 = vmatmul.bf16.gmra.mxu0 %v309
  %v442 = vpop.f32.mrf.mxu0
  %v443 = vadd.f32 0.0, %v442
  %v444 = vpop.f32.mrf.mxu0
  %v445 = vadd.f32 0.0, %v444
  %446 = vmatmul.bf16.gmra.mxu0 %v310
  %v447 = vpop.f32.mrf.mxu0
  %v448 = vadd.f32 0.0, %v447
  %v449 = vpop.f32.mrf.mxu0
  %v450 = vadd.f32 0.0, %v449
  %451 = vmatmul.bf16.gmra.mxu0 %v311
  %v452 = vpop.f32.mrf.mxu0
  %v453 = vadd.f32 0.0, %v452
  %v454 = vpop.f32.mrf.mxu0
  %v455 = vadd.f32 0.0, %v454
  %456 = vmatmul.bf16.gmra.mxu0 %v312
  %v457 = vpop.f32.mrf.mxu0
  %v458 = vadd.f32 0.0, %v457
  %v459 = vpop.f32.mrf.mxu0
  %v460 = vadd.f32 0.0, %v459
  %461 = vmatmul.bf16.gmra.mxu0 %v313
  %v462 = vpop.f32.mrf.mxu0
  %v463 = vadd.f32 0.0, %v462
  %v464 = vpop.f32.mrf.mxu0
  %v465 = vadd.f32 0.0, %v464
  %466 = vdwg.mxu0
  %v467 = vpack.c.bf16 %v388, %v388
  %v468 = vpack.c.bf16 %v390, %v390
  %v469 = vpack.c.bf16 %v393, %v393
  %v470 = vpack.c.bf16 %v395, %v395
  %v471 = vpack.c.bf16 %v398, %v398
  %v472 = vpack.c.bf16 %v400, %v400
  %v473 = vpack.c.bf16 %v403, %v403
  %v474 = vpack.c.bf16 %v405, %v405
  %v475 = vpack.c.bf16 %v408, %v408
  %v476 = vpack.c.bf16 %v410, %v410
  %v477 = vpack.c.bf16 %v413, %v413
  %v478 = vpack.c.bf16 %v415, %v415
  %v479 = vpack.c.bf16 %v418, %v418
  %v480 = vpack.c.bf16 %v420, %v420
  %v481 = vpack.c.bf16 %v423, %v423
  %v482 = vpack.c.bf16 %v425, %v425
  %v483 = vpack.c.bf16 %v428, %v428
  %v484 = vpack.c.bf16 %v430, %v430
  %v485 = vpack.c.bf16 %v433, %v433
  %v486 = vpack.c.bf16 %v435, %v435
  %v487 = vpack.c.bf16 %v438, %v438
  %v488 = vpack.c.bf16 %v440, %v440
  %v489 = vpack.c.bf16 %v443, %v443
  %v490 = vpack.c.bf16 %v445, %v445
  %v491 = vpack.c.bf16 %v448, %v448
  %v492 = vpack.c.bf16 %v450, %v450
  %v493 = vpack.c.bf16 %v453, %v453
  %v494 = vpack.c.bf16 %v455, %v455
  %v495 = vpack.c.bf16 %v458, %v458
  %v496 = vpack.c.bf16 %v460, %v460
  %v497 = vpack.c.bf16 %v463, %v463
  %v498 = vpack.c.bf16 %v465, %v465
  %499 = vst [vmem:[%s5] sm:$0xf] %v467
  %500 = vst [vmem:[%s5 + $0x4] sm:$0xf] %v468
  %501 = vst [vmem:[%s5 + $0x8] sm:$0xf] %v469
  %502 = vst [vmem:[%s5 + $0xc] sm:$0xf] %v470
  %503 = vst [vmem:[%s5 + $0x10] sm:$0xf] %v471
  %504 = vst [vmem:[%s5 + $0x14] sm:$0xf] %v472
  %505 = vst [vmem:[%s5 + $0x18] sm:$0xf] %v473
  %506 = vst [vmem:[%s5 + $0x1c] sm:$0xf] %v474
  %507 = vst [vmem:[%s5 + $0x20] sm:$0xf] %v475
  %508 = vst [vmem:[%s5 + $0x24] sm:$0xf] %v476
  %509 = vst [vmem:[%s5 + $0x28] sm:$0xf] %v477
  %510 = vst [vmem:[%s5 + $0x2c] sm:$0xf] %v478
  %511 = vst [vmem:[%s5 + $0x30] sm:$0xf] %v479
  %512 = vst [vmem:[%s5 + $0x34] sm:$0xf] %v480
  %513 = vst [vmem:[%s5 + $0x38] sm:$0xf] %v481
  %514 = vst [vmem:[%s5 + $0x3c] sm:$0xf] %v482
  %515 = vst [vmem:[%s5 + $0x40] sm:$0xf] %v483
  %516 = vst [vmem:[%s5 + $0x44] sm:$0xf] %v484
  %517 = vst [vmem:[%s5 + $0x48] sm:$0xf] %v485
  %518 = vst [vmem:[%s5 + $0x4c] sm:$0xf] %v486
  %519 = vst [vmem:[%s5 + $0x50] sm:$0xf] %v487
  %520 = vst [vmem:[%s5 + $0x54] sm:$0xf] %v488
  %521 = vst [vmem:[%s5 + $0x58] sm:$0xf] %v489
  %522 = vst [vmem:[%s5 + $0x5c] sm:$0xf] %v490
  %523 = vst [vmem:[%s5 + $0x60] sm:$0xf] %v491
  %524 = vst [vmem:[%s5 + $0x64] sm:$0xf] %v492
  %525 = vst [vmem:[%s5 + $0x68] sm:$0xf] %v493
  %526 = vst [vmem:[%s5 + $0x6c] sm:$0xf] %v494
  %527 = vst [vmem:[%s5 + $0x70] sm:$0xf] %v495
  %528 = vst [vmem:[%s5 + $0x74] sm:$0xf] %v496
  %529 = vst [vmem:[%s5 + $0x78] sm:$0xf] %v497
  %530 = vst [vmem:[%s5 + $0x7c] sm:$0xf] %v498
  // Predicated region
  $region18: #{gcn_net_forward.9} parent=0 // pred_check
    _
  $region19: #{gcn_net_forward.9} parent=0 // pred_check_branch
    %532 = sbr.rel (0) target = $region21
  $region20: #{gcn_net_forward.9} parent=0 // pred_region
    _
  $region21: #{gcn_net_forward.9} parent=0 // pred_fallthru
    _
  // Predicated region
  $region22: #{gcn_net_forward.9} parent=0 // pred_check
    _
  $region23: #{gcn_net_forward.9} parent=0 // pred_check_branch
    %534 = sbr.rel (0) target = $region25
  $region24: #{gcn_net_forward.9} parent=0 // pred_region
    _
  $region25: #{gcn_net_forward.9} parent=0 // pred_fallthru
    _
  // Predicated region
  $region26: #{gcn_net_forward.9} parent=0 // pred_check
    _
  $region27: #{gcn_net_forward.9} parent=0 // pred_check_branch
    %536 = sbr.rel (0) target = $region29
  $region28: #{gcn_net_forward.9} parent=0 // pred_region
    _
  $region29: #{gcn_net_forward.9} parent=0 // pred_fallthru
    _
  // Predicated region
  $region30: #{gcn_net_forward.9} parent=0 // pred_check
    _
  $region31: #{gcn_net_forward.9} parent=0 // pred_check_branch
    %538 = sbr.rel (0) target = $region33
  $region32: #{gcn_net_forward.9} parent=0 // pred_region
    _
  $region33: #{gcn_net_forward.9} parent=0 // pred_fallthru
    _

// kernel: gcn_net_forward.10
$region0: #{gcn_net_forward.10}
  #allocation0 [shape = 'u32[]', space=smem, size = 0x4, offset = 0x4, fixed_abs, tag = 'smem constant byte address 0x4 - core index']
  #allocation1 [shape = 'u32[72,128]{1,0:T(1,128)}', space=vmem, size = 0x9000, scoped, tag = 'internal scratch']
  #allocation2 [shape = 'f32[256,128]{1,0:T(8,128)}', space=vmem, size = 0x20000, scoped, tag = 'scratch operand']
  %s0 = inlined_call_operand.vmem [shape: bf16[256,128], index: 0, kind: input, shape index: {}]
  %s1 = inlined_call_operand.vmem [shape: s8[256,256], index: 1, kind: input, shape index: {}]
  %s2 = inlined_call_operand.vmem [shape: f32[256,128], index: 2, kind: input, shape index: {}]
  %s3 = inlined_call_operand.vmem [shape: f32[1,128], index: 3, kind: input, shape index: {}]
  %s4 = inlined_call_operand.vmem [shape: bf16[128,128], index: 4, kind: input, shape index: {}]
  %s5 = inlined_call_operand.vmem [shape: f32[256,128], index: 5, kind: output, shape index: {0}]
  %s6 = inlined_call_operand.vmem [shape: bf16[256,128], index: 6, kind: output, shape index: {1}]
  %7 = xla_tuple %s5, %s6
  %s8 = sld [smem:[#allocation0]]
  $region46: #{gcn_net_forward.10} parent=0
    _
  %s10 = ssub.s32 1, %s8
  %s11 = scalar_select 0, %s10, %s8
  // Predicated region
  $region2: #{gcn_net_forward.10} parent=0 // pred_check
    _
  $region3: #{gcn_net_forward.10} parent=0 // pred_check_branch
    %13 = sbr.rel (0) target = $region5
  $region4: #{gcn_net_forward.10} parent=0 // pred_region
    _
  $region5: #{gcn_net_forward.10} parent=0 // pred_fallthru
    _
  // Predicated region
  $region6: #{gcn_net_forward.10} parent=0 // pred_check
    _
  $region7: #{gcn_net_forward.10} parent=0 // pred_check_branch
    %15 = sbr.rel (0) target = $region9
  $region8: #{gcn_net_forward.10} parent=0 // pred_region
    _
  $region9: #{gcn_net_forward.10} parent=0 // pred_fallthru
    _
  // Predicated region
  $region10: #{gcn_net_forward.10} parent=0 // pred_check
    _
  $region11: #{gcn_net_forward.10} parent=0 // pred_check_branch
    %17 = sbr.rel (0) target = $region13
  $region12: #{gcn_net_forward.10} parent=0 // pred_region
    _
  $region13: #{gcn_net_forward.10} parent=0 // pred_fallthru
    _
  // Predicated region
  $region14: #{gcn_net_forward.10} parent=0 // pred_check
    _
  $region15: #{gcn_net_forward.10} parent=0 // pred_check_branch
    %19 = sbr.rel (0) target = $region17
  $region16: #{gcn_net_forward.10} parent=0 // pred_region
    _
  $region17: #{gcn_net_forward.10} parent=0 // pred_fallthru
    _
  // Predicated region
  $region18: #{gcn_net_forward.10} parent=0 // pred_check
    _
  $region19: #{gcn_net_forward.10} parent=0 // pred_check_branch
    %21 = sbr.rel (0) target = $region21
  $region20: #{gcn_net_forward.10} parent=0 // pred_region
    _
  $region21: #{gcn_net_forward.10} parent=0 // pred_fallthru
    _
  %p22 = scmp.eq.s32.totalorder 0, 0
  // Predicated region
  $region22: #{gcn_net_forward.10} parent=0 // pred_check
    %p23 = pneg %p22
  $region23: #{gcn_net_forward.10} parent=0 // pred_check_branch
    %25 = sbr.rel (%p23) target = $region25
  $region24: #{gcn_net_forward.10} parent=0 // pred_region
    %26 = vst [vmem:[#allocation2] sm:$0xff] 0.0
    %27 = vst [vmem:[#allocation2 + $0x8] sm:$0xff] 0.0
    %28 = vst [vmem:[#allocation2 + $0x10] sm:$0xff] 0.0
    %29 = vst [vmem:[#allocation2 + $0x18] sm:$0xff] 0.0
    %30 = vst [vmem:[#allocation2 + $0x20] sm:$0xff] 0.0
    %31 = vst [vmem:[#allocation2 + $0x28] sm:$0xff] 0.0
    %32 = vst [vmem:[#allocation2 + $0x30] sm:$0xff] 0.0
    %33 = vst [vmem:[#allocation2 + $0x38] sm:$0xff] 0.0
    %34 = vst [vmem:[#allocation2 + $0x40] sm:$0xff] 0.0
    %35 = vst [vmem:[#allocation2 + $0x48] sm:$0xff] 0.0
    %36 = vst [vmem:[#allocation2 + $0x50] sm:$0xff] 0.0
    %37 = vst [vmem:[#allocation2 + $0x58] sm:$0xff] 0.0
    %38 = vst [vmem:[#allocation2 + $0x60] sm:$0xff] 0.0
    %39 = vst [vmem:[#allocation2 + $0x68] sm:$0xff] 0.0
    %40 = vst [vmem:[#allocation2 + $0x70] sm:$0xff] 0.0
    %41 = vst [vmem:[#allocation2 + $0x78] sm:$0xff] 0.0
    %42 = vst [vmem:[#allocation2 + $0x80] sm:$0xff] 0.0
    %43 = vst [vmem:[#allocation2 + $0x88] sm:$0xff] 0.0
    %44 = vst [vmem:[#allocation2 + $0x90] sm:$0xff] 0.0
    %45 = vst [vmem:[#allocation2 + $0x98] sm:$0xff] 0.0
    %46 = vst [vmem:[#allocation2 + $0xa0] sm:$0xff] 0.0
    %47 = vst [vmem:[#allocation2 + $0xa8] sm:$0xff] 0.0
    %48 = vst [vmem:[#allocation2 + $0xb0] sm:$0xff] 0.0
    %49 = vst [vmem:[#allocation2 + $0xb8] sm:$0xff] 0.0
    %50 = vst [vmem:[#allocation2 + $0xc0] sm:$0xff] 0.0
    %51 = vst [vmem:[#allocation2 + $0xc8] sm:$0xff] 0.0
    %52 = vst [vmem:[#allocation2 + $0xd0] sm:$0xff] 0.0
    %53 = vst [vmem:[#allocation2 + $0xd8] sm:$0xff] 0.0
    %54 = vst [vmem:[#allocation2 + $0xe0] sm:$0xff] 0.0
    %55 = vst [vmem:[#allocation2 + $0xe8] sm:$0xff] 0.0
    %56 = vst [vmem:[#allocation2 + $0xf0] sm:$0xff] 0.0
    %57 = vst [vmem:[#allocation2 + $0xf8] sm:$0xff] 0.0
  $region25: #{gcn_net_forward.10} parent=0 // pred_fallthru
    _
  %v58 = vld [vmem:[%s1] sm:$0xff]
  %v59 = vld [vmem:[%s1 + $0x8] sm:$0xff]
  %v60 = vld [vmem:[%s1 + $0x10] sm:$0xff]
  %v61 = vld [vmem:[%s1 + $0x18] sm:$0xff]
  %v62 = vld [vmem:[%s1 + $0x20] sm:$0xff]
  %v63 = vld [vmem:[%s1 + $0x28] sm:$0xff]
  %v64 = vld [vmem:[%s1 + $0x30] sm:$0xff]
  %v65 = vld [vmem:[%s1 + $0x38] sm:$0xff]
  %v66 = vld [vmem:[%s1 + $0x40] sm:$0xff]
  %v67 = vld [vmem:[%s1 + $0x48] sm:$0xff]
  %v68 = vld [vmem:[%s1 + $0x50] sm:$0xff]
  %v69 = vld [vmem:[%s1 + $0x58] sm:$0xff]
  %v70 = vld [vmem:[%s1 + $0x60] sm:$0xff]
  %v71 = vld [vmem:[%s1 + $0x68] sm:$0xff]
  %v72 = vld [vmem:[%s1 + $0x70] sm:$0xff]
  %v73 = vld [vmem:[%s1 + $0x78] sm:$0xff]
  %v74 = vunpack.c.0.s8 %v58
  %v75 = vunpack.c.0.s8 %v59
  %v76 = vunpack.c.1.s8 %v58
  %v77 = vunpack.c.1.s8 %v59
  %v78 = vunpack.c.2.s8 %v58
  %v79 = vunpack.c.2.s8 %v59
  %v80 = vunpack.c.3.s8 %v58
  %v81 = vunpack.c.3.s8 %v59
  %v82 = vunpack.c.0.s8 %v60
  %v83 = vunpack.c.0.s8 %v61
  %v84 = vunpack.c.1.s8 %v60
  %v85 = vunpack.c.1.s8 %v61
  %v86 = vunpack.c.2.s8 %v60
  %v87 = vunpack.c.2.s8 %v61
  %v88 = vunpack.c.3.s8 %v60
  %v89 = vunpack.c.3.s8 %v61
  %v90 = vunpack.c.0.s8 %v62
  %v91 = vunpack.c.0.s8 %v63
  %v92 = vunpack.c.1.s8 %v62
  %v93 = vunpack.c.1.s8 %v63
  %v94 = vunpack.c.2.s8 %v62
  %v95 = vunpack.c.2.s8 %v63
  %v96 = vunpack.c.3.s8 %v62
  %v97 = vunpack.c.3.s8 %v63
  %v98 = vunpack.c.0.s8 %v64
  %v99 = vunpack.c.0.s8 %v65
  %v100 = vunpack.c.1.s8 %v64
  %v101 = vunpack.c.1.s8 %v65
  %v102 = vunpack.c.2.s8 %v64
  %v103 = vunpack.c.2.s8 %v65
  %v104 = vunpack.c.3.s8 %v64
  %v105 = vunpack.c.3.s8 %v65
  %v106 = vunpack.c.0.s8 %v66
  %v107 = vunpack.c.0.s8 %v67
  %v108 = vunpack.c.1.s8 %v66
  %v109 = vunpack.c.1.s8 %v67
  %v110 = vunpack.c.2.s8 %v66
  %v111 = vunpack.c.2.s8 %v67
  %v112 = vunpack.c.3.s8 %v66
  %v113 = vunpack.c.3.s8 %v67
  %v114 = vunpack.c.0.s8 %v68
  %v115 = vunpack.c.0.s8 %v69
  %v116 = vunpack.c.1.s8 %v68
  %v117 = vunpack.c.1.s8 %v69
  %v118 = vunpack.c.2.s8 %v68
  %v119 = vunpack.c.2.s8 %v69
  %v120 = vunpack.c.3.s8 %v68
  %v121 = vunpack.c.3.s8 %v69
  %v122 = vunpack.c.0.s8 %v70
  %v123 = vunpack.c.0.s8 %v71
  %v124 = vunpack.c.1.s8 %v70
  %v125 = vunpack.c.1.s8 %v71
  %v126 = vunpack.c.2.s8 %v70
  %v127 = vunpack.c.2.s8 %v71
  %v128 = vunpack.c.3.s8 %v70
  %v129 = vunpack.c.3.s8 %v71
  %v130 = vunpack.c.0.s8 %v72
  %v131 = vunpack.c.0.s8 %v73
  %v132 = vunpack.c.1.s8 %v72
  %v133 = vunpack.c.1.s8 %v73
  %v134 = vunpack.c.2.s8 %v72
  %v135 = vunpack.c.2.s8 %v73
  %v136 = vunpack.c.3.s8 %v72
  %v137 = vunpack.c.3.s8 %v73
  %v138 = vcvt.s32.f32 %v74
  %v139 = vcvt.s32.f32 %v75
  %v140 = vcvt.s32.f32 %v76
  %v141 = vcvt.s32.f32 %v77
  %v142 = vcvt.s32.f32 %v78
  %v143 = vcvt.s32.f32 %v79
  %v144 = vcvt.s32.f32 %v80
  %v145 = vcvt.s32.f32 %v81
  %v146 = vcvt.s32.f32 %v82
  %v147 = vcvt.s32.f32 %v83
  %v148 = vcvt.s32.f32 %v84
  %v149 = vcvt.s32.f32 %v85
  %v150 = vcvt.s32.f32 %v86
  %v151 = vcvt.s32.f32 %v87
  %v152 = vcvt.s32.f32 %v88
  %v153 = vcvt.s32.f32 %v89
  %v154 = vcvt.s32.f32 %v90
  %v155 = vcvt.s32.f32 %v91
  %v156 = vcvt.s32.f32 %v92
  %v157 = vcvt.s32.f32 %v93
  %v158 = vcvt.s32.f32 %v94
  %v159 = vcvt.s32.f32 %v95
  %v160 = vcvt.s32.f32 %v96
  %v161 = vcvt.s32.f32 %v97
  %v162 = vcvt.s32.f32 %v98
  %v163 = vcvt.s32.f32 %v99
  %v164 = vcvt.s32.f32 %v100
  %v165 = vcvt.s32.f32 %v101
  %v166 = vcvt.s32.f32 %v102
  %v167 = vcvt.s32.f32 %v103
  %v168 = vcvt.s32.f32 %v104
  %v169 = vcvt.s32.f32 %v105
  %v170 = vcvt.s32.f32 %v106
  %v171 = vcvt.s32.f32 %v107
  %v172 = vcvt.s32.f32 %v108
  %v173 = vcvt.s32.f32 %v109
  %v174 = vcvt.s32.f32 %v110
  %v175 = vcvt.s32.f32 %v111
  %v176 = vcvt.s32.f32 %v112
  %v177 = vcvt.s32.f32 %v113
  %v178 = vcvt.s32.f32 %v114
  %v179 = vcvt.s32.f32 %v115
  %v180 = vcvt.s32.f32 %v116
  %v181 = vcvt.s32.f32 %v117
  %v182 = vcvt.s32.f32 %v118
  %v183 = vcvt.s32.f32 %v119
  %v184 = vcvt.s32.f32 %v120
  %v185 = vcvt.s32.f32 %v121
  %v186 = vcvt.s32.f32 %v122
  %v187 = vcvt.s32.f32 %v123
  %v188 = vcvt.s32.f32 %v124
  %v189 = vcvt.s32.f32 %v125
  %v190 = vcvt.s32.f32 %v126
  %v191 = vcvt.s32.f32 %v127
  %v192 = vcvt.s32.f32 %v128
  %v193 = vcvt.s32.f32 %v129
  %v194 = vcvt.s32.f32 %v130
  %v195 = vcvt.s32.f32 %v131
  %v196 = vcvt.s32.f32 %v132
  %v197 = vcvt.s32.f32 %v133
  %v198 = vcvt.s32.f32 %v134
  %v199 = vcvt.s32.f32 %v135
  %v200 = vcvt.s32.f32 %v136
  %v201 = vcvt.s32.f32 %v137
  %v202 = vpack.c.bf16 %v140, %v138
  %v203 = vpack.c.bf16 %v141, %v139
  %v204 = vpack.c.bf16 %v144, %v142
  %v205 = vpack.c.bf16 %v145, %v143
  %v206 = vpack.c.bf16 %v148, %v146
  %v207 = vpack.c.bf16 %v149, %v147
  %v208 = vpack.c.bf16 %v152, %v150
  %v209 = vpack.c.bf16 %v153, %v151
  %v210 = vpack.c.bf16 %v156, %v154
  %v211 = vpack.c.bf16 %v157, %v155
  %v212 = vpack.c.bf16 %v160, %v158
  %v213 = vpack.c.bf16 %v161, %v159
  %v214 = vpack.c.bf16 %v164, %v162
  %v215 = vpack.c.bf16 %v165, %v163
  %v216 = vpack.c.bf16 %v168, %v166
  %v217 = vpack.c.bf16 %v169, %v167
  %v218 = vpack.c.bf16 %v172, %v170
  %v219 = vpack.c.bf16 %v173, %v171
  %v220 = vpack.c.bf16 %v176, %v174
  %v221 = vpack.c.bf16 %v177, %v175
  %v222 = vpack.c.bf16 %v180, %v178
  %v223 = vpack.c.bf16 %v181, %v179
  %v224 = vpack.c.bf16 %v184, %v182
  %v225 = vpack.c.bf16 %v185, %v183
  %v226 = vpack.c.bf16 %v188, %v186
  %v227 = vpack.c.bf16 %v189, %v187
  %v228 = vpack.c.bf16 %v192, %v190
  %v229 = vpack.c.bf16 %v193, %v191
  %v230 = vpack.c.bf16 %v196, %v194
  %v231 = vpack.c.bf16 %v197, %v195
  %v232 = vpack.c.bf16 %v200, %v198
  %v233 = vpack.c.bf16 %v201, %v199
  %s234 = smul.u32 0, 256
  %s235 = sshra.s32 %s234, 3
  %s236 = sand.u32 %s234, 7
  %s237 = smul.addr %s235, 4
  %s238 = scalar_lea.vmem %s0, %s237
  %v239 = vld [vmem:[%s238] sm:$0xf]
  %v240 = vld [vmem:[%s238 + $0x4] sm:$0xf]
  %v241 = vld [vmem:[%s238 + $0x8] sm:$0xf]
  %v242 = vld [vmem:[%s238 + $0xc] sm:$0xf]
  %v243 = vld [vmem:[%s238 + $0x10] sm:$0xf]
  %v244 = vld [vmem:[%s238 + $0x14] sm:$0xf]
  %v245 = vld [vmem:[%s238 + $0x18] sm:$0xf]
  %v246 = vld [vmem:[%s238 + $0x1c] sm:$0xf]
  %v247 = vld [vmem:[%s238 + $0x20] sm:$0xf]
  %v248 = vld [vmem:[%s238 + $0x24] sm:$0xf]
  %v249 = vld [vmem:[%s238 + $0x28] sm:$0xf]
  %v250 = vld [vmem:[%s238 + $0x2c] sm:$0xf]
  %v251 = vld [vmem:[%s238 + $0x30] sm:$0xf]
  %v252 = vld [vmem:[%s238 + $0x34] sm:$0xf]
  %v253 = vld [vmem:[%s238 + $0x38] sm:$0xf]
  %v254 = vld [vmem:[%s238 + $0x3c] sm:$0xf]
  %v255 = vld [vmem:[%s238 + $0x40] sm:$0xf]
  %v256 = vld [vmem:[%s238 + $0x44] sm:$0xf]
  %v257 = vld [vmem:[%s238 + $0x48] sm:$0xf]
  %v258 = vld [vmem:[%s238 + $0x4c] sm:$0xf]
  %v259 = vld [vmem:[%s238 + $0x50] sm:$0xf]
  %v260 = vld [vmem:[%s238 + $0x54] sm:$0xf]
  %v261 = vld [vmem:[%s238 + $0x58] sm:$0xf]
  %v262 = vld [vmem:[%s238 + $0x5c] sm:$0xf]
  %v263 = vld [vmem:[%s238 + $0x60] sm:$0xf]
  %v264 = vld [vmem:[%s238 + $0x64] sm:$0xf]
  %v265 = vld [vmem:[%s238 + $0x68] sm:$0xf]
  %v266 = vld [vmem:[%s238 + $0x6c] sm:$0xf]
  %v267 = vld [vmem:[%s238 + $0x70] sm:$0xf]
  %v268 = vld [vmem:[%s238 + $0x74] sm:$0xf]
  %v269 = vld [vmem:[%s238 + $0x78] sm:$0xf]
  %v270 = vld [vmem:[%s238 + $0x7c] sm:$0xf]
  %v271 = vld [vmem:[#allocation2] sm:$0xff]
  %v272 = vld [vmem:[#allocation2 + $0x8] sm:$0xff]
  %v273 = vld [vmem:[#allocation2 + $0x10] sm:$0xff]
  %v274 = vld [vmem:[#allocation2 + $0x18] sm:$0xff]
  %v275 = vld [vmem:[#allocation2 + $0x20] sm:$0xff]
  %v276 = vld [vmem:[#allocation2 + $0x28] sm:$0xff]
  %v277 = vld [vmem:[#allocation2 + $0x30] sm:$0xff]
  %v278 = vld [vmem:[#allocation2 + $0x38] sm:$0xff]
  %v279 = vld [vmem:[#allocation2 + $0x40] sm:$0xff]
  %v280 = vld [vmem:[#allocation2 + $0x48] sm:$0xff]
  %v281 = vld [vmem:[#allocation2 + $0x50] sm:$0xff]
  %v282 = vld [vmem:[#allocation2 + $0x58] sm:$0xff]
  %v283 = vld [vmem:[#allocation2 + $0x60] sm:$0xff]
  %v284 = vld [vmem:[#allocation2 + $0x68] sm:$0xff]
  %v285 = vld [vmem:[#allocation2 + $0x70] sm:$0xff]
  %v286 = vld [vmem:[#allocation2 + $0x78] sm:$0xff]
  %v287 = vld [vmem:[#allocation2 + $0x80] sm:$0xff]
  %v288 = vld [vmem:[#allocation2 + $0x88] sm:$0xff]
  %v289 = vld [vmem:[#allocation2 + $0x90] sm:$0xff]
  %v290 = vld [vmem:[#allocation2 + $0x98] sm:$0xff]
  %v291 = vld [vmem:[#allocation2 + $0xa0] sm:$0xff]
  %v292 = vld [vmem:[#allocation2 + $0xa8] sm:$0xff]
  %v293 = vld [vmem:[#allocation2 + $0xb0] sm:$0xff]
  %v294 = vld [vmem:[#allocation2 + $0xb8] sm:$0xff]
  %v295 = vld [vmem:[#allocation2 + $0xc0] sm:$0xff]
  %v296 = vld [vmem:[#allocation2 + $0xc8] sm:$0xff]
  %v297 = vld [vmem:[#allocation2 + $0xd0] sm:$0xff]
  %v298 = vld [vmem:[#allocation2 + $0xd8] sm:$0xff]
  %v299 = vld [vmem:[#allocation2 + $0xe0] sm:$0xff]
  %v300 = vld [vmem:[#allocation2 + $0xe8] sm:$0xff]
  %v301 = vld [vmem:[#allocation2 + $0xf0] sm:$0xff]
  %v302 = vld [vmem:[#allocation2 + $0xf8] sm:$0xff]
  %v335 = vunpack.c.l.b16 %v239
  %v336 = vunpack.c.l.b16 %v240
  %v337 = vunpack.c.l.b16 %v241
  %v338 = vunpack.c.l.b16 %v242
  %v339 = vunpack.c.l.b16 %v243
  %v340 = vunpack.c.l.b16 %v244
  %v341 = vunpack.c.l.b16 %v245
  %v342 = vunpack.c.l.b16 %v246
  %v343 = vunpack.c.l.b16 %v247
  %v344 = vunpack.c.l.b16 %v248
  %v345 = vunpack.c.l.b16 %v249
  %v346 = vunpack.c.l.b16 %v250
  %v347 = vunpack.c.l.b16 %v251
  %v348 = vunpack.c.l.b16 %v252
  %v349 = vunpack.c.l.b16 %v253
  %v350 = vunpack.c.l.b16 %v254
  %v351 = vunpack.c.l.b16 %v255
  %v352 = vunpack.c.l.b16 %v256
  %v353 = vunpack.c.l.b16 %v257
  %v354 = vunpack.c.l.b16 %v258
  %v355 = vunpack.c.l.b16 %v259
  %v356 = vunpack.c.l.b16 %v260
  %v357 = vunpack.c.l.b16 %v261
  %v358 = vunpack.c.l.b16 %v262
  %v359 = vunpack.c.l.b16 %v263
  %v360 = vunpack.c.l.b16 %v264
  %v361 = vunpack.c.l.b16 %v265
  %v362 = vunpack.c.l.b16 %v266
  %v363 = vunpack.c.l.b16 %v267
  %v364 = vunpack.c.l.b16 %v268
  %v365 = vunpack.c.l.b16 %v269
  %v366 = vunpack.c.l.b16 %v270
  %v367 = vpack.c.b16 %v336, %v335
  %v368 = vpack.c.b16 %v338, %v337
  %v369 = vpack.c.b16 %v340, %v339
  %v370 = vpack.c.b16 %v342, %v341
  %v371 = vpack.c.b16 %v344, %v343
  %v372 = vpack.c.b16 %v346, %v345
  %v373 = vpack.c.b16 %v348, %v347
  %v374 = vpack.c.b16 %v350, %v349
  %v375 = vpack.c.b16 %v352, %v351
  %v376 = vpack.c.b16 %v354, %v353
  %v377 = vpack.c.b16 %v356, %v355
  %v378 = vpack.c.b16 %v358, %v357
  %v379 = vpack.c.b16 %v360, %v359
  %v380 = vpack.c.b16 %v362, %v361
  %v381 = vpack.c.b16 %v364, %v363
  %v382 = vpack.c.b16 %v366, %v365
  %399 = vmatpush.bf16.msra.mxu0 %v374
  %400 = vmatpush.bf16.msra.mxu0 %v373
  %401 = vmatpush.bf16.msra.mxu0 %v372
  %402 = vmatpush.bf16.msra.mxu0 %v371
  %403 = vmatpush.bf16.msra.mxu0 %v370
  %404 = vmatpush.bf16.msra.mxu0 %v369
  %405 = vmatpush.bf16.msra.mxu0 %v368
  %406 = vmatpush.bf16.msra.mxu0 %v367
  %407 = vmatmul.bf16.gmra.mxu0 %v202
  %v408 = vpop.f32.mrf.mxu0
  %v409 = vadd.f32 0.0, %v408
  %v410 = vpop.f32.mrf.mxu0
  %v411 = vadd.f32 0.0, %v410
  %412 = vmatmul.bf16.gmra.mxu0 %v204
  %v413 = vpop.f32.mrf.mxu0
  %v414 = vadd.f32 0.0, %v413
  %v415 = vpop.f32.mrf.mxu0
  %v416 = vadd.f32 0.0, %v415
  %417 = vmatmul.bf16.gmra.mxu0 %v206
  %v418 = vpop.f32.mrf.mxu0
  %v419 = vadd.f32 0.0, %v418
  %v420 = vpop.f32.mrf.mxu0
  %v421 = vadd.f32 0.0, %v420
  %422 = vmatmul.bf16.gmra.mxu0 %v208
  %v423 = vpop.f32.mrf.mxu0
  %v424 = vadd.f32 0.0, %v423
  %v425 = vpop.f32.mrf.mxu0
  %v426 = vadd.f32 0.0, %v425
  %427 = vmatmul.bf16.gmra.mxu0 %v210
  %v428 = vpop.f32.mrf.mxu0
  %v429 = vadd.f32 0.0, %v428
  %v430 = vpop.f32.mrf.mxu0
  %v431 = vadd.f32 0.0, %v430
  %432 = vmatmul.bf16.gmra.mxu0 %v212
  %v433 = vpop.f32.mrf.mxu0
  %v434 = vadd.f32 0.0, %v433
  %v435 = vpop.f32.mrf.mxu0
  %v436 = vadd.f32 0.0, %v435
  %437 = vmatmul.bf16.gmra.mxu0 %v214
  %v438 = vpop.f32.mrf.mxu0
  %v439 = vadd.f32 0.0, %v438
  %v440 = vpop.f32.mrf.mxu0
  %v441 = vadd.f32 0.0, %v440
  %442 = vmatmul.bf16.gmra.mxu0 %v216
  %v443 = vpop.f32.mrf.mxu0
  %v444 = vadd.f32 0.0, %v443
  %v445 = vpop.f32.mrf.mxu0
  %v446 = vadd.f32 0.0, %v445
  %447 = vmatmul.bf16.gmra.mxu0 %v218
  %v448 = vpop.f32.mrf.mxu0
  %v449 = vadd.f32 0.0, %v448
  %v450 = vpop.f32.mrf.mxu0
  %v451 = vadd.f32 0.0, %v450
  %452 = vmatmul.bf16.gmra.mxu0 %v220
  %v453 = vpop.f32.mrf.mxu0
  %v454 = vadd.f32 0.0, %v453
  %v455 = vpop.f32.mrf.mxu0
  %v456 = vadd.f32 0.0, %v455
  %457 = vmatmul.bf16.gmra.mxu0 %v222
  %v458 = vpop.f32.mrf.mxu0
  %v459 = vadd.f32 0.0, %v458
  %v460 = vpop.f32.mrf.mxu0
  %v461 = vadd.f32 0.0, %v460
  %462 = vmatmul.bf16.gmra.mxu0 %v224
  %v463 = vpop.f32.mrf.mxu0
  %v464 = vadd.f32 0.0, %v463
  %v465 = vpop.f32.mrf.mxu0
  %v466 = vadd.f32 0.0, %v465
  %467 = vmatmul.bf16.gmra.mxu0 %v226
  %v468 = vpop.f32.mrf.mxu0
  %v469 = vadd.f32 0.0, %v468
  %v470 = vpop.f32.mrf.mxu0
  %v471 = vadd.f32 0.0, %v470
  %472 = vmatmul.bf16.gmra.mxu0 %v228
  %v473 = vpop.f32.mrf.mxu0
  %v474 = vadd.f32 0.0, %v473
  %v475 = vpop.f32.mrf.mxu0
  %v476 = vadd.f32 0.0, %v475
  %477 = vmatmul.bf16.gmra.mxu0 %v230
  %v478 = vpop.f32.mrf.mxu0
  %v479 = vadd.f32 0.0, %v478
  %v480 = vpop.f32.mrf.mxu0
  %v481 = vadd.f32 0.0, %v480
  %482 = vmatmul.bf16.gmra.mxu0 %v232
  %v483 = vpop.f32.mrf.mxu0
  %v484 = vadd.f32 0.0, %v483
  %v485 = vpop.f32.mrf.mxu0
  %v486 = vadd.f32 0.0, %v485
  %487 = vdwg.mxu0
  %488 = vmatpush.bf16.msra.mxu0 %v382
  %489 = vmatpush.bf16.msra.mxu0 %v381
  %490 = vmatpush.bf16.msra.mxu0 %v380
  %491 = vmatpush.bf16.msra.mxu0 %v379
  %492 = vmatpush.bf16.msra.mxu0 %v378
  %493 = vmatpush.bf16.msra.mxu0 %v377
  %494 = vmatpush.bf16.msra.mxu0 %v376
  %495 = vmatpush.bf16.msra.mxu0 %v375
  %496 = vmatmul.bf16.gmra.mxu0 %v203
  %v497 = vpop.f32.mrf.mxu0
  %v498 = vadd.f32 %v409, %v497
  %v499 = vpop.f32.mrf.mxu0
  %v500 = vadd.f32 %v411, %v499
  %501 = vmatmul.bf16.gmra.mxu0 %v205
  %v502 = vpop.f32.mrf.mxu0
  %v503 = vadd.f32 %v414, %v502
  %v504 = vpop.f32.mrf.mxu0
  %v505 = vadd.f32 %v416, %v504
  %506 = vmatmul.bf16.gmra.mxu0 %v207
  %v507 = vpop.f32.mrf.mxu0
  %v508 = vadd.f32 %v419, %v507
  %v509 = vpop.f32.mrf.mxu0
  %v510 = vadd.f32 %v421, %v509
  %511 = vmatmul.bf16.gmra.mxu0 %v209
  %v512 = vpop.f32.mrf.mxu0
  %v513 = vadd.f32 %v424, %v512
  %v514 = vpop.f32.mrf.mxu0
  %v515 = vadd.f32 %v426, %v514
  %516 = vmatmul.bf16.gmra.mxu0 %v211
  %v517 = vpop.f32.mrf.mxu0
  %v518 = vadd.f32 %v429, %v517
  %v519 = vpop.f32.mrf.mxu0
  %v520 = vadd.f32 %v431, %v519
  %521 = vmatmul.bf16.gmra.mxu0 %v213
  %v522 = vpop.f32.mrf.mxu0
  %v523 = vadd.f32 %v434, %v522
  %v524 = vpop.f32.mrf.mxu0
  %v525 = vadd.f32 %v436, %v524
  %526 = vmatmul.bf16.gmra.mxu0 %v215
  %v527 = vpop.f32.mrf.mxu0
  %v528 = vadd.f32 %v439, %v527
  %v529 = vpop.f32.mrf.mxu0
  %v530 = vadd.f32 %v441, %v529
  %531 = vmatmul.bf16.gmra.mxu0 %v217
  %v532 = vpop.f32.mrf.mxu0
  %v533 = vadd.f32 %v444, %v532
  %v534 = vpop.f32.mrf.mxu0
  %v535 = vadd.f32 %v446, %v534
  %536 = vmatmul.bf16.gmra.mxu0 %v219
  %v537 = vpop.f32.mrf.mxu0
  %v538 = vadd.f32 %v449, %v537
  %v539 = vpop.f32.mrf.mxu0
  %v540 = vadd.f32 %v451, %v539
  %541 = vmatmul.bf16.gmra.mxu0 %v221
  %v542 = vpop.f32.mrf.mxu0
  %v543 = vadd.f32 %v454, %v542
  %v544 = vpop.f32.mrf.mxu0
  %v545 = vadd.f32 %v456, %v544
  %546 = vmatmul.bf16.gmra.mxu0 %v223
  %v547 = vpop.f32.mrf.mxu0
  %v548 = vadd.f32 %v459, %v547
  %v549 = vpop.f32.mrf.mxu0
  %v550 = vadd.f32 %v461, %v549
  %551 = vmatmul.bf16.gmra.mxu0 %v225
  %v552 = vpop.f32.mrf.mxu0
  %v553 = vadd.f32 %v464, %v552
  %v554 = vpop.f32.mrf.mxu0
  %v555 = vadd.f32 %v466, %v554
  %556 = vmatmul.bf16.gmra.mxu0 %v227
  %v557 = vpop.f32.mrf.mxu0
  %v558 = vadd.f32 %v469, %v557
  %v559 = vpop.f32.mrf.mxu0
  %v560 = vadd.f32 %v471, %v559
  %561 = vmatmul.bf16.gmra.mxu0 %v229
  %v562 = vpop.f32.mrf.mxu0
  %v563 = vadd.f32 %v474, %v562
  %v564 = vpop.f32.mrf.mxu0
  %v565 = vadd.f32 %v476, %v564
  %566 = vmatmul.bf16.gmra.mxu0 %v231
  %v567 = vpop.f32.mrf.mxu0
  %v568 = vadd.f32 %v479, %v567
  %v569 = vpop.f32.mrf.mxu0
  %v570 = vadd.f32 %v481, %v569
  %571 = vmatmul.bf16.gmra.mxu0 %v233
  %v572 = vpop.f32.mrf.mxu0
  %v573 = vadd.f32 %v484, %v572
  %v574 = vpop.f32.mrf.mxu0
  %v575 = vadd.f32 %v486, %v574
  %576 = vdwg.mxu0
  %v577 = vadd.f32 %v271, %v498
  %v578 = vadd.f32 %v272, %v500
  %v579 = vadd.f32 %v273, %v503
  %v580 = vadd.f32 %v274, %v505
  %v581 = vadd.f32 %v275, %v508
  %v582 = vadd.f32 %v276, %v510
  %v583 = vadd.f32 %v277, %v513
  %v584 = vadd.f32 %v278, %v515
  %v585 = vadd.f32 %v279, %v518
  %v586 = vadd.f32 %v280, %v520
  %v587 = vadd.f32 %v281, %v523
  %v588 = vadd.f32 %v282, %v525
  %v589 = vadd.f32 %v283, %v528
  %v590 = vadd.f32 %v284, %v530
  %v591 = vadd.f32 %v285, %v533
  %v592 = vadd.f32 %v286, %v535
  %v593 = vadd.f32 %v287, %v538
  %v594 = vadd.f32 %v288, %v540
  %v595 = vadd.f32 %v289, %v543
  %v596 = vadd.f32 %v290, %v545
  %v597 = vadd.f32 %v291, %v548
  %v598 = vadd.f32 %v292, %v550
  %v599 = vadd.f32 %v293, %v553
  %v600 = vadd.f32 %v294, %v555
  %v601 = vadd.f32 %v295, %v558
  %v602 = vadd.f32 %v296, %v560
  %v603 = vadd.f32 %v297, %v563
  %v604 = vadd.f32 %v298, %v565
  %v605 = vadd.f32 %v299, %v568
  %v606 = vadd.f32 %v300, %v570
  %v607 = vadd.f32 %v301, %v573
  %v608 = vadd.f32 %v302, %v575
  %609 = vst [vmem:[#allocation2] sm:$0xff] %v577
  %610 = vst [vmem:[#allocation2 + $0x8] sm:$0xff] %v578
  %611 = vst [vmem:[#allocation2 + $0x10] sm:$0xff] %v579
  %612 = vst [vmem:[#allocation2 + $0x18] sm:$0xff] %v580
  %613 = vst [vmem:[#allocation2 + $0x20] sm:$0xff] %v581
  %614 = vst [vmem:[#allocation2 + $0x28] sm:$0xff] %v582
  %615 = vst [vmem:[#allocation2 + $0x30] sm:$0xff] %v583
  %616 = vst [vmem:[#allocation2 + $0x38] sm:$0xff] %v584
  %617 = vst [vmem:[#allocation2 + $0x40] sm:$0xff] %v585
  %618 = vst [vmem:[#allocation2 + $0x48] sm:$0xff] %v586
  %619 = vst [vmem:[#allocation2 + $0x50] sm:$0xff] %v587
  %620 = vst [vmem:[#allocation2 + $0x58] sm:$0xff] %v588
  %621 = vst [vmem:[#allocation2 + $0x60] sm:$0xff] %v589
  %622 = vst [vmem:[#allocation2 + $0x68] sm:$0xff] %v590
  %623 = vst [vmem:[#allocation2 + $0x70] sm:$0xff] %v591
  %624 = vst [vmem:[#allocation2 + $0x78] sm:$0xff] %v592
  %625 = vst [vmem:[#allocation2 + $0x80] sm:$0xff] %v593
  %626 = vst [vmem:[#allocation2 + $0x88] sm:$0xff] %v594
  %627 = vst [vmem:[#allocation2 + $0x90] sm:$0xff] %v595
  %628 = vst [vmem:[#allocation2 + $0x98] sm:$0xff] %v596
  %629 = vst [vmem:[#allocation2 + $0xa0] sm:$0xff] %v597
  %630 = vst [vmem:[#allocation2 + $0xa8] sm:$0xff] %v598
  %631 = vst [vmem:[#allocation2 + $0xb0] sm:$0xff] %v599
  %632 = vst [vmem:[#allocation2 + $0xb8] sm:$0xff] %v600
  %633 = vst [vmem:[#allocation2 + $0xc0] sm:$0xff] %v601
  %634 = vst [vmem:[#allocation2 + $0xc8] sm:$0xff] %v602
  %635 = vst [vmem:[#allocation2 + $0xd0] sm:$0xff] %v603
  %636 = vst [vmem:[#allocation2 + $0xd8] sm:$0xff] %v604
  %637 = vst [vmem:[#allocation2 + $0xe0] sm:$0xff] %v605
  %638 = vst [vmem:[#allocation2 + $0xe8] sm:$0xff] %v606
  %639 = vst [vmem:[#allocation2 + $0xf0] sm:$0xff] %v607
  %640 = vst [vmem:[#allocation2 + $0xf8] sm:$0xff] %v608
  // Predicated region
  $region26: #{gcn_net_forward.10} parent=0 // pred_check
    %p641 = pneg %p22
  $region27: #{gcn_net_forward.10} parent=0 // pred_check_branch
    %643 = sbr.rel (%p641) target = $region29
  $region28: #{gcn_net_forward.10} parent=0 // pred_region
    %v644 = vld [vmem:[#allocation2] sm:$0xff]
    %v645 = vld [vmem:[#allocation2 + $0x8] sm:$0xff]
    %v646 = vld [vmem:[#allocation2 + $0x10] sm:$0xff]
    %v647 = vld [vmem:[#allocation2 + $0x18] sm:$0xff]
    %v648 = vld [vmem:[#allocation2 + $0x20] sm:$0xff]
    %v649 = vld [vmem:[#allocation2 + $0x28] sm:$0xff]
    %v650 = vld [vmem:[#allocation2 + $0x30] sm:$0xff]
    %v651 = vld [vmem:[#allocation2 + $0x38] sm:$0xff]
    %v652 = vld [vmem:[#allocation2 + $0x40] sm:$0xff]
    %v653 = vld [vmem:[#allocation2 + $0x48] sm:$0xff]
    %v654 = vld [vmem:[#allocation2 + $0x50] sm:$0xff]
    %v655 = vld [vmem:[#allocation2 + $0x58] sm:$0xff]
    %v656 = vld [vmem:[#allocation2 + $0x60] sm:$0xff]
    %v657 = vld [vmem:[#allocation2 + $0x68] sm:$0xff]
    %v658 = vld [vmem:[#allocation2 + $0x70] sm:$0xff]
    %v659 = vld [vmem:[#allocation2 + $0x78] sm:$0xff]
    %v660 = vld [vmem:[#allocation2 + $0x80] sm:$0xff]
    %v661 = vld [vmem:[#allocation2 + $0x88] sm:$0xff]
    %v662 = vld [vmem:[#allocation2 + $0x90] sm:$0xff]
    %v663 = vld [vmem:[#allocation2 + $0x98] sm:$0xff]
    %v664 = vld [vmem:[#allocation2 + $0xa0] sm:$0xff]
    %v665 = vld [vmem:[#allocation2 + $0xa8] sm:$0xff]
    %v666 = vld [vmem:[#allocation2 + $0xb0] sm:$0xff]
    %v667 = vld [vmem:[#allocation2 + $0xb8] sm:$0xff]
    %v668 = vld [vmem:[#allocation2 + $0xc0] sm:$0xff]
    %v669 = vld [vmem:[#allocation2 + $0xc8] sm:$0xff]
    %v670 = vld [vmem:[#allocation2 + $0xd0] sm:$0xff]
    %v671 = vld [vmem:[#allocation2 + $0xd8] sm:$0xff]
    %v672 = vld [vmem:[#allocation2 + $0xe0] sm:$0xff]
    %v673 = vld [vmem:[#allocation2 + $0xe8] sm:$0xff]
    %v674 = vld [vmem:[#allocation2 + $0xf0] sm:$0xff]
    %v675 = vld [vmem:[#allocation2 + $0xf8] sm:$0xff]
    %v676 = vmul.f32 %v644, 0.007874016
    %v677 = vmul.f32 %v645, 0.007874016
    %v678 = vmul.f32 %v646, 0.007874016
    %v679 = vmul.f32 %v647, 0.007874016
    %v680 = vmul.f32 %v648, 0.007874016
    %v681 = vmul.f32 %v649, 0.007874016
    %v682 = vmul.f32 %v650, 0.007874016
    %v683 = vmul.f32 %v651, 0.007874016
    %v684 = vmul.f32 %v652, 0.007874016
    %v685 = vmul.f32 %v653, 0.007874016
    %v686 = vmul.f32 %v654, 0.007874016
    %v687 = vmul.f32 %v655, 0.007874016
    %v688 = vmul.f32 %v656, 0.007874016
    %v689 = vmul.f32 %v657, 0.007874016
    %v690 = vmul.f32 %v658, 0.007874016
    %v691 = vmul.f32 %v659, 0.007874016
    %v692 = vmul.f32 %v660, 0.007874016
    %v693 = vmul.f32 %v661, 0.007874016
    %v694 = vmul.f32 %v662, 0.007874016
    %v695 = vmul.f32 %v663, 0.007874016
    %v696 = vmul.f32 %v664, 0.007874016
    %v697 = vmul.f32 %v665, 0.007874016
    %v698 = vmul.f32 %v666, 0.007874016
    %v699 = vmul.f32 %v667, 0.007874016
    %v700 = vmul.f32 %v668, 0.007874016
    %v701 = vmul.f32 %v669, 0.007874016
    %v702 = vmul.f32 %v670, 0.007874016
    %v703 = vmul.f32 %v671, 0.007874016
    %v704 = vmul.f32 %v672, 0.007874016
    %v705 = vmul.f32 %v673, 0.007874016
    %v706 = vmul.f32 %v674, 0.007874016
    %v707 = vmul.f32 %v675, 0.007874016
    %v708 = vld [vmem:[%s2] sm:$0xff]
    %v709 = vld [vmem:[%s2 + $0x8] sm:$0xff]
    %v710 = vld [vmem:[%s2 + $0x10] sm:$0xff]
    %v711 = vld [vmem:[%s2 + $0x18] sm:$0xff]
    %v712 = vld [vmem:[%s2 + $0x20] sm:$0xff]
    %v713 = vld [vmem:[%s2 + $0x28] sm:$0xff]
    %v714 = vld [vmem:[%s2 + $0x30] sm:$0xff]
    %v715 = vld [vmem:[%s2 + $0x38] sm:$0xff]
    %v716 = vld [vmem:[%s2 + $0x40] sm:$0xff]
    %v717 = vld [vmem:[%s2 + $0x48] sm:$0xff]
    %v718 = vld [vmem:[%s2 + $0x50] sm:$0xff]
    %v719 = vld [vmem:[%s2 + $0x58] sm:$0xff]
    %v720 = vld [vmem:[%s2 + $0x60] sm:$0xff]
    %v721 = vld [vmem:[%s2 + $0x68] sm:$0xff]
    %v722 = vld [vmem:[%s2 + $0x70] sm:$0xff]
    %v723 = vld [vmem:[%s2 + $0x78] sm:$0xff]
    %v724 = vld [vmem:[%s2 + $0x80] sm:$0xff]
    %v725 = vld [vmem:[%s2 + $0x88] sm:$0xff]
    %v726 = vld [vmem:[%s2 + $0x90] sm:$0xff]
    %v727 = vld [vmem:[%s2 + $0x98] sm:$0xff]
    %v728 = vld [vmem:[%s2 + $0xa0] sm:$0xff]
    %v729 = vld [vmem:[%s2 + $0xa8] sm:$0xff]
    %v730 = vld [vmem:[%s2 + $0xb0] sm:$0xff]
    %v731 = vld [vmem:[%s2 + $0xb8] sm:$0xff]
    %v732 = vld [vmem:[%s2 + $0xc0] sm:$0xff]
    %v733 = vld [vmem:[%s2 + $0xc8] sm:$0xff]
    %v734 = vld [vmem:[%s2 + $0xd0] sm:$0xff]
    %v735 = vld [vmem:[%s2 + $0xd8] sm:$0xff]
    %v736 = vld [vmem:[%s2 + $0xe0] sm:$0xff]
    %v737 = vld [vmem:[%s2 + $0xe8] sm:$0xff]
    %v738 = vld [vmem:[%s2 + $0xf0] sm:$0xff]
    %v739 = vld [vmem:[%s2 + $0xf8] sm:$0xff]
    %v740 = vadd.f32 %v708, %v676
    %v741 = vadd.f32 %v709, %v677
    %v742 = vadd.f32 %v710, %v678
    %v743 = vadd.f32 %v711, %v679
    %v744 = vadd.f32 %v712, %v680
    %v745 = vadd.f32 %v713, %v681
    %v746 = vadd.f32 %v714, %v682
    %v747 = vadd.f32 %v715, %v683
    %v748 = vadd.f32 %v716, %v684
    %v749 = vadd.f32 %v717, %v685
    %v750 = vadd.f32 %v718, %v686
    %v751 = vadd.f32 %v719, %v687
    %v752 = vadd.f32 %v720, %v688
    %v753 = vadd.f32 %v721, %v689
    %v754 = vadd.f32 %v722, %v690
    %v755 = vadd.f32 %v723, %v691
    %v756 = vadd.f32 %v724, %v692
    %v757 = vadd.f32 %v725, %v693
    %v758 = vadd.f32 %v726, %v694
    %v759 = vadd.f32 %v727, %v695
    %v760 = vadd.f32 %v728, %v696
    %v761 = vadd.f32 %v729, %v697
    %v762 = vadd.f32 %v730, %v698
    %v763 = vadd.f32 %v731, %v699
    %v764 = vadd.f32 %v732, %v700
    %v765 = vadd.f32 %v733, %v701
    %v766 = vadd.f32 %v734, %v702
    %v767 = vadd.f32 %v735, %v703
    %v768 = vadd.f32 %v736, %v704
    %v769 = vadd.f32 %v737, %v705
    %v770 = vadd.f32 %v738, %v706
    %v771 = vadd.f32 %v739, %v707
    %v772 = vld [vmem:[%s3] sm:$0x1]
    %v774 = vperm.slane %v772, 0
    %v776 = vadd.f32 %v740, %v774
    %v777 = vadd.f32 %v741, %v774
    %v778 = vadd.f32 %v742, %v774
    %v779 = vadd.f32 %v743, %v774
    %v780 = vadd.f32 %v744, %v774
    %v781 = vadd.f32 %v745, %v774
    %v782 = vadd.f32 %v746, %v774
    %v783 = vadd.f32 %v747, %v774
    %v784 = vadd.f32 %v748, %v774
    %v785 = vadd.f32 %v749, %v774
    %v786 = vadd.f32 %v750, %v774
    %v787 = vadd.f32 %v751, %v774
    %v788 = vadd.f32 %v752, %v774
    %v789 = vadd.f32 %v753, %v774
    %v790 = vadd.f32 %v754, %v774
    %v791 = vadd.f32 %v755, %v774
    %v792 = vadd.f32 %v756, %v774
    %v793 = vadd.f32 %v757, %v774
    %v794 = vadd.f32 %v758, %v774
    %v795 = vadd.f32 %v759, %v774
    %v796 = vadd.f32 %v760, %v774
    %v797 = vadd.f32 %v761, %v774
    %v798 = vadd.f32 %v762, %v774
    %v799 = vadd.f32 %v763, %v774
    %v800 = vadd.f32 %v764, %v774
    %v801 = vadd.f32 %v765, %v774
    %v802 = vadd.f32 %v766, %v774
    %v803 = vadd.f32 %v767, %v774
    %v804 = vadd.f32 %v768, %v774
    %v805 = vadd.f32 %v769, %v774
    %v806 = vadd.f32 %v770, %v774
    %v807 = vadd.f32 %v771, %v774
    %v808 = vmax.f32 %v776, 0.0
    %v809 = vmax.f32 %v777, 0.0
    %v810 = vmax.f32 %v778, 0.0
    %v811 = vmax.f32 %v779, 0.0
    %v812 = vmax.f32 %v780, 0.0
    %v813 = vmax.f32 %v781, 0.0
    %v814 = vmax.f32 %v782, 0.0
    %v815 = vmax.f32 %v783, 0.0
    %v816 = vmax.f32 %v784, 0.0
    %v817 = vmax.f32 %v785, 0.0
    %v818 = vmax.f32 %v786, 0.0
    %v819 = vmax.f32 %v787, 0.0
    %v820 = vmax.f32 %v788, 0.0
    %v821 = vmax.f32 %v789, 0.0
    %v822 = vmax.f32 %v790, 0.0
    %v823 = vmax.f32 %v791, 0.0
    %v824 = vmax.f32 %v792, 0.0
    %v825 = vmax.f32 %v793, 0.0
    %v826 = vmax.f32 %v794, 0.0
    %v827 = vmax.f32 %v795, 0.0
    %v828 = vmax.f32 %v796, 0.0
    %v829 = vmax.f32 %v797, 0.0
    %v830 = vmax.f32 %v798, 0.0
    %v831 = vmax.f32 %v799, 0.0
    %v832 = vmax.f32 %v800, 0.0
    %v833 = vmax.f32 %v801, 0.0
    %v834 = vmax.f32 %v802, 0.0
    %v835 = vmax.f32 %v803, 0.0
    %v836 = vmax.f32 %v804, 0.0
    %v837 = vmax.f32 %v805, 0.0
    %v838 = vmax.f32 %v806, 0.0
    %v839 = vmax.f32 %v807, 0.0
    %840 = vst [vmem:[%s5] sm:$0xff] %v808
    %841 = vst [vmem:[%s5 + $0x8] sm:$0xff] %v809
    %842 = vst [vmem:[%s5 + $0x10] sm:$0xff] %v810
    %843 = vst [vmem:[%s5 + $0x18] sm:$0xff] %v811
    %844 = vst [vmem:[%s5 + $0x20] sm:$0xff] %v812
    %845 = vst [vmem:[%s5 + $0x28] sm:$0xff] %v813
    %846 = vst [vmem:[%s5 + $0x30] sm:$0xff] %v814
    %847 = vst [vmem:[%s5 + $0x38] sm:$0xff] %v815
    %848 = vst [vmem:[%s5 + $0x40] sm:$0xff] %v816
    %849 = vst [vmem:[%s5 + $0x48] sm:$0xff] %v817
    %850 = vst [vmem:[%s5 + $0x50] sm:$0xff] %v818
    %851 = vst [vmem:[%s5 + $0x58] sm:$0xff] %v819
    %852 = vst [vmem:[%s5 + $0x60] sm:$0xff] %v820
    %853 = vst [vmem:[%s5 + $0x68] sm:$0xff] %v821
    %854 = vst [vmem:[%s5 + $0x70] sm:$0xff] %v822
    %855 = vst [vmem:[%s5 + $0x78] sm:$0xff] %v823
    %856 = vst [vmem:[%s5 + $0x80] sm:$0xff] %v824
    %857 = vst [vmem:[%s5 + $0x88] sm:$0xff] %v825
    %858 = vst [vmem:[%s5 + $0x90] sm:$0xff] %v826
    %859 = vst [vmem:[%s5 + $0x98] sm:$0xff] %v827
    %860 = vst [vmem:[%s5 + $0xa0] sm:$0xff] %v828
    %861 = vst [vmem:[%s5 + $0xa8] sm:$0xff] %v829
    %862 = vst [vmem:[%s5 + $0xb0] sm:$0xff] %v830
    %863 = vst [vmem:[%s5 + $0xb8] sm:$0xff] %v831
    %864 = vst [vmem:[%s5 + $0xc0] sm:$0xff] %v832
    %865 = vst [vmem:[%s5 + $0xc8] sm:$0xff] %v833
    %866 = vst [vmem:[%s5 + $0xd0] sm:$0xff] %v834
    %867 = vst [vmem:[%s5 + $0xd8] sm:$0xff] %v835
    %868 = vst [vmem:[%s5 + $0xe0] sm:$0xff] %v836
    %869 = vst [vmem:[%s5 + $0xe8] sm:$0xff] %v837
    %870 = vst [vmem:[%s5 + $0xf0] sm:$0xff] %v838
    %871 = vst [vmem:[%s5 + $0xf8] sm:$0xff] %v839
    %v872 = vpack.c.bf16 %v809, %v808
    %v873 = vpack.c.bf16 %v811, %v810
    %v874 = vpack.c.bf16 %v813, %v812
    %v875 = vpack.c.bf16 %v815, %v814
    %v876 = vpack.c.bf16 %v817, %v816
    %v877 = vpack.c.bf16 %v819, %v818
    %v878 = vpack.c.bf16 %v821, %v820
    %v879 = vpack.c.bf16 %v823, %v822
    %v880 = vpack.c.bf16 %v825, %v824
    %v881 = vpack.c.bf16 %v827, %v826
    %v882 = vpack.c.bf16 %v829, %v828
    %v883 = vpack.c.bf16 %v831, %v830
    %v884 = vpack.c.bf16 %v833, %v832
    %v885 = vpack.c.bf16 %v835, %v834
    %v886 = vpack.c.bf16 %v837, %v836
    %v887 = vpack.c.bf16 %v839, %v838
    %v888 = vld [vmem:[%s4] sm:$0xf]
    %v889 = vld [vmem:[%s4 + $0x4] sm:$0xf]
    %v890 = vld [vmem:[%s4 + $0x8] sm:$0xf]
    %v891 = vld [vmem:[%s4 + $0xc] sm:$0xf]
    %v892 = vld [vmem:[%s4 + $0x10] sm:$0xf]
    %v893 = vld [vmem:[%s4 + $0x14] sm:$0xf]
    %v894 = vld [vmem:[%s4 + $0x18] sm:$0xf]
    %v895 = vld [vmem:[%s4 + $0x1c] sm:$0xf]
    %v896 = vld [vmem:[%s4 + $0x20] sm:$0xf]
    %v897 = vld [vmem:[%s4 + $0x24] sm:$0xf]
    %v898 = vld [vmem:[%s4 + $0x28] sm:$0xf]
    %v899 = vld [vmem:[%s4 + $0x2c] sm:$0xf]
    %v900 = vld [vmem:[%s4 + $0x30] sm:$0xf]
    %v901 = vld [vmem:[%s4 + $0x34] sm:$0xf]
    %v902 = vld [vmem:[%s4 + $0x38] sm:$0xf]
    %v903 = vld [vmem:[%s4 + $0x3c] sm:$0xf]
    %v920 = vunpack.c.l.b16 %v888
    %v921 = vunpack.c.l.b16 %v889
    %v922 = vunpack.c.l.b16 %v890
    %v923 = vunpack.c.l.b16 %v891
    %v924 = vunpack.c.l.b16 %v892
    %v925 = vunpack.c.l.b16 %v893
    %v926 = vunpack.c.l.b16 %v894
    %v927 = vunpack.c.l.b16 %v895
    %v928 = vunpack.c.l.b16 %v896
    %v929 = vunpack.c.l.b16 %v897
    %v930 = vunpack.c.l.b16 %v898
    %v931 = vunpack.c.l.b16 %v899
    %v932 = vunpack.c.l.b16 %v900
    %v933 = vunpack.c.l.b16 %v901
    %v934 = vunpack.c.l.b16 %v902
    %v935 = vunpack.c.l.b16 %v903
    %v936 = vpack.c.b16 %v921, %v920
    %v937 = vpack.c.b16 %v923, %v922
    %v938 = vpack.c.b16 %v925, %v924
    %v939 = vpack.c.b16 %v927, %v926
    %v940 = vpack.c.b16 %v929, %v928
    %v941 = vpack.c.b16 %v931, %v930
    %v942 = vpack.c.b16 %v933, %v932
    %v943 = vpack.c.b16 %v935, %v934
    %952 = vmatpush.bf16.msra.mxu0 %v943
    %953 = vmatpush.bf16.msra.mxu0 %v942
    %954 = vmatpush.bf16.msra.mxu0 %v941
    %955 = vmatpush.bf16.msra.mxu0 %v940
    %956 = vmatpush.bf16.msra.mxu0 %v939
    %957 = vmatpush.bf16.msra.mxu0 %v938
    %958 = vmatpush.bf16.msra.mxu0 %v937
    %959 = vmatpush.bf16.msra.mxu0 %v936
    %960 = vmatmul.bf16.gmra.mxu0 %v872
    %v961 = vpop.f32.mrf.mxu0
    %v962 = vadd.f32 0.0, %v961
    %v963 = vpop.f32.mrf.mxu0
    %v964 = vadd.f32 0.0, %v963
    %965 = vmatmul.bf16.gmra.mxu0 %v873
    %v966 = vpop.f32.mrf.mxu0
    %v967 = vadd.f32 0.0, %v966
    %v968 = vpop.f32.mrf.mxu0
    %v969 = vadd.f32 0.0, %v968
    %970 = vmatmul.bf16.gmra.mxu0 %v874
    %v971 = vpop.f32.mrf.mxu0
    %v972 = vadd.f32 0.0, %v971
    %v973 = vpop.f32.mrf.mxu0
    %v974 = vadd.f32 0.0, %v973
    %975 = vmatmul.bf16.gmra.mxu0 %v875
    %v976 = vpop.f32.mrf.mxu0
    %v977 = vadd.f32 0.0, %v976
    %v978 = vpop.f32.mrf.mxu0
    %v979 = vadd.f32 0.0, %v978
    %980 = vmatmul.bf16.gmra.mxu0 %v876
    %v981 = vpop.f32.mrf.mxu0
    %v982 = vadd.f32 0.0, %v981
    %v983 = vpop.f32.mrf.mxu0
    %v984 = vadd.f32 0.0, %v983
    %985 = vmatmul.bf16.gmra.mxu0 %v877
    %v986 = vpop.f32.mrf.mxu0
    %v987 = vadd.f32 0.0, %v986
    %v988 = vpop.f32.mrf.mxu0
    %v989 = vadd.f32 0.0, %v988
    %990 = vmatmul.bf16.gmra.mxu0 %v878
    %v991 = vpop.f32.mrf.mxu0
    %v992 = vadd.f32 0.0, %v991
    %v993 = vpop.f32.mrf.mxu0
    %v994 = vadd.f32 0.0, %v993
    %995 = vmatmul.bf16.gmra.mxu0 %v879
    %v996 = vpop.f32.mrf.mxu0
    %v997 = vadd.f32 0.0, %v996
    %v998 = vpop.f32.mrf.mxu0
    %v999 = vadd.f32 0.0, %v998
    %1000 = vmatmul.bf16.gmra.mxu0 %v880
    %v1001 = vpop.f32.mrf.mxu0
    %v1002 = vadd.f32 0.0, %v1001
    %v1003 = vpop.f32.mrf.mxu0
    %v1004 = vadd.f32 0.0, %v1003
    %1005 = vmatmul.bf16.gmra.mxu0 %v881
    %v1006 = vpop.f32.mrf.mxu0
    %v1007 = vadd.f32 0.0, %v1006
    %v1008 = vpop.f32.mrf.mxu0
    %v1009 = vadd.f32 0.0, %v1008
    %1010 = vmatmul.bf16.gmra.mxu0 %v882
    %v1011 = vpop.f32.mrf.mxu0
    %v1012 = vadd.f32 0.0, %v1011
    %v1013 = vpop.f32.mrf.mxu0
    %v1014 = vadd.f32 0.0, %v1013
    %1015 = vmatmul.bf16.gmra.mxu0 %v883
    %v1016 = vpop.f32.mrf.mxu0
    %v1017 = vadd.f32 0.0, %v1016
    %v1018 = vpop.f32.mrf.mxu0
    %v1019 = vadd.f32 0.0, %v1018
    %1020 = vmatmul.bf16.gmra.mxu0 %v884
    %v1021 = vpop.f32.mrf.mxu0
    %v1022 = vadd.f32 0.0, %v1021
    %v1023 = vpop.f32.mrf.mxu0
    %v1024 = vadd.f32 0.0, %v1023
    %1025 = vmatmul.bf16.gmra.mxu0 %v885
    %v1026 = vpop.f32.mrf.mxu0
    %v1027 = vadd.f32 0.0, %v1026
    %v1028 = vpop.f32.mrf.mxu0
    %v1029 = vadd.f32 0.0, %v1028
    %1030 = vmatmul.bf16.gmra.mxu0 %v886
    %v1031 = vpop.f32.mrf.mxu0
    %v1032 = vadd.f32 0.0, %v1031
    %v1033 = vpop.f32.mrf.mxu0
    %v1034 = vadd.f32 0.0, %v1033
    %1035 = vmatmul.bf16.gmra.mxu0 %v887
    %v1036 = vpop.f32.mrf.mxu0
    %v1037 = vadd.f32 0.0, %v1036
    %v1038 = vpop.f32.mrf.mxu0
    %v1039 = vadd.f32 0.0, %v1038
    %1040 = vdwg.mxu0
    %v1041 = vpack.c.bf16 %v962, %v962
    %v1042 = vpack.c.bf16 %v964, %v964
    %v1043 = vpack.c.bf16 %v967, %v967
    %v1044 = vpack.c.bf16 %v969, %v969
    %v1045 = vpack.c.bf16 %v972, %v972
    %v1046 = vpack.c.bf16 %v974, %v974
    %v1047 = vpack.c.bf16 %v977, %v977
    %v1048 = vpack.c.bf16 %v979, %v979
    %v1049 = vpack.c.bf16 %v982, %v982
    %v1050 = vpack.c.bf16 %v984, %v984
    %v1051 = vpack.c.bf16 %v987, %v987
    %v1052 = vpack.c.bf16 %v989, %v989
    %v1053 = vpack.c.bf16 %v992, %v992
    %v1054 = vpack.c.bf16 %v994, %v994
    %v1055 = vpack.c.bf16 %v997, %v997
    %v1056 = vpack.c.bf16 %v999, %v999
    %v1057 = vpack.c.bf16 %v1002, %v1002
    %v1058 = vpack.c.bf16 %v1004, %v1004
    %v1059 = vpack.c.bf16 %v1007, %v1007
    %v1060 = vpack.c.bf16 %v1009, %v1009
    %v1061 = vpack.c.bf16 %v1012, %v1012
    %v1062 = vpack.c.bf16 %v1014, %v1014
    %v1063 = vpack.c.bf16 %v1017, %v1017
    %v1064 = vpack.c.bf16 %v1019, %v1019
    %v1065 = vpack.c.bf16 %v1022, %v1022
    %v1066 = vpack.c.bf16 %v1024, %v1024
    %v1067 = vpack.c.bf16 %v1027, %v1027
    %v1068 = vpack.c.bf16 %v1029, %v1029
    %v1069 = vpack.c.bf16 %v1032, %v1032
    %v1070 = vpack.c.bf16 %v1034, %v1034
    %v1071 = vpack.c.bf16 %v1037, %v1037
    %v1072 = vpack.c.bf16 %v1039, %v1039
    %1073 = vst [vmem:[%s6] sm:$0xf] %v1041
    %1074 = vst [vmem:[%s6 + $0x4] sm:$0xf] %v1042
    %1075 = vst [vmem:[%s6 + $0x8] sm:$0xf] %v1043
    %1076 = vst [vmem:[%s6 + $0xc] sm:$0xf] %v1044
    %1077 = vst [vmem:[%s6 + $0x10] sm:$0xf] %v1045
    %1078 = vst [vmem:[%s6 + $0x14] sm:$0xf] %v1046
    %1079 = vst [vmem:[%s6 + $0x18] sm:$0xf] %v1047
    %1080 = vst [vmem:[%s6 + $0x1c] sm:$0xf] %v1048
    %1081 = vst [vmem:[%s6 + $0x20] sm:$0xf] %v1049
    %1082 = vst [vmem:[%s6 + $0x24] sm:$0xf] %v1050
    %1083 = vst [vmem:[%s6 + $0x28] sm:$0xf] %v1051
    %1084 = vst [vmem:[%s6 + $0x2c] sm:$0xf] %v1052
    %1085 = vst [vmem:[%s6 + $0x30] sm:$0xf] %v1053
    %1086 = vst [vmem:[%s6 + $0x34] sm:$0xf] %v1054
    %1087 = vst [vmem:[%s6 + $0x38] sm:$0xf] %v1055
    %1088 = vst [vmem:[%s6 + $0x3c] sm:$0xf] %v1056
    %1089 = vst [vmem:[%s6 + $0x40] sm:$0xf] %v1057
    %1090 = vst [vmem:[%s6 + $0x44] sm:$0xf] %v1058
    %1091 = vst [vmem:[%s6 + $0x48] sm:$0xf] %v1059
    %1092 = vst [vmem:[%s6 + $0x4c] sm:$0xf] %v1060
    %1093 = vst [vmem:[%s6 + $0x50] sm:$0xf] %v1061
    %1094 = vst [vmem:[%s6 + $0x54] sm:$0xf] %v1062
    %1095 = vst [vmem:[%s6 + $0x58] sm:$0xf] %v1063
    %1096 = vst [vmem:[%s6 + $0x5c] sm:$0xf] %v1064
    %1097 = vst [vmem:[%s6 + $0x60] sm:$0xf] %v1065
    %1098 = vst [vmem:[%s6 + $0x64] sm:$0xf] %v1066
    %1099 = vst [vmem:[%s6 + $0x68] sm:$0xf] %v1067
    %1100 = vst [vmem:[%s6 + $0x6c] sm:$0xf] %v1068
    %1101 = vst [vmem:[%s6 + $0x70] sm:$0xf] %v1069
    %1102 = vst [vmem:[%s6 + $0x74] sm:$0xf] %v1070
    %1103 = vst [vmem:[%s6 + $0x78] sm:$0xf] %v1071
    %1104 = vst [vmem:[%s6 + $0x7c] sm:$0xf] %v1072
  $region29: #{gcn_net_forward.10} parent=0 // pred_fallthru
    _
  // Predicated region
  $region30: #{gcn_net_forward.10} parent=0 // pred_check
    _
  $region31: #{gcn_net_forward.10} parent=0 // pred_check_branch
    %1106 = sbr.rel (0) target = $region33
  $region32: #{gcn_net_forward.10} parent=0 // pred_region
    _
  $region33: #{gcn_net_forward.10} parent=0 // pred_fallthru
    _
  // Predicated region
  $region34: #{gcn_net_forward.10} parent=0 // pred_check
    _
  $region35: #{gcn_net_forward.10} parent=0 // pred_check_branch
    %1108 = sbr.rel (0) target = $region37
  $region36: #{gcn_net_forward.10} parent=0 // pred_region
    _
  $region37: #{gcn_net_forward.10} parent=0 // pred_fallthru
    _
  // Predicated region
  $region38: #{gcn_net_forward.10} parent=0 // pred_check
    _
  $region39: #{gcn_net_forward.10} parent=0 // pred_check_branch
    %1110 = sbr.rel (0) target = $region41
  $region40: #{gcn_net_forward.10} parent=0 // pred_region
    _
  $region41: #{gcn_net_forward.10} parent=0 // pred_fallthru
    _
  // Predicated region
  $region42: #{gcn_net_forward.10} parent=0 // pred_check
    _
  $region43: #{gcn_net_forward.10} parent=0 // pred_check_branch
    %1112 = sbr.rel (0) target = $region45
  $region44: #{gcn_net_forward.10} parent=0 // pred_region
    _
  $region45: #{gcn_net_forward.10} parent=0 // pred_fallthru
    _

// kernel: gcn_net_forward.17
$region0: #{gcn_net_forward.17}
  #allocation0 [shape = 'u32[]', space=smem, size = 0x4, offset = 0x4, fixed_abs, tag = 'smem constant byte address 0x4 - core index']
  #allocation1 [shape = 'u32[72,128]{1,0:T(1,128)}', space=vmem, size = 0x9000, scoped, tag = 'internal scratch']
  #allocation2 [shape = 'f32[256,128]{1,0:T(8,128)}', space=vmem, size = 0x20000, scoped, tag = 'scratch operand']
  %s0 = inlined_call_operand.vmem [shape: bf16[256,128], index: 0, kind: input, shape index: {}]
  %s1 = inlined_call_operand.vmem [shape: s8[256,256], index: 1, kind: input, shape index: {}]
  %s2 = inlined_call_operand.vmem [shape: f32[256,128], index: 2, kind: input, shape index: {}]
  %s3 = inlined_call_operand.vmem [shape: f32[1,128], index: 3, kind: input, shape index: {}]
  %s4 = inlined_call_operand.vmem [shape: f32[128,128], index: 4, kind: input, shape index: {}]
  %s5 = inlined_call_operand.vmem [shape: f32[1,128], index: 5, kind: input, shape index: {}]
  %s6 = inlined_call_operand.vmem [shape: f32[128,128], index: 6, kind: input, shape index: {}]
  %s7 = inlined_call_operand.vmem [shape: f32[1,128], index: 7, kind: input, shape index: {}]
  %s8 = inlined_call_operand.vmem [shape: f32[256,128], index: 8, kind: output, shape index: {}]
  %s9 = sld [smem:[#allocation0]]
  $region50: #{gcn_net_forward.17} parent=0
    _
  %s11 = ssub.s32 1, %s9
  %s12 = scalar_select 0, %s11, %s9
  // Predicated region
  $region2: #{gcn_net_forward.17} parent=0 // pred_check
    _
  $region3: #{gcn_net_forward.17} parent=0 // pred_check_branch
    %14 = sbr.rel (0) target = $region5
  $region4: #{gcn_net_forward.17} parent=0 // pred_region
    _
  $region5: #{gcn_net_forward.17} parent=0 // pred_fallthru
    _
  // Predicated region
  $region6: #{gcn_net_forward.17} parent=0 // pred_check
    _
  $region7: #{gcn_net_forward.17} parent=0 // pred_check_branch
    %16 = sbr.rel (0) target = $region9
  $region8: #{gcn_net_forward.17} parent=0 // pred_region
    _
  $region9: #{gcn_net_forward.17} parent=0 // pred_fallthru
    _
  // Predicated region
  $region10: #{gcn_net_forward.17} parent=0 // pred_check
    _
  $region11: #{gcn_net_forward.17} parent=0 // pred_check_branch
    %18 = sbr.rel (0) target = $region13
  $region12: #{gcn_net_forward.17} parent=0 // pred_region
    _
  $region13: #{gcn_net_forward.17} parent=0 // pred_fallthru
    _
  // Predicated region
  $region14: #{gcn_net_forward.17} parent=0 // pred_check
    _
  $region15: #{gcn_net_forward.17} parent=0 // pred_check_branch
    %20 = sbr.rel (0) target = $region17
  $region16: #{gcn_net_forward.17} parent=0 // pred_region
    _
  $region17: #{gcn_net_forward.17} parent=0 // pred_fallthru
    _
  // Predicated region
  $region18: #{gcn_net_forward.17} parent=0 // pred_check
    _
  $region19: #{gcn_net_forward.17} parent=0 // pred_check_branch
    %22 = sbr.rel (0) target = $region21
  $region20: #{gcn_net_forward.17} parent=0 // pred_region
    _
  $region21: #{gcn_net_forward.17} parent=0 // pred_fallthru
    _
  // Predicated region
  $region22: #{gcn_net_forward.17} parent=0 // pred_check
    _
  $region23: #{gcn_net_forward.17} parent=0 // pred_check_branch
    %24 = sbr.rel (0) target = $region25
  $region24: #{gcn_net_forward.17} parent=0 // pred_region
    _
  $region25: #{gcn_net_forward.17} parent=0 // pred_fallthru
    _
  // Predicated region
  $region26: #{gcn_net_forward.17} parent=0 // pred_check
    _
  $region27: #{gcn_net_forward.17} parent=0 // pred_check_branch
    %26 = sbr.rel (0) target = $region29
  $region28: #{gcn_net_forward.17} parent=0 // pred_region
    _
  $region29: #{gcn_net_forward.17} parent=0 // pred_fallthru
    _
  // Predicated region
  $region30: #{gcn_net_forward.17} parent=0 // pred_check
    _
  $region31: #{gcn_net_forward.17} parent=0 // pred_check_branch
    %28 = sbr.rel (0) target = $region33
  $region32: #{gcn_net_forward.17} parent=0 // pred_region
    _
  $region33: #{gcn_net_forward.17} parent=0 // pred_fallthru
    _
  %p29 = scmp.eq.s32.totalorder 0, 0
  // Predicated region
  $region34: #{gcn_net_forward.17} parent=0 // pred_check
    %p30 = pneg %p29
  $region35: #{gcn_net_forward.17} parent=0 // pred_check_branch
    %32 = sbr.rel (%p30) target = $region37
  $region36: #{gcn_net_forward.17} parent=0 // pred_region
    %33 = vst [vmem:[#allocation2] sm:$0xff] 0.0
    %34 = vst [vmem:[#allocation2 + $0x8] sm:$0xff] 0.0
    %35 = vst [vmem:[#allocation2 + $0x10] sm:$0xff] 0.0
    %36 = vst [vmem:[#allocation2 + $0x18] sm:$0xff] 0.0
    %37 = vst [vmem:[#allocation2 + $0x20] sm:$0xff] 0.0
    %38 = vst [vmem:[#allocation2 + $0x28] sm:$0xff] 0.0
    %39 = vst [vmem:[#allocation2 + $0x30] sm:$0xff] 0.0
    %40 = vst [vmem:[#allocation2 + $0x38] sm:$0xff] 0.0
    %41 = vst [vmem:[#allocation2 + $0x40] sm:$0xff] 0.0
    %42 = vst [vmem:[#allocation2 + $0x48] sm:$0xff] 0.0
    %43 = vst [vmem:[#allocation2 + $0x50] sm:$0xff] 0.0
    %44 = vst [vmem:[#allocation2 + $0x58] sm:$0xff] 0.0
    %45 = vst [vmem:[#allocation2 + $0x60] sm:$0xff] 0.0
    %46 = vst [vmem:[#allocation2 + $0x68] sm:$0xff] 0.0
    %47 = vst [vmem:[#allocation2 + $0x70] sm:$0xff] 0.0
    %48 = vst [vmem:[#allocation2 + $0x78] sm:$0xff] 0.0
    %49 = vst [vmem:[#allocation2 + $0x80] sm:$0xff] 0.0
    %50 = vst [vmem:[#allocation2 + $0x88] sm:$0xff] 0.0
    %51 = vst [vmem:[#allocation2 + $0x90] sm:$0xff] 0.0
    %52 = vst [vmem:[#allocation2 + $0x98] sm:$0xff] 0.0
    %53 = vst [vmem:[#allocation2 + $0xa0] sm:$0xff] 0.0
    %54 = vst [vmem:[#allocation2 + $0xa8] sm:$0xff] 0.0
    %55 = vst [vmem:[#allocation2 + $0xb0] sm:$0xff] 0.0
    %56 = vst [vmem:[#allocation2 + $0xb8] sm:$0xff] 0.0
    %57 = vst [vmem:[#allocation2 + $0xc0] sm:$0xff] 0.0
    %58 = vst [vmem:[#allocation2 + $0xc8] sm:$0xff] 0.0
    %59 = vst [vmem:[#allocation2 + $0xd0] sm:$0xff] 0.0
    %60 = vst [vmem:[#allocation2 + $0xd8] sm:$0xff] 0.0
    %61 = vst [vmem:[#allocation2 + $0xe0] sm:$0xff] 0.0
    %62 = vst [vmem:[#allocation2 + $0xe8] sm:$0xff] 0.0
    %63 = vst [vmem:[#allocation2 + $0xf0] sm:$0xff] 0.0
    %64 = vst [vmem:[#allocation2 + $0xf8] sm:$0xff] 0.0
  $region37: #{gcn_net_forward.17} parent=0 // pred_fallthru
    _
  %v65 = vld [vmem:[%s1] sm:$0xff]
  %v66 = vld [vmem:[%s1 + $0x8] sm:$0xff]
  %v67 = vld [vmem:[%s1 + $0x10] sm:$0xff]
  %v68 = vld [vmem:[%s1 + $0x18] sm:$0xff]
  %v69 = vld [vmem:[%s1 + $0x20] sm:$0xff]
  %v70 = vld [vmem:[%s1 + $0x28] sm:$0xff]
  %v71 = vld [vmem:[%s1 + $0x30] sm:$0xff]
  %v72 = vld [vmem:[%s1 + $0x38] sm:$0xff]
  %v73 = vld [vmem:[%s1 + $0x40] sm:$0xff]
  %v74 = vld [vmem:[%s1 + $0x48] sm:$0xff]
  %v75 = vld [vmem:[%s1 + $0x50] sm:$0xff]
  %v76 = vld [vmem:[%s1 + $0x58] sm:$0xff]
  %v77 = vld [vmem:[%s1 + $0x60] sm:$0xff]
  %v78 = vld [vmem:[%s1 + $0x68] sm:$0xff]
  %v79 = vld [vmem:[%s1 + $0x70] sm:$0xff]
  %v80 = vld [vmem:[%s1 + $0x78] sm:$0xff]
  %v81 = vunpack.c.0.s8 %v65
  %v82 = vunpack.c.0.s8 %v66
  %v83 = vunpack.c.1.s8 %v65
  %v84 = vunpack.c.1.s8 %v66
  %v85 = vunpack.c.2.s8 %v65
  %v86 = vunpack.c.2.s8 %v66
  %v87 = vunpack.c.3.s8 %v65
  %v88 = vunpack.c.3.s8 %v66
  %v89 = vunpack.c.0.s8 %v67
  %v90 = vunpack.c.0.s8 %v68
  %v91 = vunpack.c.1.s8 %v67
  %v92 = vunpack.c.1.s8 %v68
  %v93 = vunpack.c.2.s8 %v67
  %v94 = vunpack.c.2.s8 %v68
  %v95 = vunpack.c.3.s8 %v67
  %v96 = vunpack.c.3.s8 %v68
  %v97 = vunpack.c.0.s8 %v69
  %v98 = vunpack.c.0.s8 %v70
  %v99 = vunpack.c.1.s8 %v69
  %v100 = vunpack.c.1.s8 %v70
  %v101 = vunpack.c.2.s8 %v69
  %v102 = vunpack.c.2.s8 %v70
  %v103 = vunpack.c.3.s8 %v69
  %v104 = vunpack.c.3.s8 %v70
  %v105 = vunpack.c.0.s8 %v71
  %v106 = vunpack.c.0.s8 %v72
  %v107 = vunpack.c.1.s8 %v71
  %v108 = vunpack.c.1.s8 %v72
  %v109 = vunpack.c.2.s8 %v71
  %v110 = vunpack.c.2.s8 %v72
  %v111 = vunpack.c.3.s8 %v71
  %v112 = vunpack.c.3.s8 %v72
  %v113 = vunpack.c.0.s8 %v73
  %v114 = vunpack.c.0.s8 %v74
  %v115 = vunpack.c.1.s8 %v73
  %v116 = vunpack.c.1.s8 %v74
  %v117 = vunpack.c.2.s8 %v73
  %v118 = vunpack.c.2.s8 %v74
  %v119 = vunpack.c.3.s8 %v73
  %v120 = vunpack.c.3.s8 %v74
  %v121 = vunpack.c.0.s8 %v75
  %v122 = vunpack.c.0.s8 %v76
  %v123 = vunpack.c.1.s8 %v75
  %v124 = vunpack.c.1.s8 %v76
  %v125 = vunpack.c.2.s8 %v75
  %v126 = vunpack.c.2.s8 %v76
  %v127 = vunpack.c.3.s8 %v75
  %v128 = vunpack.c.3.s8 %v76
  %v129 = vunpack.c.0.s8 %v77
  %v130 = vunpack.c.0.s8 %v78
  %v131 = vunpack.c.1.s8 %v77
  %v132 = vunpack.c.1.s8 %v78
  %v133 = vunpack.c.2.s8 %v77
  %v134 = vunpack.c.2.s8 %v78
  %v135 = vunpack.c.3.s8 %v77
  %v136 = vunpack.c.3.s8 %v78
  %v137 = vunpack.c.0.s8 %v79
  %v138 = vunpack.c.0.s8 %v80
  %v139 = vunpack.c.1.s8 %v79
  %v140 = vunpack.c.1.s8 %v80
  %v141 = vunpack.c.2.s8 %v79
  %v142 = vunpack.c.2.s8 %v80
  %v143 = vunpack.c.3.s8 %v79
  %v144 = vunpack.c.3.s8 %v80
  %v145 = vcvt.s32.f32 %v81
  %v146 = vcvt.s32.f32 %v82
  %v147 = vcvt.s32.f32 %v83
  %v148 = vcvt.s32.f32 %v84
  %v149 = vcvt.s32.f32 %v85
  %v150 = vcvt.s32.f32 %v86
  %v151 = vcvt.s32.f32 %v87
  %v152 = vcvt.s32.f32 %v88
  %v153 = vcvt.s32.f32 %v89
  %v154 = vcvt.s32.f32 %v90
  %v155 = vcvt.s32.f32 %v91
  %v156 = vcvt.s32.f32 %v92
  %v157 = vcvt.s32.f32 %v93
  %v158 = vcvt.s32.f32 %v94
  %v159 = vcvt.s32.f32 %v95
  %v160 = vcvt.s32.f32 %v96
  %v161 = vcvt.s32.f32 %v97
  %v162 = vcvt.s32.f32 %v98
  %v163 = vcvt.s32.f32 %v99
  %v164 = vcvt.s32.f32 %v100
  %v165 = vcvt.s32.f32 %v101
  %v166 = vcvt.s32.f32 %v102
  %v167 = vcvt.s32.f32 %v103
  %v168 = vcvt.s32.f32 %v104
  %v169 = vcvt.s32.f32 %v105
  %v170 = vcvt.s32.f32 %v106
  %v171 = vcvt.s32.f32 %v107
  %v172 = vcvt.s32.f32 %v108
  %v173 = vcvt.s32.f32 %v109
  %v174 = vcvt.s32.f32 %v110
  %v175 = vcvt.s32.f32 %v111
  %v176 = vcvt.s32.f32 %v112
  %v177 = vcvt.s32.f32 %v113
  %v178 = vcvt.s32.f32 %v114
  %v179 = vcvt.s32.f32 %v115
  %v180 = vcvt.s32.f32 %v116
  %v181 = vcvt.s32.f32 %v117
  %v182 = vcvt.s32.f32 %v118
  %v183 = vcvt.s32.f32 %v119
  %v184 = vcvt.s32.f32 %v120
  %v185 = vcvt.s32.f32 %v121
  %v186 = vcvt.s32.f32 %v122
  %v187 = vcvt.s32.f32 %v123
  %v188 = vcvt.s32.f32 %v124
  %v189 = vcvt.s32.f32 %v125
  %v190 = vcvt.s32.f32 %v126
  %v191 = vcvt.s32.f32 %v127
  %v192 = vcvt.s32.f32 %v128
  %v193 = vcvt.s32.f32 %v129
  %v194 = vcvt.s32.f32 %v130
  %v195 = vcvt.s32.f32 %v131
  %v196 = vcvt.s32.f32 %v132
  %v197 = vcvt.s32.f32 %v133
  %v198 = vcvt.s32.f32 %v134
  %v199 = vcvt.s32.f32 %v135
  %v200 = vcvt.s32.f32 %v136
  %v201 = vcvt.s32.f32 %v137
  %v202 = vcvt.s32.f32 %v138
  %v203 = vcvt.s32.f32 %v139
  %v204 = vcvt.s32.f32 %v140
  %v205 = vcvt.s32.f32 %v141
  %v206 = vcvt.s32.f32 %v142
  %v207 = vcvt.s32.f32 %v143
  %v208 = vcvt.s32.f32 %v144
  %v209 = vpack.c.bf16 %v147, %v145
  %v210 = vpack.c.bf16 %v148, %v146
  %v211 = vpack.c.bf16 %v151, %v149
  %v212 = vpack.c.bf16 %v152, %v150
  %v213 = vpack.c.bf16 %v155, %v153
  %v214 = vpack.c.bf16 %v156, %v154
  %v215 = vpack.c.bf16 %v159, %v157
  %v216 = vpack.c.bf16 %v160, %v158
  %v217 = vpack.c.bf16 %v163, %v161
  %v218 = vpack.c.bf16 %v164, %v162
  %v219 = vpack.c.bf16 %v167, %v165
  %v220 = vpack.c.bf16 %v168, %v166
  %v221 = vpack.c.bf16 %v171, %v169
  %v222 = vpack.c.bf16 %v172, %v170
  %v223 = vpack.c.bf16 %v175, %v173
  %v224 = vpack.c.bf16 %v176, %v174
  %v225 = vpack.c.bf16 %v179, %v177
  %v226 = vpack.c.bf16 %v180, %v178
  %v227 = vpack.c.bf16 %v183, %v181
  %v228 = vpack.c.bf16 %v184, %v182
  %v229 = vpack.c.bf16 %v187, %v185
  %v230 = vpack.c.bf16 %v188, %v186
  %v231 = vpack.c.bf16 %v191, %v189
  %v232 = vpack.c.bf16 %v192, %v190
  %v233 = vpack.c.bf16 %v195, %v193
  %v234 = vpack.c.bf16 %v196, %v194
  %v235 = vpack.c.bf16 %v199, %v197
  %v236 = vpack.c.bf16 %v200, %v198
  %v237 = vpack.c.bf16 %v203, %v201
  %v238 = vpack.c.bf16 %v204, %v202
  %v239 = vpack.c.bf16 %v207, %v205
  %v240 = vpack.c.bf16 %v208, %v206
  %s241 = smul.u32 0, 256
  %s242 = sshra.s32 %s241, 3
  %s243 = sand.u32 %s241, 7
  %s244 = smul.addr %s242, 4
  %s245 = scalar_lea.vmem %s0, %s244
  %v246 = vld [vmem:[%s245] sm:$0xf]
  %v247 = vld [vmem:[%s245 + $0x4] sm:$0xf]
  %v248 = vld [vmem:[%s245 + $0x8] sm:$0xf]
  %v249 = vld [vmem:[%s245 + $0xc] sm:$0xf]
  %v250 = vld [vmem:[%s245 + $0x10] sm:$0xf]
  %v251 = vld [vmem:[%s245 + $0x14] sm:$0xf]
  %v252 = vld [vmem:[%s245 + $0x18] sm:$0xf]
  %v253 = vld [vmem:[%s245 + $0x1c] sm:$0xf]
  %v254 = vld [vmem:[%s245 + $0x20] sm:$0xf]
  %v255 = vld [vmem:[%s245 + $0x24] sm:$0xf]
  %v256 = vld [vmem:[%s245 + $0x28] sm:$0xf]
  %v257 = vld [vmem:[%s245 + $0x2c] sm:$0xf]
  %v258 = vld [vmem:[%s245 + $0x30] sm:$0xf]
  %v259 = vld [vmem:[%s245 + $0x34] sm:$0xf]
  %v260 = vld [vmem:[%s245 + $0x38] sm:$0xf]
  %v261 = vld [vmem:[%s245 + $0x3c] sm:$0xf]
  %v262 = vld [vmem:[%s245 + $0x40] sm:$0xf]
  %v263 = vld [vmem:[%s245 + $0x44] sm:$0xf]
  %v264 = vld [vmem:[%s245 + $0x48] sm:$0xf]
  %v265 = vld [vmem:[%s245 + $0x4c] sm:$0xf]
  %v266 = vld [vmem:[%s245 + $0x50] sm:$0xf]
  %v267 = vld [vmem:[%s245 + $0x54] sm:$0xf]
  %v268 = vld [vmem:[%s245 + $0x58] sm:$0xf]
  %v269 = vld [vmem:[%s245 + $0x5c] sm:$0xf]
  %v270 = vld [vmem:[%s245 + $0x60] sm:$0xf]
  %v271 = vld [vmem:[%s245 + $0x64] sm:$0xf]
  %v272 = vld [vmem:[%s245 + $0x68] sm:$0xf]
  %v273 = vld [vmem:[%s245 + $0x6c] sm:$0xf]
  %v274 = vld [vmem:[%s245 + $0x70] sm:$0xf]
  %v275 = vld [vmem:[%s245 + $0x74] sm:$0xf]
  %v276 = vld [vmem:[%s245 + $0x78] sm:$0xf]
  %v277 = vld [vmem:[%s245 + $0x7c] sm:$0xf]
  %v278 = vld [vmem:[#allocation2] sm:$0xff]
  %v279 = vld [vmem:[#allocation2 + $0x8] sm:$0xff]
  %v280 = vld [vmem:[#allocation2 + $0x10] sm:$0xff]
  %v281 = vld [vmem:[#allocation2 + $0x18] sm:$0xff]
  %v282 = vld [vmem:[#allocation2 + $0x20] sm:$0xff]
  %v283 = vld [vmem:[#allocation2 + $0x28] sm:$0xff]
  %v284 = vld [vmem:[#allocation2 + $0x30] sm:$0xff]
  %v285 = vld [vmem:[#allocation2 + $0x38] sm:$0xff]
  %v286 = vld [vmem:[#allocation2 + $0x40] sm:$0xff]
  %v287 = vld [vmem:[#allocation2 + $0x48] sm:$0xff]
  %v288 = vld [vmem:[#allocation2 + $0x50] sm:$0xff]
  %v289 = vld [vmem:[#allocation2 + $0x58] sm:$0xff]
  %v290 = vld [vmem:[#allocation2 + $0x60] sm:$0xff]
  %v291 = vld [vmem:[#allocation2 + $0x68] sm:$0xff]
  %v292 = vld [vmem:[#allocation2 + $0x70] sm:$0xff]
  %v293 = vld [vmem:[#allocation2 + $0x78] sm:$0xff]
  %v294 = vld [vmem:[#allocation2 + $0x80] sm:$0xff]
  %v295 = vld [vmem:[#allocation2 + $0x88] sm:$0xff]
  %v296 = vld [vmem:[#allocation2 + $0x90] sm:$0xff]
  %v297 = vld [vmem:[#allocation2 + $0x98] sm:$0xff]
  %v298 = vld [vmem:[#allocation2 + $0xa0] sm:$0xff]
  %v299 = vld [vmem:[#allocation2 + $0xa8] sm:$0xff]
  %v300 = vld [vmem:[#allocation2 + $0xb0] sm:$0xff]
  %v301 = vld [vmem:[#allocation2 + $0xb8] sm:$0xff]
  %v302 = vld [vmem:[#allocation2 + $0xc0] sm:$0xff]
  %v303 = vld [vmem:[#allocation2 + $0xc8] sm:$0xff]
  %v304 = vld [vmem:[#allocation2 + $0xd0] sm:$0xff]
  %v305 = vld [vmem:[#allocation2 + $0xd8] sm:$0xff]
  %v306 = vld [vmem:[#allocation2 + $0xe0] sm:$0xff]
  %v307 = vld [vmem:[#allocation2 + $0xe8] sm:$0xff]
  %v308 = vld [vmem:[#allocation2 + $0xf0] sm:$0xff]
  %v309 = vld [vmem:[#allocation2 + $0xf8] sm:$0xff]
  %v342 = vunpack.c.l.b16 %v246
  %v343 = vunpack.c.l.b16 %v247
  %v344 = vunpack.c.l.b16 %v248
  %v345 = vunpack.c.l.b16 %v249
  %v346 = vunpack.c.l.b16 %v250
  %v347 = vunpack.c.l.b16 %v251
  %v348 = vunpack.c.l.b16 %v252
  %v349 = vunpack.c.l.b16 %v253
  %v350 = vunpack.c.l.b16 %v254
  %v351 = vunpack.c.l.b16 %v255
  %v352 = vunpack.c.l.b16 %v256
  %v353 = vunpack.c.l.b16 %v257
  %v354 = vunpack.c.l.b16 %v258
  %v355 = vunpack.c.l.b16 %v259
  %v356 = vunpack.c.l.b16 %v260
  %v357 = vunpack.c.l.b16 %v261
  %v358 = vunpack.c.l.b16 %v262
  %v359 = vunpack.c.l.b16 %v263
  %v360 = vunpack.c.l.b16 %v264
  %v361 = vunpack.c.l.b16 %v265
  %v362 = vunpack.c.l.b16 %v266
  %v363 = vunpack.c.l.b16 %v267
  %v364 = vunpack.c.l.b16 %v268
  %v365 = vunpack.c.l.b16 %v269
  %v366 = vunpack.c.l.b16 %v270
  %v367 = vunpack.c.l.b16 %v271
  %v368 = vunpack.c.l.b16 %v272
  %v369 = vunpack.c.l.b16 %v273
  %v370 = vunpack.c.l.b16 %v274
  %v371 = vunpack.c.l.b16 %v275
  %v372 = vunpack.c.l.b16 %v276
  %v373 = vunpack.c.l.b16 %v277
  %v374 = vpack.c.b16 %v343, %v342
  %v375 = vpack.c.b16 %v345, %v344
  %v376 = vpack.c.b16 %v347, %v346
  %v377 = vpack.c.b16 %v349, %v348
  %v378 = vpack.c.b16 %v351, %v350
  %v379 = vpack.c.b16 %v353, %v352
  %v380 = vpack.c.b16 %v355, %v354
  %v381 = vpack.c.b16 %v357, %v356
  %v382 = vpack.c.b16 %v359, %v358
  %v383 = vpack.c.b16 %v361, %v360
  %v384 = vpack.c.b16 %v363, %v362
  %v385 = vpack.c.b16 %v365, %v364
  %v386 = vpack.c.b16 %v367, %v366
  %v387 = vpack.c.b16 %v369, %v368
  %v388 = vpack.c.b16 %v371, %v370
  %v389 = vpack.c.b16 %v373, %v372
  %406 = vmatpush.bf16.msra.mxu0 %v381
  %407 = vmatpush.bf16.msra.mxu0 %v380
  %408 = vmatpush.bf16.msra.mxu0 %v379
  %409 = vmatpush.bf16.msra.mxu0 %v378
  %410 = vmatpush.bf16.msra.mxu0 %v377
  %411 = vmatpush.bf16.msra.mxu0 %v376
  %412 = vmatpush.bf16.msra.mxu0 %v375
  %413 = vmatpush.bf16.msra.mxu0 %v374
  %414 = vmatmul.bf16.gmra.mxu0 %v209
  %v415 = vpop.f32.mrf.mxu0
  %v416 = vadd.f32 0.0, %v415
  %v417 = vpop.f32.mrf.mxu0
  %v418 = vadd.f32 0.0, %v417
  %419 = vmatmul.bf16.gmra.mxu0 %v211
  %v420 = vpop.f32.mrf.mxu0
  %v421 = vadd.f32 0.0, %v420
  %v422 = vpop.f32.mrf.mxu0
  %v423 = vadd.f32 0.0, %v422
  %424 = vmatmul.bf16.gmra.mxu0 %v213
  %v425 = vpop.f32.mrf.mxu0
  %v426 = vadd.f32 0.0, %v425
  %v427 = vpop.f32.mrf.mxu0
  %v428 = vadd.f32 0.0, %v427
  %429 = vmatmul.bf16.gmra.mxu0 %v215
  %v430 = vpop.f32.mrf.mxu0
  %v431 = vadd.f32 0.0, %v430
  %v432 = vpop.f32.mrf.mxu0
  %v433 = vadd.f32 0.0, %v432
  %434 = vmatmul.bf16.gmra.mxu0 %v217
  %v435 = vpop.f32.mrf.mxu0
  %v436 = vadd.f32 0.0, %v435
  %v437 = vpop.f32.mrf.mxu0
  %v438 = vadd.f32 0.0, %v437
  %439 = vmatmul.bf16.gmra.mxu0 %v219
  %v440 = vpop.f32.mrf.mxu0
  %v441 = vadd.f32 0.0, %v440
  %v442 = vpop.f32.mrf.mxu0
  %v443 = vadd.f32 0.0, %v442
  %444 = vmatmul.bf16.gmra.mxu0 %v221
  %v445 = vpop.f32.mrf.mxu0
  %v446 = vadd.f32 0.0, %v445
  %v447 = vpop.f32.mrf.mxu0
  %v448 = vadd.f32 0.0, %v447
  %449 = vmatmul.bf16.gmra.mxu0 %v223
  %v450 = vpop.f32.mrf.mxu0
  %v451 = vadd.f32 0.0, %v450
  %v452 = vpop.f32.mrf.mxu0
  %v453 = vadd.f32 0.0, %v452
  %454 = vmatmul.bf16.gmra.mxu0 %v225
  %v455 = vpop.f32.mrf.mxu0
  %v456 = vadd.f32 0.0, %v455
  %v457 = vpop.f32.mrf.mxu0
  %v458 = vadd.f32 0.0, %v457
  %459 = vmatmul.bf16.gmra.mxu0 %v227
  %v460 = vpop.f32.mrf.mxu0
  %v461 = vadd.f32 0.0, %v460
  %v462 = vpop.f32.mrf.mxu0
  %v463 = vadd.f32 0.0, %v462
  %464 = vmatmul.bf16.gmra.mxu0 %v229
  %v465 = vpop.f32.mrf.mxu0
  %v466 = vadd.f32 0.0, %v465
  %v467 = vpop.f32.mrf.mxu0
  %v468 = vadd.f32 0.0, %v467
  %469 = vmatmul.bf16.gmra.mxu0 %v231
  %v470 = vpop.f32.mrf.mxu0
  %v471 = vadd.f32 0.0, %v470
  %v472 = vpop.f32.mrf.mxu0
  %v473 = vadd.f32 0.0, %v472
  %474 = vmatmul.bf16.gmra.mxu0 %v233
  %v475 = vpop.f32.mrf.mxu0
  %v476 = vadd.f32 0.0, %v475
  %v477 = vpop.f32.mrf.mxu0
  %v478 = vadd.f32 0.0, %v477
  %479 = vmatmul.bf16.gmra.mxu0 %v235
  %v480 = vpop.f32.mrf.mxu0
  %v481 = vadd.f32 0.0, %v480
  %v482 = vpop.f32.mrf.mxu0
  %v483 = vadd.f32 0.0, %v482
  %484 = vmatmul.bf16.gmra.mxu0 %v237
  %v485 = vpop.f32.mrf.mxu0
  %v486 = vadd.f32 0.0, %v485
  %v487 = vpop.f32.mrf.mxu0
  %v488 = vadd.f32 0.0, %v487
  %489 = vmatmul.bf16.gmra.mxu0 %v239
  %v490 = vpop.f32.mrf.mxu0
  %v491 = vadd.f32 0.0, %v490
  %v492 = vpop.f32.mrf.mxu0
  %v493 = vadd.f32 0.0, %v492
  %494 = vdwg.mxu0
  %495 = vmatpush.bf16.msra.mxu0 %v389
  %496 = vmatpush.bf16.msra.mxu0 %v388
  %497 = vmatpush.bf16.msra.mxu0 %v387
  %498 = vmatpush.bf16.msra.mxu0 %v386
  %499 = vmatpush.bf16.msra.mxu0 %v385
  %500 = vmatpush.bf16.msra.mxu0 %v384
  %501 = vmatpush.bf16.msra.mxu0 %v383
  %502 = vmatpush.bf16.msra.mxu0 %v382
  %503 = vmatmul.bf16.gmra.mxu0 %v210
  %v504 = vpop.f32.mrf.mxu0
  %v505 = vadd.f32 %v416, %v504
  %v506 = vpop.f32.mrf.mxu0
  %v507 = vadd.f32 %v418, %v506
  %508 = vmatmul.bf16.gmra.mxu0 %v212
  %v509 = vpop.f32.mrf.mxu0
  %v510 = vadd.f32 %v421, %v509
  %v511 = vpop.f32.mrf.mxu0
  %v512 = vadd.f32 %v423, %v511
  %513 = vmatmul.bf16.gmra.mxu0 %v214
  %v514 = vpop.f32.mrf.mxu0
  %v515 = vadd.f32 %v426, %v514
  %v516 = vpop.f32.mrf.mxu0
  %v517 = vadd.f32 %v428, %v516
  %518 = vmatmul.bf16.gmra.mxu0 %v216
  %v519 = vpop.f32.mrf.mxu0
  %v520 = vadd.f32 %v431, %v519
  %v521 = vpop.f32.mrf.mxu0
  %v522 = vadd.f32 %v433, %v521
  %523 = vmatmul.bf16.gmra.mxu0 %v218
  %v524 = vpop.f32.mrf.mxu0
  %v525 = vadd.f32 %v436, %v524
  %v526 = vpop.f32.mrf.mxu0
  %v527 = vadd.f32 %v438, %v526
  %528 = vmatmul.bf16.gmra.mxu0 %v220
  %v529 = vpop.f32.mrf.mxu0
  %v530 = vadd.f32 %v441, %v529
  %v531 = vpop.f32.mrf.mxu0
  %v532 = vadd.f32 %v443, %v531
  %533 = vmatmul.bf16.gmra.mxu0 %v222
  %v534 = vpop.f32.mrf.mxu0
  %v535 = vadd.f32 %v446, %v534
  %v536 = vpop.f32.mrf.mxu0
  %v537 = vadd.f32 %v448, %v536
  %538 = vmatmul.bf16.gmra.mxu0 %v224
  %v539 = vpop.f32.mrf.mxu0
  %v540 = vadd.f32 %v451, %v539
  %v541 = vpop.f32.mrf.mxu0
  %v542 = vadd.f32 %v453, %v541
  %543 = vmatmul.bf16.gmra.mxu0 %v226
  %v544 = vpop.f32.mrf.mxu0
  %v545 = vadd.f32 %v456, %v544
  %v546 = vpop.f32.mrf.mxu0
  %v547 = vadd.f32 %v458, %v546
  %548 = vmatmul.bf16.gmra.mxu0 %v228
  %v549 = vpop.f32.mrf.mxu0
  %v550 = vadd.f32 %v461, %v549
  %v551 = vpop.f32.mrf.mxu0
  %v552 = vadd.f32 %v463, %v551
  %553 = vmatmul.bf16.gmra.mxu0 %v230
  %v554 = vpop.f32.mrf.mxu0
  %v555 = vadd.f32 %v466, %v554
  %v556 = vpop.f32.mrf.mxu0
  %v557 = vadd.f32 %v468, %v556
  %558 = vmatmul.bf16.gmra.mxu0 %v232
  %v559 = vpop.f32.mrf.mxu0
  %v560 = vadd.f32 %v471, %v559
  %v561 = vpop.f32.mrf.mxu0
  %v562 = vadd.f32 %v473, %v561
  %563 = vmatmul.bf16.gmra.mxu0 %v234
  %v564 = vpop.f32.mrf.mxu0
  %v565 = vadd.f32 %v476, %v564
  %v566 = vpop.f32.mrf.mxu0
  %v567 = vadd.f32 %v478, %v566
  %568 = vmatmul.bf16.gmra.mxu0 %v236
  %v569 = vpop.f32.mrf.mxu0
  %v570 = vadd.f32 %v481, %v569
  %v571 = vpop.f32.mrf.mxu0
  %v572 = vadd.f32 %v483, %v571
  %573 = vmatmul.bf16.gmra.mxu0 %v238
  %v574 = vpop.f32.mrf.mxu0
  %v575 = vadd.f32 %v486, %v574
  %v576 = vpop.f32.mrf.mxu0
  %v577 = vadd.f32 %v488, %v576
  %578 = vmatmul.bf16.gmra.mxu0 %v240
  %v579 = vpop.f32.mrf.mxu0
  %v580 = vadd.f32 %v491, %v579
  %v581 = vpop.f32.mrf.mxu0
  %v582 = vadd.f32 %v493, %v581
  %583 = vdwg.mxu0
  %v584 = vadd.f32 %v278, %v505
  %v585 = vadd.f32 %v279, %v507
  %v586 = vadd.f32 %v280, %v510
  %v587 = vadd.f32 %v281, %v512
  %v588 = vadd.f32 %v282, %v515
  %v589 = vadd.f32 %v283, %v517
  %v590 = vadd.f32 %v284, %v520
  %v591 = vadd.f32 %v285, %v522
  %v592 = vadd.f32 %v286, %v525
  %v593 = vadd.f32 %v287, %v527
  %v594 = vadd.f32 %v288, %v530
  %v595 = vadd.f32 %v289, %v532
  %v596 = vadd.f32 %v290, %v535
  %v597 = vadd.f32 %v291, %v537
  %v598 = vadd.f32 %v292, %v540
  %v599 = vadd.f32 %v293, %v542
  %v600 = vadd.f32 %v294, %v545
  %v601 = vadd.f32 %v295, %v547
  %v602 = vadd.f32 %v296, %v550
  %v603 = vadd.f32 %v297, %v552
  %v604 = vadd.f32 %v298, %v555
  %v605 = vadd.f32 %v299, %v557
  %v606 = vadd.f32 %v300, %v560
  %v607 = vadd.f32 %v301, %v562
  %v608 = vadd.f32 %v302, %v565
  %v609 = vadd.f32 %v303, %v567
  %v610 = vadd.f32 %v304, %v570
  %v611 = vadd.f32 %v305, %v572
  %v612 = vadd.f32 %v306, %v575
  %v613 = vadd.f32 %v307, %v577
  %v614 = vadd.f32 %v308, %v580
  %v615 = vadd.f32 %v309, %v582
  %616 = vst [vmem:[#allocation2] sm:$0xff] %v584
  %617 = vst [vmem:[#allocation2 + $0x8] sm:$0xff] %v585
  %618 = vst [vmem:[#allocation2 + $0x10] sm:$0xff] %v586
  %619 = vst [vmem:[#allocation2 + $0x18] sm:$0xff] %v587
  %620 = vst [vmem:[#allocation2 + $0x20] sm:$0xff] %v588
  %621 = vst [vmem:[#allocation2 + $0x28] sm:$0xff] %v589
  %622 = vst [vmem:[#allocation2 + $0x30] sm:$0xff] %v590
  %623 = vst [vmem:[#allocation2 + $0x38] sm:$0xff] %v591
  %624 = vst [vmem:[#allocation2 + $0x40] sm:$0xff] %v592
  %625 = vst [vmem:[#allocation2 + $0x48] sm:$0xff] %v593
  %626 = vst [vmem:[#allocation2 + $0x50] sm:$0xff] %v594
  %627 = vst [vmem:[#allocation2 + $0x58] sm:$0xff] %v595
  %628 = vst [vmem:[#allocation2 + $0x60] sm:$0xff] %v596
  %629 = vst [vmem:[#allocation2 + $0x68] sm:$0xff] %v597
  %630 = vst [vmem:[#allocation2 + $0x70] sm:$0xff] %v598
  %631 = vst [vmem:[#allocation2 + $0x78] sm:$0xff] %v599
  %632 = vst [vmem:[#allocation2 + $0x80] sm:$0xff] %v600
  %633 = vst [vmem:[#allocation2 + $0x88] sm:$0xff] %v601
  %634 = vst [vmem:[#allocation2 + $0x90] sm:$0xff] %v602
  %635 = vst [vmem:[#allocation2 + $0x98] sm:$0xff] %v603
  %636 = vst [vmem:[#allocation2 + $0xa0] sm:$0xff] %v604
  %637 = vst [vmem:[#allocation2 + $0xa8] sm:$0xff] %v605
  %638 = vst [vmem:[#allocation2 + $0xb0] sm:$0xff] %v606
  %639 = vst [vmem:[#allocation2 + $0xb8] sm:$0xff] %v607
  %640 = vst [vmem:[#allocation2 + $0xc0] sm:$0xff] %v608
  %641 = vst [vmem:[#allocation2 + $0xc8] sm:$0xff] %v609
  %642 = vst [vmem:[#allocation2 + $0xd0] sm:$0xff] %v610
  %643 = vst [vmem:[#allocation2 + $0xd8] sm:$0xff] %v611
  %644 = vst [vmem:[#allocation2 + $0xe0] sm:$0xff] %v612
  %645 = vst [vmem:[#allocation2 + $0xe8] sm:$0xff] %v613
  %646 = vst [vmem:[#allocation2 + $0xf0] sm:$0xff] %v614
  %647 = vst [vmem:[#allocation2 + $0xf8] sm:$0xff] %v615
  // Predicated region
  $region38: #{gcn_net_forward.17} parent=0 // pred_check
    %p648 = pneg %p29
  $region39: #{gcn_net_forward.17} parent=0 // pred_check_branch
    %650 = sbr.rel (%p648) target = $region41
  $region40: #{gcn_net_forward.17} parent=0 // pred_region
    %v651 = vld [vmem:[#allocation2] sm:$0xff]
    %v652 = vld [vmem:[#allocation2 + $0x8] sm:$0xff]
    %v653 = vld [vmem:[#allocation2 + $0x10] sm:$0xff]
    %v654 = vld [vmem:[#allocation2 + $0x18] sm:$0xff]
    %v655 = vld [vmem:[#allocation2 + $0x20] sm:$0xff]
    %v656 = vld [vmem:[#allocation2 + $0x28] sm:$0xff]
    %v657 = vld [vmem:[#allocation2 + $0x30] sm:$0xff]
    %v658 = vld [vmem:[#allocation2 + $0x38] sm:$0xff]
    %v659 = vld [vmem:[#allocation2 + $0x40] sm:$0xff]
    %v660 = vld [vmem:[#allocation2 + $0x48] sm:$0xff]
    %v661 = vld [vmem:[#allocation2 + $0x50] sm:$0xff]
    %v662 = vld [vmem:[#allocation2 + $0x58] sm:$0xff]
    %v663 = vld [vmem:[#allocation2 + $0x60] sm:$0xff]
    %v664 = vld [vmem:[#allocation2 + $0x68] sm:$0xff]
    %v665 = vld [vmem:[#allocation2 + $0x70] sm:$0xff]
    %v666 = vld [vmem:[#allocation2 + $0x78] sm:$0xff]
    %v667 = vld [vmem:[#allocation2 + $0x80] sm:$0xff]
    %v668 = vld [vmem:[#allocation2 + $0x88] sm:$0xff]
    %v669 = vld [vmem:[#allocation2 + $0x90] sm:$0xff]
    %v670 = vld [vmem:[#allocation2 + $0x98] sm:$0xff]
    %v671 = vld [vmem:[#allocation2 + $0xa0] sm:$0xff]
    %v672 = vld [vmem:[#allocation2 + $0xa8] sm:$0xff]
    %v673 = vld [vmem:[#allocation2 + $0xb0] sm:$0xff]
    %v674 = vld [vmem:[#allocation2 + $0xb8] sm:$0xff]
    %v675 = vld [vmem:[#allocation2 + $0xc0] sm:$0xff]
    %v676 = vld [vmem:[#allocation2 + $0xc8] sm:$0xff]
    %v677 = vld [vmem:[#allocation2 + $0xd0] sm:$0xff]
    %v678 = vld [vmem:[#allocation2 + $0xd8] sm:$0xff]
    %v679 = vld [vmem:[#allocation2 + $0xe0] sm:$0xff]
    %v680 = vld [vmem:[#allocation2 + $0xe8] sm:$0xff]
    %v681 = vld [vmem:[#allocation2 + $0xf0] sm:$0xff]
    %v682 = vld [vmem:[#allocation2 + $0xf8] sm:$0xff]
    %v683 = vmul.f32 %v651, 0.007874016
    %v684 = vmul.f32 %v652, 0.007874016
    %v685 = vmul.f32 %v653, 0.007874016
    %v686 = vmul.f32 %v654, 0.007874016
    %v687 = vmul.f32 %v655, 0.007874016
    %v688 = vmul.f32 %v656, 0.007874016
    %v689 = vmul.f32 %v657, 0.007874016
    %v690 = vmul.f32 %v658, 0.007874016
    %v691 = vmul.f32 %v659, 0.007874016
    %v692 = vmul.f32 %v660, 0.007874016
    %v693 = vmul.f32 %v661, 0.007874016
    %v694 = vmul.f32 %v662, 0.007874016
    %v695 = vmul.f32 %v663, 0.007874016
    %v696 = vmul.f32 %v664, 0.007874016
    %v697 = vmul.f32 %v665, 0.007874016
    %v698 = vmul.f32 %v666, 0.007874016
    %v699 = vmul.f32 %v667, 0.007874016
    %v700 = vmul.f32 %v668, 0.007874016
    %v701 = vmul.f32 %v669, 0.007874016
    %v702 = vmul.f32 %v670, 0.007874016
    %v703 = vmul.f32 %v671, 0.007874016
    %v704 = vmul.f32 %v672, 0.007874016
    %v705 = vmul.f32 %v673, 0.007874016
    %v706 = vmul.f32 %v674, 0.007874016
    %v707 = vmul.f32 %v675, 0.007874016
    %v708 = vmul.f32 %v676, 0.007874016
    %v709 = vmul.f32 %v677, 0.007874016
    %v710 = vmul.f32 %v678, 0.007874016
    %v711 = vmul.f32 %v679, 0.007874016
    %v712 = vmul.f32 %v680, 0.007874016
    %v713 = vmul.f32 %v681, 0.007874016
    %v714 = vmul.f32 %v682, 0.007874016
    %v715 = vld [vmem:[%s2] sm:$0xff]
    %v716 = vld [vmem:[%s2 + $0x8] sm:$0xff]
    %v717 = vld [vmem:[%s2 + $0x10] sm:$0xff]
    %v718 = vld [vmem:[%s2 + $0x18] sm:$0xff]
    %v719 = vld [vmem:[%s2 + $0x20] sm:$0xff]
    %v720 = vld [vmem:[%s2 + $0x28] sm:$0xff]
    %v721 = vld [vmem:[%s2 + $0x30] sm:$0xff]
    %v722 = vld [vmem:[%s2 + $0x38] sm:$0xff]
    %v723 = vld [vmem:[%s2 + $0x40] sm:$0xff]
    %v724 = vld [vmem:[%s2 + $0x48] sm:$0xff]
    %v725 = vld [vmem:[%s2 + $0x50] sm:$0xff]
    %v726 = vld [vmem:[%s2 + $0x58] sm:$0xff]
    %v727 = vld [vmem:[%s2 + $0x60] sm:$0xff]
    %v728 = vld [vmem:[%s2 + $0x68] sm:$0xff]
    %v729 = vld [vmem:[%s2 + $0x70] sm:$0xff]
    %v730 = vld [vmem:[%s2 + $0x78] sm:$0xff]
    %v731 = vld [vmem:[%s2 + $0x80] sm:$0xff]
    %v732 = vld [vmem:[%s2 + $0x88] sm:$0xff]
    %v733 = vld [vmem:[%s2 + $0x90] sm:$0xff]
    %v734 = vld [vmem:[%s2 + $0x98] sm:$0xff]
    %v735 = vld [vmem:[%s2 + $0xa0] sm:$0xff]
    %v736 = vld [vmem:[%s2 + $0xa8] sm:$0xff]
    %v737 = vld [vmem:[%s2 + $0xb0] sm:$0xff]
    %v738 = vld [vmem:[%s2 + $0xb8] sm:$0xff]
    %v739 = vld [vmem:[%s2 + $0xc0] sm:$0xff]
    %v740 = vld [vmem:[%s2 + $0xc8] sm:$0xff]
    %v741 = vld [vmem:[%s2 + $0xd0] sm:$0xff]
    %v742 = vld [vmem:[%s2 + $0xd8] sm:$0xff]
    %v743 = vld [vmem:[%s2 + $0xe0] sm:$0xff]
    %v744 = vld [vmem:[%s2 + $0xe8] sm:$0xff]
    %v745 = vld [vmem:[%s2 + $0xf0] sm:$0xff]
    %v746 = vld [vmem:[%s2 + $0xf8] sm:$0xff]
    %v747 = vadd.f32 %v715, %v683
    %v748 = vadd.f32 %v716, %v684
    %v749 = vadd.f32 %v717, %v685
    %v750 = vadd.f32 %v718, %v686
    %v751 = vadd.f32 %v719, %v687
    %v752 = vadd.f32 %v720, %v688
    %v753 = vadd.f32 %v721, %v689
    %v754 = vadd.f32 %v722, %v690
    %v755 = vadd.f32 %v723, %v691
    %v756 = vadd.f32 %v724, %v692
    %v757 = vadd.f32 %v725, %v693
    %v758 = vadd.f32 %v726, %v694
    %v759 = vadd.f32 %v727, %v695
    %v760 = vadd.f32 %v728, %v696
    %v761 = vadd.f32 %v729, %v697
    %v762 = vadd.f32 %v730, %v698
    %v763 = vadd.f32 %v731, %v699
    %v764 = vadd.f32 %v732, %v700
    %v765 = vadd.f32 %v733, %v701
    %v766 = vadd.f32 %v734, %v702
    %v767 = vadd.f32 %v735, %v703
    %v768 = vadd.f32 %v736, %v704
    %v769 = vadd.f32 %v737, %v705
    %v770 = vadd.f32 %v738, %v706
    %v771 = vadd.f32 %v739, %v707
    %v772 = vadd.f32 %v740, %v708
    %v773 = vadd.f32 %v741, %v709
    %v774 = vadd.f32 %v742, %v710
    %v775 = vadd.f32 %v743, %v711
    %v776 = vadd.f32 %v744, %v712
    %v777 = vadd.f32 %v745, %v713
    %v778 = vadd.f32 %v746, %v714
    %v779 = vld [vmem:[%s3] sm:$0x1]
    %v781 = vperm.slane %v779, 0
    %v783 = vadd.f32 %v747, %v781
    %v784 = vadd.f32 %v748, %v781
    %v785 = vadd.f32 %v749, %v781
    %v786 = vadd.f32 %v750, %v781
    %v787 = vadd.f32 %v751, %v781
    %v788 = vadd.f32 %v752, %v781
    %v789 = vadd.f32 %v753, %v781
    %v790 = vadd.f32 %v754, %v781
    %v791 = vadd.f32 %v755, %v781
    %v792 = vadd.f32 %v756, %v781
    %v793 = vadd.f32 %v757, %v781
    %v794 = vadd.f32 %v758, %v781
    %v795 = vadd.f32 %v759, %v781
    %v796 = vadd.f32 %v760, %v781
    %v797 = vadd.f32 %v761, %v781
    %v798 = vadd.f32 %v762, %v781
    %v799 = vadd.f32 %v763, %v781
    %v800 = vadd.f32 %v764, %v781
    %v801 = vadd.f32 %v765, %v781
    %v802 = vadd.f32 %v766, %v781
    %v803 = vadd.f32 %v767, %v781
    %v804 = vadd.f32 %v768, %v781
    %v805 = vadd.f32 %v769, %v781
    %v806 = vadd.f32 %v770, %v781
    %v807 = vadd.f32 %v771, %v781
    %v808 = vadd.f32 %v772, %v781
    %v809 = vadd.f32 %v773, %v781
    %v810 = vadd.f32 %v774, %v781
    %v811 = vadd.f32 %v775, %v781
    %v812 = vadd.f32 %v776, %v781
    %v813 = vadd.f32 %v777, %v781
    %v814 = vadd.f32 %v778, %v781
    %v815 = vmax.f32 %v783, 0.0
    %v816 = vmax.f32 %v784, 0.0
    %v817 = vmax.f32 %v785, 0.0
    %v818 = vmax.f32 %v786, 0.0
    %v819 = vmax.f32 %v787, 0.0
    %v820 = vmax.f32 %v788, 0.0
    %v821 = vmax.f32 %v789, 0.0
    %v822 = vmax.f32 %v790, 0.0
    %v823 = vmax.f32 %v791, 0.0
    %v824 = vmax.f32 %v792, 0.0
    %v825 = vmax.f32 %v793, 0.0
    %v826 = vmax.f32 %v794, 0.0
    %v827 = vmax.f32 %v795, 0.0
    %v828 = vmax.f32 %v796, 0.0
    %v829 = vmax.f32 %v797, 0.0
    %v830 = vmax.f32 %v798, 0.0
    %v831 = vmax.f32 %v799, 0.0
    %v832 = vmax.f32 %v800, 0.0
    %v833 = vmax.f32 %v801, 0.0
    %v834 = vmax.f32 %v802, 0.0
    %v835 = vmax.f32 %v803, 0.0
    %v836 = vmax.f32 %v804, 0.0
    %v837 = vmax.f32 %v805, 0.0
    %v838 = vmax.f32 %v806, 0.0
    %v839 = vmax.f32 %v807, 0.0
    %v840 = vmax.f32 %v808, 0.0
    %v841 = vmax.f32 %v809, 0.0
    %v842 = vmax.f32 %v810, 0.0
    %v843 = vmax.f32 %v811, 0.0
    %v844 = vmax.f32 %v812, 0.0
    %v845 = vmax.f32 %v813, 0.0
    %v846 = vmax.f32 %v814, 0.0
    %v847 = vld [vmem:[%s4] sm:$0xff]
    %v848 = vld [vmem:[%s4 + $0x8] sm:$0xff]
    %v849 = vld [vmem:[%s4 + $0x10] sm:$0xff]
    %v850 = vld [vmem:[%s4 + $0x18] sm:$0xff]
    %v851 = vld [vmem:[%s4 + $0x20] sm:$0xff]
    %v852 = vld [vmem:[%s4 + $0x28] sm:$0xff]
    %v853 = vld [vmem:[%s4 + $0x30] sm:$0xff]
    %v854 = vld [vmem:[%s4 + $0x38] sm:$0xff]
    %v855 = vld [vmem:[%s4 + $0x40] sm:$0xff]
    %v856 = vld [vmem:[%s4 + $0x48] sm:$0xff]
    %v857 = vld [vmem:[%s4 + $0x50] sm:$0xff]
    %v858 = vld [vmem:[%s4 + $0x58] sm:$0xff]
    %v859 = vld [vmem:[%s4 + $0x60] sm:$0xff]
    %v860 = vld [vmem:[%s4 + $0x68] sm:$0xff]
    %v861 = vld [vmem:[%s4 + $0x70] sm:$0xff]
    %v862 = vld [vmem:[%s4 + $0x78] sm:$0xff]
    %v863 = vld [vmem:[%s5] sm:$0x1]
    %v865 = vperm.slane %v863, 0
    %867 = vmatpush.msra.mxu0 %v862
    %868 = vmatpush.msra.mxu0 %v861
    %869 = vmatpush.msra.mxu0 %v860
    %870 = vmatpush.msra.mxu0 %v859
    %871 = vmatpush.msra.mxu0 %v858
    %872 = vmatpush.msra.mxu0 %v857
    %873 = vmatpush.msra.mxu0 %v856
    %874 = vmatpush.msra.mxu0 %v855
    %875 = vmatpush.msra.mxu0 %v854
    %876 = vmatpush.msra.mxu0 %v853
    %877 = vmatpush.msra.mxu0 %v852
    %878 = vmatpush.msra.mxu0 %v851
    %879 = vmatpush.msra.mxu0 %v850
    %880 = vmatpush.msra.mxu0 %v849
    %881 = vmatpush.msra.mxu0 %v848
    %882 = vmatpush.msra.mxu0 %v847
    %883 = vmatmul.f32.gmra.mxu0 %v815
    %v884 = vpop.f32.mrf.mxu0
    %v885 = vadd.f32 %v865, %v884
    %886 = vmatmul.f32.gmra.mxu0 %v816
    %v887 = vpop.f32.mrf.mxu0
    %v888 = vadd.f32 %v865, %v887
    %889 = vmatmul.f32.gmra.mxu0 %v817
    %v890 = vpop.f32.mrf.mxu0
    %v891 = vadd.f32 %v865, %v890
    %892 = vmatmul.f32.gmra.mxu0 %v818
    %v893 = vpop.f32.mrf.mxu0
    %v894 = vadd.f32 %v865, %v893
    %895 = vmatmul.f32.gmra.mxu0 %v819
    %v896 = vpop.f32.mrf.mxu0
    %v897 = vadd.f32 %v865, %v896
    %898 = vmatmul.f32.gmra.mxu0 %v820
    %v899 = vpop.f32.mrf.mxu0
    %v900 = vadd.f32 %v865, %v899
    %901 = vmatmul.f32.gmra.mxu0 %v821
    %v902 = vpop.f32.mrf.mxu0
    %v903 = vadd.f32 %v865, %v902
    %904 = vmatmul.f32.gmra.mxu0 %v822
    %v905 = vpop.f32.mrf.mxu0
    %v906 = vadd.f32 %v865, %v905
    %907 = vmatmul.f32.gmra.mxu0 %v823
    %v908 = vpop.f32.mrf.mxu0
    %v909 = vadd.f32 %v865, %v908
    %910 = vmatmul.f32.gmra.mxu0 %v824
    %v911 = vpop.f32.mrf.mxu0
    %v912 = vadd.f32 %v865, %v911
    %913 = vmatmul.f32.gmra.mxu0 %v825
    %v914 = vpop.f32.mrf.mxu0
    %v915 = vadd.f32 %v865, %v914
    %916 = vmatmul.f32.gmra.mxu0 %v826
    %v917 = vpop.f32.mrf.mxu0
    %v918 = vadd.f32 %v865, %v917
    %919 = vmatmul.f32.gmra.mxu0 %v827
    %v920 = vpop.f32.mrf.mxu0
    %v921 = vadd.f32 %v865, %v920
    %922 = vmatmul.f32.gmra.mxu0 %v828
    %v923 = vpop.f32.mrf.mxu0
    %v924 = vadd.f32 %v865, %v923
    %925 = vmatmul.f32.gmra.mxu0 %v829
    %v926 = vpop.f32.mrf.mxu0
    %v927 = vadd.f32 %v865, %v926
    %928 = vmatmul.f32.gmra.mxu0 %v830
    %v929 = vpop.f32.mrf.mxu0
    %v930 = vadd.f32 %v865, %v929
    %931 = vmatmul.f32.gmra.mxu0 %v831
    %v932 = vpop.f32.mrf.mxu0
    %v933 = vadd.f32 %v865, %v932
    %934 = vmatmul.f32.gmra.mxu0 %v832
    %v935 = vpop.f32.mrf.mxu0
    %v936 = vadd.f32 %v865, %v935
    %937 = vmatmul.f32.gmra.mxu0 %v833
    %v938 = vpop.f32.mrf.mxu0
    %v939 = vadd.f32 %v865, %v938
    %940 = vmatmul.f32.gmra.mxu0 %v834
    %v941 = vpop.f32.mrf.mxu0
    %v942 = vadd.f32 %v865, %v941
    %943 = vmatmul.f32.gmra.mxu0 %v835
    %v944 = vpop.f32.mrf.mxu0
    %v945 = vadd.f32 %v865, %v944
    %946 = vmatmul.f32.gmra.mxu0 %v836
    %v947 = vpop.f32.mrf.mxu0
    %v948 = vadd.f32 %v865, %v947
    %949 = vmatmul.f32.gmra.mxu0 %v837
    %v950 = vpop.f32.mrf.mxu0
    %v951 = vadd.f32 %v865, %v950
    %952 = vmatmul.f32.gmra.mxu0 %v838
    %v953 = vpop.f32.mrf.mxu0
    %v954 = vadd.f32 %v865, %v953
    %955 = vmatmul.f32.gmra.mxu0 %v839
    %v956 = vpop.f32.mrf.mxu0
    %v957 = vadd.f32 %v865, %v956
    %958 = vmatmul.f32.gmra.mxu0 %v840
    %v959 = vpop.f32.mrf.mxu0
    %v960 = vadd.f32 %v865, %v959
    %961 = vmatmul.f32.gmra.mxu0 %v841
    %v962 = vpop.f32.mrf.mxu0
    %v963 = vadd.f32 %v865, %v962
    %964 = vmatmul.f32.gmra.mxu0 %v842
    %v965 = vpop.f32.mrf.mxu0
    %v966 = vadd.f32 %v865, %v965
    %967 = vmatmul.f32.gmra.mxu0 %v843
    %v968 = vpop.f32.mrf.mxu0
    %v969 = vadd.f32 %v865, %v968
    %970 = vmatmul.f32.gmra.mxu0 %v844
    %v971 = vpop.f32.mrf.mxu0
    %v972 = vadd.f32 %v865, %v971
    %973 = vmatmul.f32.gmra.mxu0 %v845
    %v974 = vpop.f32.mrf.mxu0
    %v975 = vadd.f32 %v865, %v974
    %976 = vmatmul.f32.gmra.mxu0 %v846
    %v977 = vpop.f32.mrf.mxu0
    %v978 = vadd.f32 %v865, %v977
    %979 = vdwg.mxu0
    %vm980 = vcmp.gt.f32.partialorder %v885, 0.0
    %vm981 = vcmp.gt.f32.partialorder %v888, 0.0
    %vm982 = vcmp.gt.f32.partialorder %v891, 0.0
    %vm983 = vcmp.gt.f32.partialorder %v894, 0.0
    %vm984 = vcmp.gt.f32.partialorder %v897, 0.0
    %vm985 = vcmp.gt.f32.partialorder %v900, 0.0
    %vm986 = vcmp.gt.f32.partialorder %v903, 0.0
    %vm987 = vcmp.gt.f32.partialorder %v906, 0.0
    %vm988 = vcmp.gt.f32.partialorder %v909, 0.0
    %vm989 = vcmp.gt.f32.partialorder %v912, 0.0
    %vm990 = vcmp.gt.f32.partialorder %v915, 0.0
    %vm991 = vcmp.gt.f32.partialorder %v918, 0.0
    %vm992 = vcmp.gt.f32.partialorder %v921, 0.0
    %vm993 = vcmp.gt.f32.partialorder %v924, 0.0
    %vm994 = vcmp.gt.f32.partialorder %v927, 0.0
    %vm995 = vcmp.gt.f32.partialorder %v930, 0.0
    %vm996 = vcmp.gt.f32.partialorder %v933, 0.0
    %vm997 = vcmp.gt.f32.partialorder %v936, 0.0
    %vm998 = vcmp.gt.f32.partialorder %v939, 0.0
    %vm999 = vcmp.gt.f32.partialorder %v942, 0.0
    %vm1000 = vcmp.gt.f32.partialorder %v945, 0.0
    %vm1001 = vcmp.gt.f32.partialorder %v948, 0.0
    %vm1002 = vcmp.gt.f32.partialorder %v951, 0.0
    %vm1003 = vcmp.gt.f32.partialorder %v954, 0.0
    %vm1004 = vcmp.gt.f32.partialorder %v957, 0.0
    %vm1005 = vcmp.gt.f32.partialorder %v960, 0.0
    %vm1006 = vcmp.gt.f32.partialorder %v963, 0.0
    %vm1007 = vcmp.gt.f32.partialorder %v966, 0.0
    %vm1008 = vcmp.gt.f32.partialorder %v969, 0.0
    %vm1009 = vcmp.gt.f32.partialorder %v972, 0.0
    %vm1010 = vcmp.gt.f32.partialorder %v975, 0.0
    %vm1011 = vcmp.gt.f32.partialorder %v978, 0.0
    %v1012 = vmul.f32 %v885, 0.01
    %v1013 = vmul.f32 %v888, 0.01
    %v1014 = vmul.f32 %v891, 0.01
    %v1015 = vmul.f32 %v894, 0.01
    %v1016 = vmul.f32 %v897, 0.01
    %v1017 = vmul.f32 %v900, 0.01
    %v1018 = vmul.f32 %v903, 0.01
    %v1019 = vmul.f32 %v906, 0.01
    %v1020 = vmul.f32 %v909, 0.01
    %v1021 = vmul.f32 %v912, 0.01
    %v1022 = vmul.f32 %v915, 0.01
    %v1023 = vmul.f32 %v918, 0.01
    %v1024 = vmul.f32 %v921, 0.01
    %v1025 = vmul.f32 %v924, 0.01
    %v1026 = vmul.f32 %v927, 0.01
    %v1027 = vmul.f32 %v930, 0.01
    %v1028 = vmul.f32 %v933, 0.01
    %v1029 = vmul.f32 %v936, 0.01
    %v1030 = vmul.f32 %v939, 0.01
    %v1031 = vmul.f32 %v942, 0.01
    %v1032 = vmul.f32 %v945, 0.01
    %v1033 = vmul.f32 %v948, 0.01
    %v1034 = vmul.f32 %v951, 0.01
    %v1035 = vmul.f32 %v954, 0.01
    %v1036 = vmul.f32 %v957, 0.01
    %v1037 = vmul.f32 %v960, 0.01
    %v1038 = vmul.f32 %v963, 0.01
    %v1039 = vmul.f32 %v966, 0.01
    %v1040 = vmul.f32 %v969, 0.01
    %v1041 = vmul.f32 %v972, 0.01
    %v1042 = vmul.f32 %v975, 0.01
    %v1043 = vmul.f32 %v978, 0.01
    %v1044 = vsel %vm980, %v885, %v1012
    %v1045 = vsel %vm981, %v888, %v1013
    %v1046 = vsel %vm982, %v891, %v1014
    %v1047 = vsel %vm983, %v894, %v1015
    %v1048 = vsel %vm984, %v897, %v1016
    %v1049 = vsel %vm985, %v900, %v1017
    %v1050 = vsel %vm986, %v903, %v1018
    %v1051 = vsel %vm987, %v906, %v1019
    %v1052 = vsel %vm988, %v909, %v1020
    %v1053 = vsel %vm989, %v912, %v1021
    %v1054 = vsel %vm990, %v915, %v1022
    %v1055 = vsel %vm991, %v918, %v1023
    %v1056 = vsel %vm992, %v921, %v1024
    %v1057 = vsel %vm993, %v924, %v1025
    %v1058 = vsel %vm994, %v927, %v1026
    %v1059 = vsel %vm995, %v930, %v1027
    %v1060 = vsel %vm996, %v933, %v1028
    %v1061 = vsel %vm997, %v936, %v1029
    %v1062 = vsel %vm998, %v939, %v1030
    %v1063 = vsel %vm999, %v942, %v1031
    %v1064 = vsel %vm1000, %v945, %v1032
    %v1065 = vsel %vm1001, %v948, %v1033
    %v1066 = vsel %vm1002, %v951, %v1034
    %v1067 = vsel %vm1003, %v954, %v1035
    %v1068 = vsel %vm1004, %v957, %v1036
    %v1069 = vsel %vm1005, %v960, %v1037
    %v1070 = vsel %vm1006, %v963, %v1038
    %v1071 = vsel %vm1007, %v966, %v1039
    %v1072 = vsel %vm1008, %v969, %v1040
    %v1073 = vsel %vm1009, %v972, %v1041
    %v1074 = vsel %vm1010, %v975, %v1042
    %v1075 = vsel %vm1011, %v978, %v1043
    %v1076 = vld [vmem:[%s6] sm:$0xff]
    %v1077 = vld [vmem:[%s6 + $0x8] sm:$0xff]
    %v1078 = vld [vmem:[%s6 + $0x10] sm:$0xff]
    %v1079 = vld [vmem:[%s6 + $0x18] sm:$0xff]
    %v1080 = vld [vmem:[%s6 + $0x20] sm:$0xff]
    %v1081 = vld [vmem:[%s6 + $0x28] sm:$0xff]
    %v1082 = vld [vmem:[%s6 + $0x30] sm:$0xff]
    %v1083 = vld [vmem:[%s6 + $0x38] sm:$0xff]
    %v1084 = vld [vmem:[%s6 + $0x40] sm:$0xff]
    %v1085 = vld [vmem:[%s6 + $0x48] sm:$0xff]
    %v1086 = vld [vmem:[%s6 + $0x50] sm:$0xff]
    %v1087 = vld [vmem:[%s6 + $0x58] sm:$0xff]
    %v1088 = vld [vmem:[%s6 + $0x60] sm:$0xff]
    %v1089 = vld [vmem:[%s6 + $0x68] sm:$0xff]
    %v1090 = vld [vmem:[%s6 + $0x70] sm:$0xff]
    %v1091 = vld [vmem:[%s6 + $0x78] sm:$0xff]
    %v1092 = vld [vmem:[%s7] sm:$0x1]
    %v1094 = vperm.slane %v1092, 0
    %1096 = vmatpush.msra.mxu0 %v1091
    %1097 = vmatpush.msra.mxu0 %v1090
    %1098 = vmatpush.msra.mxu0 %v1089
    %1099 = vmatpush.msra.mxu0 %v1088
    %1100 = vmatpush.msra.mxu0 %v1087
    %1101 = vmatpush.msra.mxu0 %v1086
    %1102 = vmatpush.msra.mxu0 %v1085
    %1103 = vmatpush.msra.mxu0 %v1084
    %1104 = vmatpush.msra.mxu0 %v1083
    %1105 = vmatpush.msra.mxu0 %v1082
    %1106 = vmatpush.msra.mxu0 %v1081
    %1107 = vmatpush.msra.mxu0 %v1080
    %1108 = vmatpush.msra.mxu0 %v1079
    %1109 = vmatpush.msra.mxu0 %v1078
    %1110 = vmatpush.msra.mxu0 %v1077
    %1111 = vmatpush.msra.mxu0 %v1076
    %1112 = vmatmul.f32.gmra.mxu0 %v1044
    %v1113 = vpop.f32.mrf.mxu0
    %v1114 = vadd.f32 %v1094, %v1113
    %1115 = vmatmul.f32.gmra.mxu0 %v1045
    %v1116 = vpop.f32.mrf.mxu0
    %v1117 = vadd.f32 %v1094, %v1116
    %1118 = vmatmul.f32.gmra.mxu0 %v1046
    %v1119 = vpop.f32.mrf.mxu0
    %v1120 = vadd.f32 %v1094, %v1119
    %1121 = vmatmul.f32.gmra.mxu0 %v1047
    %v1122 = vpop.f32.mrf.mxu0
    %v1123 = vadd.f32 %v1094, %v1122
    %1124 = vmatmul.f32.gmra.mxu0 %v1048
    %v1125 = vpop.f32.mrf.mxu0
    %v1126 = vadd.f32 %v1094, %v1125
    %1127 = vmatmul.f32.gmra.mxu0 %v1049
    %v1128 = vpop.f32.mrf.mxu0
    %v1129 = vadd.f32 %v1094, %v1128
    %1130 = vmatmul.f32.gmra.mxu0 %v1050
    %v1131 = vpop.f32.mrf.mxu0
    %v1132 = vadd.f32 %v1094, %v1131
    %1133 = vmatmul.f32.gmra.mxu0 %v1051
    %v1134 = vpop.f32.mrf.mxu0
    %v1135 = vadd.f32 %v1094, %v1134
    %1136 = vmatmul.f32.gmra.mxu0 %v1052
    %v1137 = vpop.f32.mrf.mxu0
    %v1138 = vadd.f32 %v1094, %v1137
    %1139 = vmatmul.f32.gmra.mxu0 %v1053
    %v1140 = vpop.f32.mrf.mxu0
    %v1141 = vadd.f32 %v1094, %v1140
    %1142 = vmatmul.f32.gmra.mxu0 %v1054
    %v1143 = vpop.f32.mrf.mxu0
    %v1144 = vadd.f32 %v1094, %v1143
    %1145 = vmatmul.f32.gmra.mxu0 %v1055
    %v1146 = vpop.f32.mrf.mxu0
    %v1147 = vadd.f32 %v1094, %v1146
    %1148 = vmatmul.f32.gmra.mxu0 %v1056
    %v1149 = vpop.f32.mrf.mxu0
    %v1150 = vadd.f32 %v1094, %v1149
    %1151 = vmatmul.f32.gmra.mxu0 %v1057
    %v1152 = vpop.f32.mrf.mxu0
    %v1153 = vadd.f32 %v1094, %v1152
    %1154 = vmatmul.f32.gmra.mxu0 %v1058
    %v1155 = vpop.f32.mrf.mxu0
    %v1156 = vadd.f32 %v1094, %v1155
    %1157 = vmatmul.f32.gmra.mxu0 %v1059
    %v1158 = vpop.f32.mrf.mxu0
    %v1159 = vadd.f32 %v1094, %v1158
    %1160 = vmatmul.f32.gmra.mxu0 %v1060
    %v1161 = vpop.f32.mrf.mxu0
    %v1162 = vadd.f32 %v1094, %v1161
    %1163 = vmatmul.f32.gmra.mxu0 %v1061
    %v1164 = vpop.f32.mrf.mxu0
    %v1165 = vadd.f32 %v1094, %v1164
    %1166 = vmatmul.f32.gmra.mxu0 %v1062
    %v1167 = vpop.f32.mrf.mxu0
    %v1168 = vadd.f32 %v1094, %v1167
    %1169 = vmatmul.f32.gmra.mxu0 %v1063
    %v1170 = vpop.f32.mrf.mxu0
    %v1171 = vadd.f32 %v1094, %v1170
    %1172 = vmatmul.f32.gmra.mxu0 %v1064
    %v1173 = vpop.f32.mrf.mxu0
    %v1174 = vadd.f32 %v1094, %v1173
    %1175 = vmatmul.f32.gmra.mxu0 %v1065
    %v1176 = vpop.f32.mrf.mxu0
    %v1177 = vadd.f32 %v1094, %v1176
    %1178 = vmatmul.f32.gmra.mxu0 %v1066
    %v1179 = vpop.f32.mrf.mxu0
    %v1180 = vadd.f32 %v1094, %v1179
    %1181 = vmatmul.f32.gmra.mxu0 %v1067
    %v1182 = vpop.f32.mrf.mxu0
    %v1183 = vadd.f32 %v1094, %v1182
    %1184 = vmatmul.f32.gmra.mxu0 %v1068
    %v1185 = vpop.f32.mrf.mxu0
    %v1186 = vadd.f32 %v1094, %v1185
    %1187 = vmatmul.f32.gmra.mxu0 %v1069
    %v1188 = vpop.f32.mrf.mxu0
    %v1189 = vadd.f32 %v1094, %v1188
    %1190 = vmatmul.f32.gmra.mxu0 %v1070
    %v1191 = vpop.f32.mrf.mxu0
    %v1192 = vadd.f32 %v1094, %v1191
    %1193 = vmatmul.f32.gmra.mxu0 %v1071
    %v1194 = vpop.f32.mrf.mxu0
    %v1195 = vadd.f32 %v1094, %v1194
    %1196 = vmatmul.f32.gmra.mxu0 %v1072
    %v1197 = vpop.f32.mrf.mxu0
    %v1198 = vadd.f32 %v1094, %v1197
    %1199 = vmatmul.f32.gmra.mxu0 %v1073
    %v1200 = vpop.f32.mrf.mxu0
    %v1201 = vadd.f32 %v1094, %v1200
    %1202 = vmatmul.f32.gmra.mxu0 %v1074
    %v1203 = vpop.f32.mrf.mxu0
    %v1204 = vadd.f32 %v1094, %v1203
    %1205 = vmatmul.f32.gmra.mxu0 %v1075
    %v1206 = vpop.f32.mrf.mxu0
    %v1207 = vadd.f32 %v1094, %v1206
    %1208 = vdwg.mxu0
    %1209 = vst [vmem:[%s8] sm:$0xff] %v1114
    %1210 = vst [vmem:[%s8 + $0x8] sm:$0xff] %v1117
    %1211 = vst [vmem:[%s8 + $0x10] sm:$0xff] %v1120
    %1212 = vst [vmem:[%s8 + $0x18] sm:$0xff] %v1123
    %1213 = vst [vmem:[%s8 + $0x20] sm:$0xff] %v1126
    %1214 = vst [vmem:[%s8 + $0x28] sm:$0xff] %v1129
    %1215 = vst [vmem:[%s8 + $0x30] sm:$0xff] %v1132
    %1216 = vst [vmem:[%s8 + $0x38] sm:$0xff] %v1135
    %1217 = vst [vmem:[%s8 + $0x40] sm:$0xff] %v1138
    %1218 = vst [vmem:[%s8 + $0x48] sm:$0xff] %v1141
    %1219 = vst [vmem:[%s8 + $0x50] sm:$0xff] %v1144
    %1220 = vst [vmem:[%s8 + $0x58] sm:$0xff] %v1147
    %1221 = vst [vmem:[%s8 + $0x60] sm:$0xff] %v1150
    %1222 = vst [vmem:[%s8 + $0x68] sm:$0xff] %v1153
    %1223 = vst [vmem:[%s8 + $0x70] sm:$0xff] %v1156
    %1224 = vst [vmem:[%s8 + $0x78] sm:$0xff] %v1159
    %1225 = vst [vmem:[%s8 + $0x80] sm:$0xff] %v1162
    %1226 = vst [vmem:[%s8 + $0x88] sm:$0xff] %v1165
    %1227 = vst [vmem:[%s8 + $0x90] sm:$0xff] %v1168
    %1228 = vst [vmem:[%s8 + $0x98] sm:$0xff] %v1171
    %1229 = vst [vmem:[%s8 + $0xa0] sm:$0xff] %v1174
    %1230 = vst [vmem:[%s8 + $0xa8] sm:$0xff] %v1177
    %1231 = vst [vmem:[%s8 + $0xb0] sm:$0xff] %v1180
    %1232 = vst [vmem:[%s8 + $0xb8] sm:$0xff] %v1183
    %1233 = vst [vmem:[%s8 + $0xc0] sm:$0xff] %v1186
    %1234 = vst [vmem:[%s8 + $0xc8] sm:$0xff] %v1189
    %1235 = vst [vmem:[%s8 + $0xd0] sm:$0xff] %v1192
    %1236 = vst [vmem:[%s8 + $0xd8] sm:$0xff] %v1195
    %1237 = vst [vmem:[%s8 + $0xe0] sm:$0xff] %v1198
    %1238 = vst [vmem:[%s8 + $0xe8] sm:$0xff] %v1201
    %1239 = vst [vmem:[%s8 + $0xf0] sm:$0xff] %v1204
    %1240 = vst [vmem:[%s8 + $0xf8] sm:$0xff] %v1207
  $region41: #{gcn_net_forward.17} parent=0 // pred_fallthru
    _
  // Predicated region
  $region42: #{gcn_net_forward.17} parent=0 // pred_check
    _
  $region43: #{gcn_net_forward.17} parent=0 // pred_check_branch
    %1242 = sbr.rel (0) target = $region45
  $region44: #{gcn_net_forward.17} parent=0 // pred_region
    _
  $region45: #{gcn_net_forward.17} parent=0 // pred_fallthru
    _
  // Predicated region
  $region46: #{gcn_net_forward.17} parent=0 // pred_check
    _
  $region47: #{gcn_net_forward.17} parent=0 // pred_check_branch
    %1244 = sbr.rel (0) target = $region49
  $region48: #{gcn_net_forward.17} parent=0 // pred_region
    _
  $region49: #{gcn_net_forward.17} parent=0 // pred_fallthru
    _

</llo_original>
